<compile_context>
chip_gen: v7x
topology: tpu7x:2x2x1
jax: 0.10.0
libtpu: 0.0.40
codegen_flags: <defaults>
</compile_context>

<pallas_src>
import functools
import math

import jax
import jax.numpy as jnp
from jax.experimental import pallas as pl
from jax.experimental.pallas import tpu as pltpu


def _layer_norm(y, gamma, beta, eps=1e-5):
    mean = jnp.mean(y, axis=-1, keepdims=True)
    var = jnp.mean((y - mean) ** 2, axis=-1, keepdims=True)
    return (y - mean) * jax.lax.rsqrt(var + eps) * gamma + beta


def _encoder_kernel(n_heads, bt,
                    x_ref, pe_ref,
                    wqkv_ref, bqkv_ref, wo_ref, bo_ref,
                    g1_ref, be1_ref,
                    w1_ref, b1_ref, w2_ref, b2_ref,
                    g2_ref, be2_ref,
                    o_ref,
                    h_ref):
    layer = pl.program_id(1)
    n_layers = pl.num_programs(1)
    cdt = wqkv_ref.dtype                        # bf16 compute dtype for MXU operands

    s_len, d = pe_ref.shape
    dh = d // n_heads
    m = bt * s_len                              # batch folded into the MXU M dim

    @pl.when(layer == 0)
    def _():
        # Positional-embedding add fused into the first layer step.
        h_ref[...] = (x_ref[...].astype(jnp.float32) + pe_ref[...]).reshape(m, d)

    x2d = h_ref[...]                            # (Bt*S, D) f32 residual stream

    # ---- fused lane-dense QKV projection: one (M, D) @ (D, 3D) matmul ----------
    # (softmax scale 1/sqrt(dh) is pre-folded into wq / bq in the wrapper)
    qkv = jnp.dot(x2d.astype(cdt), wqkv_ref[0],
                  preferred_element_type=jnp.float32) + bqkv_ref[0]       # (M, 3D)
    qkv = qkv.astype(cdt)                       # single cast reused by QK^T and PV

    def split_heads(col0):
        """128-aligned (M, D) slab of qkv -> (H*Bt, S, dh) head-leading batch."""
        slab = qkv[:, col0:col0 + d].reshape(bt, s_len, d)
        hs = [slab[:, :, h * dh:(h + 1) * dh] for h in range(n_heads)]
        return jnp.stack(hs, axis=0).reshape(n_heads * bt, s_len, dh)

    q = split_heads(0)
    k = split_heads(d)
    v = split_heads(2 * d)

    # ---- scaled dot-product attention over a single (H*Bt) leading batch dim ---
    s = jnp.einsum('bqd,bkd->bqk', q, k, preferred_element_type=jnp.float32)
    s = s - jnp.max(s, axis=-1, keepdims=True)
    p = jnp.exp(s)
    p = p * pl.reciprocal(jnp.sum(p, axis=-1, keepdims=True), approx=True)
    ctx = jnp.einsum('bqk,bkd->bqd', p.astype(cdt), v,
                     preferred_element_type=jnp.float32)                  # (H*Bt,S,dh)

    # ---- merge heads into a lane-dense (M, D) slab; ONE out-projection matmul --
    ctx4 = ctx.reshape(n_heads, bt, s_len, dh)
    ctx2d = jnp.concatenate([ctx4[h] for h in range(n_heads)],
                            axis=-1).reshape(m, d)
    attn = jnp.dot(ctx2d.astype(cdt), wo_ref[0],
                   preferred_element_type=jnp.float32) + bo_ref[0]        # (M, D)

    # ---- residual + LayerNorm 1 (f32 math) -------------------------------------
    y = _layer_norm(x2d + attn, g1_ref[0], be1_ref[0])

    # ---- position-wise FFN: Linear -> ReLU -> Linear ----------------------------
    hdn = jnp.dot(y.astype(cdt), w1_ref[0],
                  preferred_element_type=jnp.float32) + b1_ref[0]
    hdn = jnp.maximum(hdn, 0.0)
    ff = jnp.dot(hdn.astype(cdt), w2_ref[0],
                 preferred_element_type=jnp.float32) + b2_ref[0]

    # ---- residual + LayerNorm 2 (f32 math) -------------------------------------
    out = _layer_norm(y + ff, g2_ref[0], be2_ref[0])
    h_ref[...] = out

    @pl.when(layer == n_layers - 1)
    def _():
        o_ref[...] = out.reshape(bt, s_len, d).astype(o_ref.dtype)


# ---------------------------------------------------------------------------
# Host-side parameter construction / packing + wrapper
# ---------------------------------------------------------------------------
def sinusoidal_pos_embed(seq_len, d):
    pos = jnp.arange(seq_len, dtype=jnp.float32)[:, None]
    i = jnp.arange(d)[None, :]
    rates = 1.0 / jnp.power(10000.0, (2 * (i // 2)).astype(jnp.float32) / d)
    angles = pos * rates
    return jnp.where(i % 2 == 0, jnp.sin(angles), jnp.cos(angles))       # (S, D)


def init_block_params(key, d, d_ff):
    ks = jax.random.split(key, 6)

    def lin(k, fin, fout):
        w = jax.random.normal(k, (fin, fout), jnp.float32) * (1.0 / math.sqrt(fin))
        b = jnp.zeros((fout,), jnp.float32)
        return w, b

    wq, bq = lin(ks[0], d, d)
    wk, bk = lin(ks[1], d, d)
    wv, bv = lin(ks[2], d, d)
    wo, bo = lin(ks[3], d, d)
    g1, be1 = jnp.ones((d,), jnp.float32), jnp.zeros((d,), jnp.float32)
    w1, b1 = lin(ks[4], d, d_ff)
    w2, b2 = lin(ks[5], d_ff, d)
    g2, be2 = jnp.ones((d,), jnp.float32), jnp.zeros((d,), jnp.float32)
    return (wq, bq, wk, bk, wv, bv, wo, bo, g1, be1, w1, b1, w2, b2, g2, be2)


def _pack_encoder_params(blocks_params, d, n_heads, compute_dtype):
    """Stack per-layer params on a leading layer axis, fuse QKV into one (D, 3D)
    weight, fold the softmax scale into wq/bq, cast matmul weights to bf16."""
    dh = d // n_heads
    scale = 1.0 / math.sqrt(dh)

    def per_layer(p):
        (wq, bq, wk, bk, wv, bv, wo, bo,
         g1, be1, w1, b1, w2, b2, g2, be2) = p
        d_ff = w1.shape[1]
        wqkv = jnp.concatenate([wq * scale, wk, wv], axis=1)             # (D, 3D)
        bqkv = jnp.concatenate([bq * scale, bk, bv], axis=0).reshape(1, 3 * d)
        return (wqkv, bqkv, wo, bo.reshape(1, d),
                g1.reshape(1, d), be1.reshape(1, d),
                w1, b1.reshape(1, d_ff), w2, b2.reshape(1, d),
                g2.reshape(1, d), be2.reshape(1, d))

    per = [per_layer(p) for p in blocks_params]
    stacked = [jnp.stack(t, axis=0) for t in zip(*per)]
    matmul_operands = {0, 2, 6, 8}          # wqkv, wo, w1, w2 -> bf16 for the MXU
    return [a.astype(compute_dtype) if i in matmul_operands else a.astype(jnp.float32)
            for i, a in enumerate(stacked)]


def _pick_batch_tile(b, s, target_m=256):
    """Largest divisor of b with bt*s <= target_m (fold batch into the MXU M dim)."""
    bt = 1
    for cand in range(1, b + 1):
        if b % cand == 0 and cand * s <= max(target_m, s):
            bt = cand
    return bt


def attention_encoder(x, blocks_params, n_heads, compute_dtype=jnp.bfloat16):
    """Full AttentionEncoder forward (pos-embed + all blocks) in one pallas_call."""
    B, S, D = x.shape
    packed = _pack_encoder_params(blocks_params, D, n_heads, compute_dtype)
    pos = sinusoidal_pos_embed(S, D)
    L = packed[0].shape[0]
    Bt = _pick_batch_tile(B, S)

    kernel = functools.partial(_encoder_kernel, n_heads, Bt)

    def w_spec(shape):
        nd = len(shape)
        return pl.BlockSpec((1,) + tuple(shape[1:]),
                            lambda b, l, nd=nd: (l,) + (0,) * (nd - 1))

    in_specs = [pl.BlockSpec((Bt, S, D), lambda b, l: (b, 0, 0)),
                pl.BlockSpec((S, D), lambda b, l: (0, 0))]
    in_specs += [w_spec(p.shape) for p in packed]

    return pl.pallas_call(
        kernel,
        out_shape=jax.ShapeDtypeStruct((B, S, D), x.dtype),
        grid_spec=pltpu.PrefetchScalarGridSpec(
            num_scalar_prefetch=0,
            grid=(B // Bt, L),                 # batch blocks (parallel), layers (arbitrary)
            in_specs=in_specs,
            out_specs=pl.BlockSpec((Bt, S, D), lambda b, l: (b, 0, 0)),
            scratch_shapes=[pltpu.VMEM((Bt * S, D), jnp.float32)],
        ),
        compiler_params=pltpu.CompilerParams(
            dimension_semantics=("parallel", "arbitrary"),
            vmem_limit_bytes=64 * 1024 * 1024,
        ),
    )(x, pos, *packed)


if __name__ == "__main__":
    # Small, lane/sublane-aligned demo shapes: D, d_ff multiples of 128; S multiple of 8.
    B, S, D = 4, 32, 128
    n_heads, d_ff = 4, 256
    n_att_block = 2

    key = jax.random.PRNGKey(0)
    kx, kp = jax.random.split(key)
    x = jax.random.normal(kx, (B, S, D), jnp.float32)

    block_keys = jax.random.split(kp, n_att_block)
    blocks_params = [init_block_params(k, D, d_ff) for k in block_keys]

    out = attention_encoder(x, blocks_params, n_heads)
    jax.block_until_ready(out)
    assert out.shape == (B, S, D)
    assert bool(jnp.all(jnp.isfinite(out)))
    print("KERNEL_OK")
</pallas_src>

<mosaic_0001>
module attributes {stable_mosaic.version = 11 : i64} {
  func.func @_encoder_kernel(%arg0: i32, %arg1: i32, %arg2: memref<4x32x128xf32, #tpu.memory_space<vmem>>, %arg3: memref<32x128xf32, #tpu.memory_space<vmem>>, %arg4: memref<1x128x384xbf16, #tpu.memory_space<vmem>>, %arg5: memref<1x1x384xf32, #tpu.memory_space<vmem>>, %arg6: memref<1x128x128xbf16, #tpu.memory_space<vmem>>, %arg7: memref<1x1x128xf32, #tpu.memory_space<vmem>>, %arg8: memref<1x1x128xf32, #tpu.memory_space<vmem>>, %arg9: memref<1x1x128xf32, #tpu.memory_space<vmem>>, %arg10: memref<1x128x256xbf16, #tpu.memory_space<vmem>>, %arg11: memref<1x1x256xf32, #tpu.memory_space<vmem>>, %arg12: memref<1x256x128xbf16, #tpu.memory_space<vmem>>, %arg13: memref<1x1x128xf32, #tpu.memory_space<vmem>>, %arg14: memref<1x1x128xf32, #tpu.memory_space<vmem>>, %arg15: memref<1x1x128xf32, #tpu.memory_space<vmem>>, %arg16: memref<4x32x128xf32, #tpu.memory_space<vmem>>, %arg17: memref<128x128xf32, #tpu.memory_space<vmem>>) attributes {dimension_semantics = [#tpu.dimension_semantics<parallel>, #tpu.dimension_semantics<arbitrary>], iteration_bounds = array<i64: 1, 2>, scalar_prefetch = 0 : i64, scratch_operands = 1 : i64, tpu.core_type = #tpu.core_type<tc>, window_params = [{transform_indices = @transform_0, window_bounds = array<i64: 4, 32, 128>}, {pipeline_mode = #tpu.pipeline_mode<synchronous>, transform_indices = @transform_1, window_bounds = array<i64: 32, 128>}, {transform_indices = @transform_2, window_bounds = array<i64: 1, 128, 384>}, {transform_indices = @transform_3, window_bounds = array<i64: 1, 1, 384>}, {transform_indices = @transform_4, window_bounds = array<i64: 1, 128, 128>}, {transform_indices = @transform_5, window_bounds = array<i64: 1, 1, 128>}, {transform_indices = @transform_6, window_bounds = array<i64: 1, 1, 128>}, {transform_indices = @transform_7, window_bounds = array<i64: 1, 1, 128>}, {transform_indices = @transform_8, window_bounds = array<i64: 1, 128, 256>}, {transform_indices = @transform_9, window_bounds = array<i64: 1, 1, 256>}, {transform_indices = @transform_10, window_bounds = array<i64: 1, 256, 128>}, {transform_indices = @transform_11, window_bounds = array<i64: 1, 1, 128>}, {transform_indices = @transform_12, window_bounds = array<i64: 1, 1, 128>}, {transform_indices = @transform_13, window_bounds = array<i64: 1, 1, 128>}, {transform_indices = @transform_14, window_bounds = array<i64: 4, 32, 128>}]} {
    %c0_i32 = arith.constant 0 : i32
    %0 = arith.cmpi eq, %arg1, %c0_i32 : i32
    %1 = arith.extui %0 : i1 to i32
    %c0_i32_0 = arith.constant 0 : i32
    %2 = arith.cmpi ne, %1, %c0_i32_0 : i32
    scf.if %2 {
      %c0_59 = arith.constant 0 : index
      %c0_60 = arith.constant 0 : index
      %c0_61 = arith.constant 0 : index
      %157 = vector.load %arg2[%c0_59, %c0_60, %c0_61] : memref<4x32x128xf32, #tpu.memory_space<vmem>>, vector<4x32x128xf32>
      %c0_62 = arith.constant 0 : index
      %c0_63 = arith.constant 0 : index
      %158 = vector.load %arg3[%c0_62, %c0_63] : memref<32x128xf32, #tpu.memory_space<vmem>>, vector<32x128xf32>
      %159 = vector.shape_cast %158 : vector<32x128xf32> to vector<1x32x128xf32>
      %160 = vector.broadcast %159 : vector<1x32x128xf32> to vector<4x32x128xf32>
      %161 = arith.addf %157, %160 : vector<4x32x128xf32>
      %162 = vector.shape_cast %161 : vector<4x32x128xf32> to vector<128x128xf32>
      %c0_64 = arith.constant 0 : index
      %c0_65 = arith.constant 0 : index
      %163 = vector.load %arg17[%c0_64, %c0_65] : memref<128x128xf32, #tpu.memory_space<vmem>>, vector<128x128xf32>
      tpu.vector_store %arg17[%c0_64, %c0_65], %162 {strides = array<i32>} : memref<128x128xf32, #tpu.memory_space<vmem>>, vector<128x128xf32>,
    } else {
    }
    %c0 = arith.constant 0 : index
    %c0_1 = arith.constant 0 : index
    %3 = vector.load %arg17[%c0, %c0_1] : memref<128x128xf32, #tpu.memory_space<vmem>>, vector<128x128xf32>
    %4 = arith.truncf %3 : vector<128x128xf32> to vector<128x128xbf16>
    %c0_2 = arith.constant 0 : index
    %c0_3 = arith.constant 0 : index
    %c0_4 = arith.constant 0 : index
    %5 = vector.load %arg4[%c0_2, %c0_3, %c0_4] : memref<1x128x384xbf16, #tpu.memory_space<vmem>>, vector<1x128x384xbf16>
    %6 = vector.shape_cast %5 : vector<1x128x384xbf16> to vector<128x384xbf16>
    %cst = arith.constant dense<0.000000e+00> : vector<128x384xf32>
    %7 = tpu.matmul %4, %6, %cst {dimension_numbers = #tpu.dot_dimension_numbers<[1], [0], [0], [1], [0, 0, 1, 1], [], []>} : vector<128x128xbf16>, vector<128x384xbf16>, vector<128x384xf32> -> vector<128x384xf32>
    %c0_5 = arith.constant 0 : index
    %c0_6 = arith.constant 0 : index
    %c0_7 = arith.constant 0 : index
    %8 = vector.load %arg5[%c0_5, %c0_6, %c0_7] : memref<1x1x384xf32, #tpu.memory_space<vmem>>, vector<1x1x384xf32>
    %9 = vector.shape_cast %8 : vector<1x1x384xf32> to vector<1x384xf32>
    %10 = vector.broadcast %9 : vector<1x384xf32> to vector<128x384xf32>
    %11 = arith.addf %7, %10 : vector<128x384xf32>
    %12 = arith.truncf %11 : vector<128x384xf32> to vector<128x384xbf16>
    %13 = vector.extract_strided_slice %12 {offsets = [0, 0], sizes = [128, 128], strides = [1, 1]} : vector<128x384xbf16> to vector<128x128xbf16>
    %14 = vector.shape_cast %13 : vector<128x128xbf16> to vector<4x32x128xbf16>
    %15 = vector.extract_strided_slice %14 {offsets = [0, 0, 0], sizes = [4, 32, 32], strides = [1, 1, 1]} : vector<4x32x128xbf16> to vector<4x32x32xbf16>
    %16 = vector.extract_strided_slice %14 {offsets = [0, 0, 32], sizes = [4, 32, 32], strides = [1, 1, 1]} : vector<4x32x128xbf16> to vector<4x32x32xbf16>
    %17 = vector.extract_strided_slice %14 {offsets = [0, 0, 64], sizes = [4, 32, 32], strides = [1, 1, 1]} : vector<4x32x128xbf16> to vector<4x32x32xbf16>
    %18 = vector.extract_strided_slice %14 {offsets = [0, 0, 96], sizes = [4, 32, 32], strides = [1, 1, 1]} : vector<4x32x128xbf16> to vector<4x32x32xbf16>
    %19 = vector.shape_cast %15 : vector<4x32x32xbf16> to vector<1x4x32x32xbf16>
    %20 = vector.shape_cast %16 : vector<4x32x32xbf16> to vector<1x4x32x32xbf16>
    %21 = vector.shape_cast %17 : vector<4x32x32xbf16> to vector<1x4x32x32xbf16>
    %22 = vector.shape_cast %18 : vector<4x32x32xbf16> to vector<1x4x32x32xbf16>
    %23 = tpu.concatenate %19, %20, %21, %22 in 0 : vector<1x4x32x32xbf16>, vector<1x4x32x32xbf16>, vector<1x4x32x32xbf16>, vector<1x4x32x32xbf16> -> vector<4x4x32x32xbf16>
    %24 = vector.shape_cast %23 : vector<4x4x32x32xbf16> to vector<16x32x32xbf16>
    %25 = vector.extract_strided_slice %12 {offsets = [0, 128], sizes = [128, 128], strides = [1, 1]} : vector<128x384xbf16> to vector<128x128xbf16>
    %26 = vector.shape_cast %25 : vector<128x128xbf16> to vector<4x32x128xbf16>
    %27 = vector.extract_strided_slice %26 {offsets = [0, 0, 0], sizes = [4, 32, 32], strides = [1, 1, 1]} : vector<4x32x128xbf16> to vector<4x32x32xbf16>
    %28 = vector.extract_strided_slice %26 {offsets = [0, 0, 32], sizes = [4, 32, 32], strides = [1, 1, 1]} : vector<4x32x128xbf16> to vector<4x32x32xbf16>
    %29 = vector.extract_strided_slice %26 {offsets = [0, 0, 64], sizes = [4, 32, 32], strides = [1, 1, 1]} : vector<4x32x128xbf16> to vector<4x32x32xbf16>
    %30 = vector.extract_strided_slice %26 {offsets = [0, 0, 96], sizes = [4, 32, 32], strides = [1, 1, 1]} : vector<4x32x128xbf16> to vector<4x32x32xbf16>
    %31 = vector.shape_cast %27 : vector<4x32x32xbf16> to vector<1x4x32x32xbf16>
    %32 = vector.shape_cast %28 : vector<4x32x32xbf16> to vector<1x4x32x32xbf16>
    %33 = vector.shape_cast %29 : vector<4x32x32xbf16> to vector<1x4x32x32xbf16>
    %34 = vector.shape_cast %30 : vector<4x32x32xbf16> to vector<1x4x32x32xbf16>
    %35 = tpu.concatenate %31, %32, %33, %34 in 0 : vector<1x4x32x32xbf16>, vector<1x4x32x32xbf16>, vector<1x4x32x32xbf16>, vector<1x4x32x32xbf16> -> vector<4x4x32x32xbf16>
    %36 = vector.shape_cast %35 : vector<4x4x32x32xbf16> to vector<16x32x32xbf16>
    %37 = vector.extract_strided_slice %12 {offsets = [0, 256], sizes = [128, 128], strides = [1, 1]} : vector<128x384xbf16> to vector<128x128xbf16>
    %38 = vector.shape_cast %37 : vector<128x128xbf16> to vector<4x32x128xbf16>
    %39 = vector.extract_strided_slice %38 {offsets = [0, 0, 0], sizes = [4, 32, 32], strides = [1, 1, 1]} : vector<4x32x128xbf16> to vector<4x32x32xbf16>
    %40 = vector.extract_strided_slice %38 {offsets = [0, 0, 32], sizes = [4, 32, 32], strides = [1, 1, 1]} : vector<4x32x128xbf16> to vector<4x32x32xbf16>
    %41 = vector.extract_strided_slice %38 {offsets = [0, 0, 64], sizes = [4, 32, 32], strides = [1, 1, 1]} : vector<4x32x128xbf16> to vector<4x32x32xbf16>
    %42 = vector.extract_strided_slice %38 {offsets = [0, 0, 96], sizes = [4, 32, 32], strides = [1, 1, 1]} : vector<4x32x128xbf16> to vector<4x32x32xbf16>
    %43 = vector.shape_cast %39 : vector<4x32x32xbf16> to vector<1x4x32x32xbf16>
    %44 = vector.shape_cast %40 : vector<4x32x32xbf16> to vector<1x4x32x32xbf16>
    %45 = vector.shape_cast %41 : vector<4x32x32xbf16> to vector<1x4x32x32xbf16>
    %46 = vector.shape_cast %42 : vector<4x32x32xbf16> to vector<1x4x32x32xbf16>
    %47 = tpu.concatenate %43, %44, %45, %46 in 0 : vector<1x4x32x32xbf16>, vector<1x4x32x32xbf16>, vector<1x4x32x32xbf16>, vector<1x4x32x32xbf16> -> vector<4x4x32x32xbf16>
    %48 = vector.shape_cast %47 : vector<4x4x32x32xbf16> to vector<16x32x32xbf16>
    "tpu.trace_start"() <{level = 10 : i32, message = "bqd,bkd->bqk"}> : () -> ()
    %cst_8 = arith.constant dense<0.000000e+00> : vector<16x32x32xf32>
    %49 = tpu.matmul %24, %36, %cst_8 {dimension_numbers = #tpu.dot_dimension_numbers<[2], [2], [1], [1], [0, 0, 0, 1, 1, 1], [0], [0]>} : vector<16x32x32xbf16>, vector<16x32x32xbf16>, vector<16x32x32xf32> -> vector<16x32x32xf32>
    "tpu.trace_stop"() : () -> ()
    %cst_9 = arith.constant dense<0xFF800000> : vector<16x32xf32>
    %50 = vector.multi_reduction <maximumf>, %49, %cst_9 [2] : vector<16x32x32xf32> to vector<16x32xf32>
    %51 = vector.shape_cast %50 : vector<16x32xf32> to vector<16x32x1xf32>
    %52 = vector.broadcast %51 : vector<16x32x1xf32> to vector<16x32x32xf32>
    %53 = arith.subf %49, %52 : vector<16x32x32xf32>
    %54 = math.exp %53 : vector<16x32x32xf32>
    %cst_10 = arith.constant dense<0.000000e+00> : vector<16x32xf32>
    %55 = vector.multi_reduction <add>, %54, %cst_10 [2] : vector<16x32x32xf32> to vector<16x32xf32>
    %56 = vector.shape_cast %55 : vector<16x32xf32> to vector<16x32x1xf32>
    %57 = tpu.reciprocal %56 {approx = true} : vector<16x32x1xf32> -> vector<16x32x1xf32>
    %58 = vector.broadcast %57 : vector<16x32x1xf32> to vector<16x32x32xf32>
    %59 = arith.mulf %54, %58 : vector<16x32x32xf32>
    %60 = arith.truncf %59 : vector<16x32x32xf32> to vector<16x32x32xbf16>
    "tpu.trace_start"() <{level = 10 : i32, message = "bqk,bkd->bqd"}> : () -> ()
    %cst_11 = arith.constant dense<0.000000e+00> : vector<16x32x32xf32>
    %61 = tpu.matmul %60, %48, %cst_11 {dimension_numbers = #tpu.dot_dimension_numbers<[2], [1], [1], [2], [0, 0, 0, 1, 1, 2], [0], [0]>} : vector<16x32x32xbf16>, vector<16x32x32xbf16>, vector<16x32x32xf32> -> vector<16x32x32xf32>
    "tpu.trace_stop"() : () -> ()
    %62 = vector.shape_cast %61 : vector<16x32x32xf32> to vector<4x4x32x32xf32>
    %63 = vector.extract_strided_slice %62 {offsets = [0, 0, 0, 0], sizes = [1, 4, 32, 32], strides = [1, 1, 1, 1]} : vector<4x4x32x32xf32> to vector<1x4x32x32xf32>
    %64 = vector.shape_cast %63 : vector<1x4x32x32xf32> to vector<4x32x32xf32>
    %65 = vector.extract_strided_slice %62 {offsets = [1, 0, 0, 0], sizes = [1, 4, 32, 32], strides = [1, 1, 1, 1]} : vector<4x4x32x32xf32> to vector<1x4x32x32xf32>
    %66 = vector.shape_cast %65 : vector<1x4x32x32xf32> to vector<4x32x32xf32>
    %67 = vector.extract_strided_slice %62 {offsets = [2, 0, 0, 0], sizes = [1, 4, 32, 32], strides = [1, 1, 1, 1]} : vector<4x4x32x32xf32> to vector<1x4x32x32xf32>
    %68 = vector.shape_cast %67 : vector<1x4x32x32xf32> to vector<4x32x32xf32>
    %69 = vector.extract_strided_slice %62 {offsets = [3, 0, 0, 0], sizes = [1, 4, 32, 32], strides = [1, 1, 1, 1]} : vector<4x4x32x32xf32> to vector<1x4x32x32xf32>
    %70 = vector.shape_cast %69 : vector<1x4x32x32xf32> to vector<4x32x32xf32>
    %71 = tpu.concatenate %64, %66, %68, %70 in 2 : vector<4x32x32xf32>, vector<4x32x32xf32>, vector<4x32x32xf32>, vector<4x32x32xf32> -> vector<4x32x128xf32>
    %72 = vector.shape_cast %71 : vector<4x32x128xf32> to vector<128x128xf32>
    %73 = arith.truncf %72 : vector<128x128xf32> to vector<128x128xbf16>
    %c0_12 = arith.constant 0 : index
    %c0_13 = arith.constant 0 : index
    %c0_14 = arith.constant 0 : index
    %74 = vector.load %arg6[%c0_12, %c0_13, %c0_14] : memref<1x128x128xbf16, #tpu.memory_space<vmem>>, vector<1x128x128xbf16>
    %75 = vector.shape_cast %74 : vector<1x128x128xbf16> to vector<128x128xbf16>
    %cst_15 = arith.constant dense<0.000000e+00> : vector<128x128xf32>
    %76 = tpu.matmul %73, %75, %cst_15 {dimension_numbers = #tpu.dot_dimension_numbers<[1], [0], [0], [1], [0, 0, 1, 1], [], []>} : vector<128x128xbf16>, vector<128x128xbf16>, vector<128x128xf32> -> vector<128x128xf32>
    %c0_16 = arith.constant 0 : index
    %c0_17 = arith.constant 0 : index
    %c0_18 = arith.constant 0 : index
    %77 = vector.load %arg7[%c0_16, %c0_17, %c0_18] : memref<1x1x128xf32, #tpu.memory_space<vmem>>, vector<1x1x128xf32>
    %78 = vector.shape_cast %77 : vector<1x1x128xf32> to vector<1x128xf32>
    %79 = vector.broadcast %78 : vector<1x128xf32> to vector<128x128xf32>
    %80 = arith.addf %76, %79 : vector<128x128xf32>
    %81 = arith.addf %3, %80 : vector<128x128xf32>
    %c0_19 = arith.constant 0 : index
    %c0_20 = arith.constant 0 : index
    %c0_21 = arith.constant 0 : index
    %82 = vector.load %arg8[%c0_19, %c0_20, %c0_21] : memref<1x1x128xf32, #tpu.memory_space<vmem>>, vector<1x1x128xf32>
    %83 = vector.shape_cast %82 : vector<1x1x128xf32> to vector<1x128xf32>
    %c0_22 = arith.constant 0 : index
    %c0_23 = arith.constant 0 : index
    %c0_24 = arith.constant 0 : index
    %84 = vector.load %arg9[%c0_22, %c0_23, %c0_24] : memref<1x1x128xf32, #tpu.memory_space<vmem>>, vector<1x1x128xf32>
    %85 = vector.shape_cast %84 : vector<1x1x128xf32> to vector<1x128xf32>
    %cst_25 = arith.constant dense<0.000000e+00> : vector<128xf32>
    %86 = vector.multi_reduction <add>, %81, %cst_25 [1] : vector<128x128xf32> to vector<128xf32>
    %87 = vector.shape_cast %86 : vector<128xf32> to vector<128x1xf32>
    %cst_26 = arith.constant 1.280000e+02 : f32
    %88 = vector.broadcast %cst_26 : f32 to vector<128x1xf32>
    %89 = arith.divf %87, %88 : vector<128x1xf32>
    %90 = vector.broadcast %89 : vector<128x1xf32> to vector<128x128xf32>
    %91 = arith.subf %81, %90 : vector<128x128xf32>
    %92 = arith.mulf %91, %91 : vector<128x128xf32>
    %cst_27 = arith.constant dense<0.000000e+00> : vector<128xf32>
    %93 = vector.multi_reduction <add>, %92, %cst_27 [1] : vector<128x128xf32> to vector<128xf32>
    %94 = vector.shape_cast %93 : vector<128xf32> to vector<128x1xf32>
    %cst_28 = arith.constant 1.280000e+02 : f32
    %95 = vector.broadcast %cst_28 : f32 to vector<128x1xf32>
    %96 = arith.divf %94, %95 : vector<128x1xf32>
    %97 = vector.broadcast %89 : vector<128x1xf32> to vector<128x128xf32>
    %98 = arith.subf %81, %97 : vector<128x128xf32>
    %cst_29 = arith.constant 9.99999974E-6 : f32
    %99 = vector.broadcast %cst_29 : f32 to vector<128x1xf32>
    %100 = arith.addf %96, %99 : vector<128x1xf32>
    %101 = math.rsqrt %100 : vector<128x1xf32>
    %102 = vector.broadcast %101 : vector<128x1xf32> to vector<128x128xf32>
    %103 = arith.mulf %98, %102 : vector<128x128xf32>
    %104 = vector.broadcast %83 : vector<1x128xf32> to vector<128x128xf32>
    %105 = arith.mulf %103, %104 : vector<128x128xf32>
    %106 = vector.broadcast %85 : vector<1x128xf32> to vector<128x128xf32>
    %107 = arith.addf %105, %106 : vector<128x128xf32>
    %108 = arith.truncf %107 : vector<128x128xf32> to vector<128x128xbf16>
    %c0_30 = arith.constant 0 : index
    %c0_31 = arith.constant 0 : index
    %c0_32 = arith.constant 0 : index
    %109 = vector.load %arg10[%c0_30, %c0_31, %c0_32] : memref<1x128x256xbf16, #tpu.memory_space<vmem>>, vector<1x128x256xbf16>
    %110 = vector.shape_cast %109 : vector<1x128x256xbf16> to vector<128x256xbf16>
    %cst_33 = arith.constant dense<0.000000e+00> : vector<128x256xf32>
    %111 = tpu.matmul %108, %110, %cst_33 {dimension_numbers = #tpu.dot_dimension_numbers<[1], [0], [0], [1], [0, 0, 1, 1], [], []>} : vector<128x128xbf16>, vector<128x256xbf16>, vector<128x256xf32> -> vector<128x256xf32>
    %c0_34 = arith.constant 0 : index
    %c0_35 = arith.constant 0 : index
    %c0_36 = arith.constant 0 : index
    %112 = vector.load %arg11[%c0_34, %c0_35, %c0_36] : memref<1x1x256xf32, #tpu.memory_space<vmem>>, vector<1x1x256xf32>
    %113 = vector.shape_cast %112 : vector<1x1x256xf32> to vector<1x256xf32>
    %114 = vector.broadcast %113 : vector<1x256xf32> to vector<128x256xf32>
    %115 = arith.addf %111, %114 : vector<128x256xf32>
    %cst_37 = arith.constant 0.000000e+00 : f32
    %116 = vector.broadcast %cst_37 : f32 to vector<128x256xf32>
    %117 = arith.maximumf %115, %116 : vector<128x256xf32>
    %118 = arith.truncf %117 : vector<128x256xf32> to vector<128x256xbf16>
    %c0_38 = arith.constant 0 : index
    %c0_39 = arith.constant 0 : index
    %c0_40 = arith.constant 0 : index
    %119 = vector.load %arg12[%c0_38, %c0_39, %c0_40] : memref<1x256x128xbf16, #tpu.memory_space<vmem>>, vector<1x256x128xbf16>
    %120 = vector.shape_cast %119 : vector<1x256x128xbf16> to vector<256x128xbf16>
    %cst_41 = arith.constant dense<0.000000e+00> : vector<128x128xf32>
    %121 = tpu.matmul %118, %120, %cst_41 {dimension_numbers = #tpu.dot_dimension_numbers<[1], [0], [0], [1], [0, 0, 1, 1], [], []>} : vector<128x256xbf16>, vector<256x128xbf16>, vector<128x128xf32> -> vector<128x128xf32>
    %c0_42 = arith.constant 0 : index
    %c0_43 = arith.constant 0 : index
    %c0_44 = arith.constant 0 : index
    %122 = vector.load %arg13[%c0_42, %c0_43, %c0_44] : memref<1x1x128xf32, #tpu.memory_space<vmem>>, vector<1x1x128xf32>
    %123 = vector.shape_cast %122 : vector<1x1x128xf32> to vector<1x128xf32>
    %124 = vector.broadcast %123 : vector<1x128xf32> to vector<128x128xf32>
    %125 = arith.addf %121, %124 : vector<128x128xf32>
    %126 = arith.addf %107, %125 : vector<128x128xf32>
    %c0_45 = arith.constant 0 : index
    %c0_46 = arith.constant 0 : index
    %c0_47 = arith.constant 0 : index
    %127 = vector.load %arg14[%c0_45, %c0_46, %c0_47] : memref<1x1x128xf32, #tpu.memory_space<vmem>>, vector<1x1x128xf32>
    %128 = vector.shape_cast %127 : vector<1x1x128xf32> to vector<1x128xf32>
    %c0_48 = arith.constant 0 : index
    %c0_49 = arith.constant 0 : index
    %c0_50 = arith.constant 0 : index
    %129 = vector.load %arg15[%c0_48, %c0_49, %c0_50] : memref<1x1x128xf32, #tpu.memory_space<vmem>>, vector<1x1x128xf32>
    %130 = vector.shape_cast %129 : vector<1x1x128xf32> to vector<1x128xf32>
    %cst_51 = arith.constant dense<0.000000e+00> : vector<128xf32>
    %131 = vector.multi_reduction <add>, %126, %cst_51 [1] : vector<128x128xf32> to vector<128xf32>
    %132 = vector.shape_cast %131 : vector<128xf32> to vector<128x1xf32>
    %cst_52 = arith.constant 1.280000e+02 : f32
    %133 = vector.broadcast %cst_52 : f32 to vector<128x1xf32>
    %134 = arith.divf %132, %133 : vector<128x1xf32>
    %135 = vector.broadcast %134 : vector<128x1xf32> to vector<128x128xf32>
    %136 = arith.subf %126, %135 : vector<128x128xf32>
    %137 = arith.mulf %136, %136 : vector<128x128xf32>
    %cst_53 = arith.constant dense<0.000000e+00> : vector<128xf32>
    %138 = vector.multi_reduction <add>, %137, %cst_53 [1] : vector<128x128xf32> to vector<128xf32>
    %139 = vector.shape_cast %138 : vector<128xf32> to vector<128x1xf32>
    %cst_54 = arith.constant 1.280000e+02 : f32
    %140 = vector.broadcast %cst_54 : f32 to vector<128x1xf32>
    %141 = arith.divf %139, %140 : vector<128x1xf32>
    %142 = vector.broadcast %134 : vector<128x1xf32> to vector<128x128xf32>
    %143 = arith.subf %126, %142 : vector<128x128xf32>
    %cst_55 = arith.constant 9.99999974E-6 : f32
    %144 = vector.broadcast %cst_55 : f32 to vector<128x1xf32>
    %145 = arith.addf %141, %144 : vector<128x1xf32>
    %146 = math.rsqrt %145 : vector<128x1xf32>
    %147 = vector.broadcast %146 : vector<128x1xf32> to vector<128x128xf32>
    %148 = arith.mulf %143, %147 : vector<128x128xf32>
    %149 = vector.broadcast %128 : vector<1x128xf32> to vector<128x128xf32>
    %150 = arith.mulf %148, %149 : vector<128x128xf32>
    %151 = vector.broadcast %130 : vector<1x128xf32> to vector<128x128xf32>
    %152 = arith.addf %150, %151 : vector<128x128xf32>
    %c0_56 = arith.constant 0 : index
    %c0_57 = arith.constant 0 : index
    %153 = vector.load %arg17[%c0_56, %c0_57] : memref<128x128xf32, #tpu.memory_space<vmem>>, vector<128x128xf32>
    tpu.vector_store %arg17[%c0_56, %c0_57], %152 {strides = array<i32>} : memref<128x128xf32, #tpu.memory_space<vmem>>, vector<128x128xf32>,
    %c1_i32 = arith.constant 1 : i32
    %154 = arith.cmpi eq, %arg1, %c1_i32 : i32
    %155 = arith.extui %154 : i1 to i32
    %c0_i32_58 = arith.constant 0 : i32
    %156 = arith.cmpi ne, %155, %c0_i32_58 : i32
    scf.if %156 {
      %157 = vector.shape_cast %152 : vector<128x128xf32> to vector<4x32x128xf32>
      %c0_59 = arith.constant 0 : index
      %c0_60 = arith.constant 0 : index
      %c0_61 = arith.constant 0 : index
      %158 = vector.load %arg16[%c0_59, %c0_60, %c0_61] : memref<4x32x128xf32, #tpu.memory_space<vmem>>, vector<4x32x128xf32>
      tpu.vector_store %arg16[%c0_59, %c0_60, %c0_61], %157 {strides = array<i32>} : memref<4x32x128xf32, #tpu.memory_space<vmem>>, vector<4x32x128xf32>,
    } else {
    }
    return
  }
  func.func @transform_0(%arg0: i32, %arg1: i32) -> (i32, i32, i32) {
    %c0_i32 = arith.constant 0 : i32
    %c0_i32_0 = arith.constant 0 : i32
    %c0_i32_1 = arith.constant 0 : i32
    return %arg0, %c0_i32, %c0_i32_0 : i32, i32, i32
  }
  func.func @transform_1(%arg0: i32, %arg1: i32) -> (i32, i32) {
    %c0_i32 = arith.constant 0 : i32
    %c0_i32_0 = arith.constant 0 : i32
    %c0_i32_1 = arith.constant 0 : i32
    return %c0_i32, %c0_i32_0 : i32, i32
  }
  func.func @transform_2(%arg0: i32, %arg1: i32) -> (i32, i32, i32) {
    %c0_i32 = arith.constant 0 : i32
    %c0_i32_0 = arith.constant 0 : i32
    %c0_i32_1 = arith.constant 0 : i32
    return %arg1, %c0_i32, %c0_i32_0 : i32, i32, i32
  }
  func.func @transform_3(%arg0: i32, %arg1: i32) -> (i32, i32, i32) {
    %c0_i32 = arith.constant 0 : i32
    %c0_i32_0 = arith.constant 0 : i32
    %c0_i32_1 = arith.constant 0 : i32
    return %arg1, %c0_i32, %c0_i32_0 : i32, i32, i32
  }
  func.func @transform_4(%arg0: i32, %arg1: i32) -> (i32, i32, i32) {
    %c0_i32 = arith.constant 0 : i32
    %c0_i32_0 = arith.constant 0 : i32
    %c0_i32_1 = arith.constant 0 : i32
    return %arg1, %c0_i32, %c0_i32_0 : i32, i32, i32
  }
  func.func @transform_5(%arg0: i32, %arg1: i32) -> (i32, i32, i32) {
    %c0_i32 = arith.constant 0 : i32
    %c0_i32_0 = arith.constant 0 : i32
    %c0_i32_1 = arith.constant 0 : i32
    return %arg1, %c0_i32, %c0_i32_0 : i32, i32, i32
  }
  func.func @transform_6(%arg0: i32, %arg1: i32) -> (i32, i32, i32) {
    %c0_i32 = arith.constant 0 : i32
    %c0_i32_0 = arith.constant 0 : i32
    %c0_i32_1 = arith.constant 0 : i32
    return %arg1, %c0_i32, %c0_i32_0 : i32, i32, i32
  }
  func.func @transform_7(%arg0: i32, %arg1: i32) -> (i32, i32, i32) {
    %c0_i32 = arith.constant 0 : i32
    %c0_i32_0 = arith.constant 0 : i32
    %c0_i32_1 = arith.constant 0 : i32
    return %arg1, %c0_i32, %c0_i32_0 : i32, i32, i32
  }
  func.func @transform_8(%arg0: i32, %arg1: i32) -> (i32, i32, i32) {
    %c0_i32 = arith.constant 0 : i32
    %c0_i32_0 = arith.constant 0 : i32
    %c0_i32_1 = arith.constant 0 : i32
    return %arg1, %c0_i32, %c0_i32_0 : i32, i32, i32
  }
  func.func @transform_9(%arg0: i32, %arg1: i32) -> (i32, i32, i32) {
    %c0_i32 = arith.constant 0 : i32
    %c0_i32_0 = arith.constant 0 : i32
    %c0_i32_1 = arith.constant 0 : i32
    return %arg1, %c0_i32, %c0_i32_0 : i32, i32, i32
  }
  func.func @transform_10(%arg0: i32, %arg1: i32) -> (i32, i32, i32) {
    %c0_i32 = arith.constant 0 : i32
    %c0_i32_0 = arith.constant 0 : i32
    %c0_i32_1 = arith.constant 0 : i32
    return %arg1, %c0_i32, %c0_i32_0 : i32, i32, i32
  }
  func.func @transform_11(%arg0: i32, %arg1: i32) -> (i32, i32, i32) {
    %c0_i32 = arith.constant 0 : i32
    %c0_i32_0 = arith.constant 0 : i32
    %c0_i32_1 = arith.constant 0 : i32
    return %arg1, %c0_i32, %c0_i32_0 : i32, i32, i32
  }
  func.func @transform_12(%arg0: i32, %arg1: i32) -> (i32, i32, i32) {
    %c0_i32 = arith.constant 0 : i32
    %c0_i32_0 = arith.constant 0 : i32
    %c0_i32_1 = arith.constant 0 : i32
    return %arg1, %c0_i32, %c0_i32_0 : i32, i32, i32
  }
  func.func @transform_13(%arg0: i32, %arg1: i32) -> (i32, i32, i32) {
    %c0_i32 = arith.constant 0 : i32
    %c0_i32_0 = arith.constant 0 : i32
    %c0_i32_1 = arith.constant 0 : i32
    return %arg1, %c0_i32, %c0_i32_0 : i32, i32, i32
  }
  func.func @transform_14(%arg0: i32, %arg1: i32) -> (i32, i32, i32) {
    %c0_i32 = arith.constant 0 : i32
    %c0_i32_0 = arith.constant 0 : i32
    %c0_i32_1 = arith.constant 0 : i32
    return %arg0, %c0_i32, %c0_i32_0 : i32, i32, i32
  }
}

</mosaic_0001>

<llo_original>
// kernel: tpu_custom_call.1
$region0: #{tpu_custom_call.1}
  #allocation0 [shape = 'u32[]', space=smem, size = 0x4, offset = 0x4, fixed_abs, tag = 'smem constant byte address 0x4 - core index']
  #allocation1 [shape = 'u32[144,128]{1,0:T(1,128)}', space=vmem, size = 0x12000, scoped, tag = 'internal scratch']
  #allocation2 [shape = 'f32[128,128]{1,0:T(8,128)}', space=vmem, size = 0x10000, scoped, tag = 'scratch operand']
  %s0 = inlined_call_operand.hbm [shape: f32[4,32,128], index: 0, kind: input, shape index: {}]
  %s1 = inlined_call_operand.hbm [shape: f32[32,128], index: 1, kind: input, shape index: {}]
  %s2 = inlined_call_operand.hbm [shape: bf16[2,128,384], index: 2, kind: input, shape index: {}]
  %s3 = inlined_call_operand.hbm [shape: f32[2,1,384], index: 3, kind: input, shape index: {}]
  %s4 = inlined_call_operand.hbm [shape: bf16[2,128,128], index: 4, kind: input, shape index: {}]
  %s5 = inlined_call_operand.hbm [shape: f32[2,1,128], index: 5, kind: input, shape index: {}]
  %s6 = inlined_call_operand.hbm [shape: f32[2,1,128], index: 6, kind: input, shape index: {}]
  %s7 = inlined_call_operand.hbm [shape: f32[2,1,128], index: 7, kind: input, shape index: {}]
  %s8 = inlined_call_operand.hbm [shape: bf16[2,128,256], index: 8, kind: input, shape index: {}]
  %s9 = inlined_call_operand.hbm [shape: f32[2,1,256], index: 9, kind: input, shape index: {}]
  %s10 = inlined_call_operand.hbm [shape: bf16[2,256,128], index: 10, kind: input, shape index: {}]
  %s11 = inlined_call_operand.hbm [shape: f32[2,1,128], index: 11, kind: input, shape index: {}]
  %s12 = inlined_call_operand.hbm [shape: f32[2,1,128], index: 12, kind: input, shape index: {}]
  %s13 = inlined_call_operand.hbm [shape: f32[2,1,128], index: 13, kind: input, shape index: {}]
  %s14 = inlined_call_operand.hbm [shape: f32[4,32,128], index: 14, kind: output, shape index: {}]
  %s15 = sld [smem:[#allocation0]]
  $region153: #{tpu_custom_call.1} parent=0
    _
  %s17 = ssub.s32 1, %s15
  %s18 = scalar_select 0, %s17, %s15
  $region1: #{tpu_custom_call.1} parent=0
    #allocation3 [shape = 'u8[65536]{0}', space=vmem, size = 0x10000, scoped, tag = 'input window, operand 0, single buffered']
    #allocation4 [shape = 's32[2]{0}', space=sflag, size = 0x8, scoped, tag = 'scoped memory for tpu_custom_call.1']
    #allocation5 [shape = 's32[2]{0}', space=sflag, size = 0x8, scoped, tag = 'scoped memory for tpu_custom_call.1']
    #allocation6 [shape = 'u8[16384]{0}', space=vmem, size = 0x4000, scoped, tag = 'input window, operand 1, single buffered']
    #allocation7 [shape = 's32[1]{0}', space=sflag, size = 0x4, scoped, tag = 'scoped memory for tpu_custom_call.1']
    #allocation8 [shape = 'u8[196608]{0}', space=vmem, size = 0x30000, scoped, tag = 'input window, operand 2']
    #allocation9 [shape = 'u8[3072]{0}', space=vmem, size = 0xc00, scoped, tag = 'input window, operand 3']
    #allocation10 [shape = 'u8[65536]{0}', space=vmem, size = 0x10000, scoped, tag = 'input window, operand 4']
    #allocation11 [shape = 'u8[1024]{0}', space=vmem, size = 0x400, scoped, tag = 'input window, operand 5']
    #allocation12 [shape = 'u8[1024]{0}', space=vmem, size = 0x400, scoped, tag = 'input window, operand 6']
    #allocation13 [shape = 'u8[1024]{0}', space=vmem, size = 0x400, scoped, tag = 'input window, operand 7']
    #allocation14 [shape = 'u8[131072]{0}', space=vmem, size = 0x20000, scoped, tag = 'input window, operand 8']
    #allocation15 [shape = 'u8[2048]{0}', space=vmem, size = 0x800, scoped, tag = 'input window, operand 9']
    #allocation16 [shape = 'u8[131072]{0}', space=vmem, size = 0x20000, scoped, tag = 'input window, operand 10']
    #allocation17 [shape = 'u8[1024]{0}', space=vmem, size = 0x400, scoped, tag = 'input window, operand 11']
    #allocation18 [shape = 'u8[1024]{0}', space=vmem, size = 0x400, scoped, tag = 'input window, operand 12']
    #allocation19 [shape = 'u8[1024]{0}', space=vmem, size = 0x400, scoped, tag = 'input window, operand 13']
    #allocation20 [shape = 'u8[65536]{0}', space=vmem, size = 0x10000, scoped, tag = 'output window, operand 0, single buffered']
    %19 = vsyncpa [#allocation4], 0
    %20 = vsyncpa [#allocation7], 0
    %21 = vsyncpa [#allocation5], 0
    loop: start=0, step=1, limit=4
    $region2: #{tpu_custom_call.1} parent=1 // loop_pre_header
      _
    $region3: #{tpu_custom_call.1} parent=1 // loop_header
      %s23 = sphi 0, %s27
      %p24 = scmp.ge.s32.totalorder %s23, 4
      %s30 = sphi 0, %s42
      %s31 = sphi 0, %s38
      %s32 = sphi 0, %s30
      %s33 = sphi 0, %s31
      %s34 = sphi 0, %s32
      %s35 = sphi 0, %s33
      %s45 = sphi 0, %s47
      %s48 = sphi 0, %s45
      %s49 = sphi 0, %s48
      %s65 = sphi 0, %s49
      %s69 = sphi 0, %s69
      %s71 = sphi 0, %s69
      %s72 = sphi 0, %s71
      %s86 = sphi 0, %s72
      %s92 = sphi 0, %s94
      %s95 = sphi 0, %s92
      %s96 = sphi 0, %s95
      %s112 = sphi 0, %s96
      %s118 = sphi 0, %s120
      %s121 = sphi 0, %s118
      %s122 = sphi 0, %s121
      %s138 = sphi 0, %s122
      %s144 = sphi 0, %s146
      %s147 = sphi 0, %s144
      %s148 = sphi 0, %s147
      %s164 = sphi 0, %s148
      %s170 = sphi 0, %s172
      %s173 = sphi 0, %s170
      %s174 = sphi 0, %s173
      %s190 = sphi 0, %s174
      %s196 = sphi 0, %s198
      %s199 = sphi 0, %s196
      %s200 = sphi 0, %s199
      %s216 = sphi 0, %s200
      %s222 = sphi 0, %s224
      %s225 = sphi 0, %s222
      %s226 = sphi 0, %s225
      %s242 = sphi 0, %s226
      %s248 = sphi 0, %s250
      %s251 = sphi 0, %s248
      %s252 = sphi 0, %s251
      %s268 = sphi 0, %s252
      %s274 = sphi 0, %s276
      %s277 = sphi 0, %s274
      %s278 = sphi 0, %s277
      %s294 = sphi 0, %s278
      %s300 = sphi 0, %s302
      %s303 = sphi 0, %s300
      %s304 = sphi 0, %s303
      %s320 = sphi 0, %s304
      %s326 = sphi 0, %s328
      %s329 = sphi 0, %s326
      %s330 = sphi 0, %s329
      %s346 = sphi 0, %s330
      %s352 = sphi 0, %s354
      %s355 = sphi 0, %s352
      %s356 = sphi 0, %s355
      %s372 = sphi 0, %s356
      %s378 = sphi 0, %s380
      %s381 = sphi 0, %s378
      %s382 = sphi 0, %s381
      %s398 = sphi 0, %s382
      %s404 = sphi 0, %s406
      %s407 = sphi 0, %s404
      %s408 = sphi 0, %s407
      %s424 = sphi 0, %s408
    $region4: #{tpu_custom_call.1} parent=1 // loop_header_branch
      %26 = sbr.rel (%p24) target = $region8
    $region5: #{tpu_custom_call.1} parent=1 // loop_body
      %s28 = ssub.s32 %s23, 1
      %s29 = ssub.s32 %s23, 2
      %s36 = sadd.s32 1, %s31
      %p37 = scmp.ge.s32.totalorder %s36, 2
      %s38 = scalar_select %p37, 0, %s36
      %s39 = sadd.s32 1, %s30
      %s40 = scalar_select %p37, %s39, %s30
      %p41 = scmp.ge.s32.totalorder %s40, 1
      %s42 = scalar_select %p41, 0, %s40
      %s43 = ssub.s32 %s30, %s42
      %p44 = scmp.eq.s32.totalorder %s43, 0
      %s46 = sadd.s32 %s45, 1
      %s47 = scalar_select %p44, %s45, %s46
      %p50 = pneg %p44
      %p51 = scmp.eq.s32.totalorder %s23, 1
      %p52 = por %p50, %p51
      %p53 = scmp.ne.s32.totalorder %s45, %s48
      %p54 = scmp.eq.s32.totalorder %s23, 0
      %p55 = por %p53, %p54
      %p56 = scmp.ne.s32.totalorder %s45, %s48
      %p57 = scmp.eq.s32.totalorder %s28, 1
      %p58 = por %p56, %p57
      %p59 = scmp.ne.s32.totalorder %s48, %s49
      %p60 = scmp.eq.s32.totalorder %s28, 0
      %p61 = por %p59, %p60
      %p62 = scmp.ne.s32.totalorder %s48, %s49
      %p63 = scmp.eq.s32.totalorder %s29, 1
      %p64 = por %p62, %p63
      %p66 = scmp.ne.s32.totalorder %s49, %s65
      %p67 = scmp.eq.s32.totalorder %s29, 0
      %p68 = por %p66, %p67
      %s70 = sadd.s32 %s69, 1
      %p73 = scmp.eq.s32.totalorder %s23, 1
      %p74 = scmp.ne.s32.totalorder %s69, %s71
      %p75 = scmp.eq.s32.totalorder %s23, 0
      %p76 = por %p74, %p75
      %p77 = scmp.ne.s32.totalorder %s69, %s71
      %p78 = scmp.eq.s32.totalorder %s28, 1
      %p79 = por %p77, %p78
      %p80 = scmp.ne.s32.totalorder %s71, %s72
      %p81 = scmp.eq.s32.totalorder %s28, 0
      %p82 = por %p80, %p81
      %p83 = scmp.ne.s32.totalorder %s71, %s72
      %p84 = scmp.eq.s32.totalorder %s29, 1
      %p85 = por %p83, %p84
      %p87 = scmp.ne.s32.totalorder %s72, %s86
      %p88 = scmp.eq.s32.totalorder %s29, 0
      %p89 = por %p87, %p88
      %s90 = ssub.s32 %s31, %s38
      %p91 = scmp.eq.s32.totalorder %s90, 0
      %s93 = sadd.s32 %s92, 1
      %s94 = scalar_select %p91, %s92, %s93
      %p97 = pneg %p91
      %p98 = scmp.eq.s32.totalorder %s23, 1
      %p99 = por %p97, %p98
      %p100 = scmp.ne.s32.totalorder %s92, %s95
      %p101 = scmp.eq.s32.totalorder %s23, 0
      %p102 = por %p100, %p101
      %p103 = scmp.ne.s32.totalorder %s92, %s95
      %p104 = scmp.eq.s32.totalorder %s28, 1
      %p105 = por %p103, %p104
      %p106 = scmp.ne.s32.totalorder %s95, %s96
      %p107 = scmp.eq.s32.totalorder %s28, 0
      %p108 = por %p106, %p107
      %p109 = scmp.ne.s32.totalorder %s95, %s96
      %p110 = scmp.eq.s32.totalorder %s29, 1
      %p111 = por %p109, %p110
      %p113 = scmp.ne.s32.totalorder %s96, %s112
      %p114 = scmp.eq.s32.totalorder %s29, 0
      %p115 = por %p113, %p114
      %s116 = ssub.s32 %s31, %s38
      %p117 = scmp.eq.s32.totalorder %s116, 0
      %s119 = sadd.s32 %s118, 1
      %s120 = scalar_select %p117, %s118, %s119
      %p123 = pneg %p117
      %p124 = scmp.eq.s32.totalorder %s23, 1
      %p125 = por %p123, %p124
      %p126 = scmp.ne.s32.totalorder %s118, %s121
      %p127 = scmp.eq.s32.totalorder %s23, 0
      %p128 = por %p126, %p127
      %p129 = scmp.ne.s32.totalorder %s118, %s121
      %p130 = scmp.eq.s32.totalorder %s28, 1
      %p131 = por %p129, %p130
      %p132 = scmp.ne.s32.totalorder %s121, %s122
      %p133 = scmp.eq.s32.totalorder %s28, 0
      %p134 = por %p132, %p133
      %p135 = scmp.ne.s32.totalorder %s121, %s122
      %p136 = scmp.eq.s32.totalorder %s29, 1
      %p137 = por %p135, %p136
      %p139 = scmp.ne.s32.totalorder %s122, %s138
      %p140 = scmp.eq.s32.totalorder %s29, 0
      %p141 = por %p139, %p140
      %s142 = ssub.s32 %s31, %s38
      %p143 = scmp.eq.s32.totalorder %s142, 0
      %s145 = sadd.s32 %s144, 1
      %s146 = scalar_select %p143, %s144, %s145
      %p149 = pneg %p143
      %p150 = scmp.eq.s32.totalorder %s23, 1
      %p151 = por %p149, %p150
      %p152 = scmp.ne.s32.totalorder %s144, %s147
      %p153 = scmp.eq.s32.totalorder %s23, 0
      %p154 = por %p152, %p153
      %p155 = scmp.ne.s32.totalorder %s144, %s147
      %p156 = scmp.eq.s32.totalorder %s28, 1
      %p157 = por %p155, %p156
      %p158 = scmp.ne.s32.totalorder %s147, %s148
      %p159 = scmp.eq.s32.totalorder %s28, 0
      %p160 = por %p158, %p159
      %p161 = scmp.ne.s32.totalorder %s147, %s148
      %p162 = scmp.eq.s32.totalorder %s29, 1
      %p163 = por %p161, %p162
      %p165 = scmp.ne.s32.totalorder %s148, %s164
      %p166 = scmp.eq.s32.totalorder %s29, 0
      %p167 = por %p165, %p166
      %s168 = ssub.s32 %s31, %s38
      %p169 = scmp.eq.s32.totalorder %s168, 0
      %s171 = sadd.s32 %s170, 1
      %s172 = scalar_select %p169, %s170, %s171
      %p175 = pneg %p169
      %p176 = scmp.eq.s32.totalorder %s23, 1
      %p177 = por %p175, %p176
      %p178 = scmp.ne.s32.totalorder %s170, %s173
      %p179 = scmp.eq.s32.totalorder %s23, 0
      %p180 = por %p178, %p179
      %p181 = scmp.ne.s32.totalorder %s170, %s173
      %p182 = scmp.eq.s32.totalorder %s28, 1
      %p183 = por %p181, %p182
      %p184 = scmp.ne.s32.totalorder %s173, %s174
      %p185 = scmp.eq.s32.totalorder %s28, 0
      %p186 = por %p184, %p185
      %p187 = scmp.ne.s32.totalorder %s173, %s174
      %p188 = scmp.eq.s32.totalorder %s29, 1
      %p189 = por %p187, %p188
      %p191 = scmp.ne.s32.totalorder %s174, %s190
      %p192 = scmp.eq.s32.totalorder %s29, 0
      %p193 = por %p191, %p192
      %s194 = ssub.s32 %s31, %s38
      %p195 = scmp.eq.s32.totalorder %s194, 0
      %s197 = sadd.s32 %s196, 1
      %s198 = scalar_select %p195, %s196, %s197
      %p201 = pneg %p195
      %p202 = scmp.eq.s32.totalorder %s23, 1
      %p203 = por %p201, %p202
      %p204 = scmp.ne.s32.totalorder %s196, %s199
      %p205 = scmp.eq.s32.totalorder %s23, 0
      %p206 = por %p204, %p205
      %p207 = scmp.ne.s32.totalorder %s196, %s199
      %p208 = scmp.eq.s32.totalorder %s28, 1
      %p209 = por %p207, %p208
      %p210 = scmp.ne.s32.totalorder %s199, %s200
      %p211 = scmp.eq.s32.totalorder %s28, 0
      %p212 = por %p210, %p211
      %p213 = scmp.ne.s32.totalorder %s199, %s200
      %p214 = scmp.eq.s32.totalorder %s29, 1
      %p215 = por %p213, %p214
      %p217 = scmp.ne.s32.totalorder %s200, %s216
      %p218 = scmp.eq.s32.totalorder %s29, 0
      %p219 = por %p217, %p218
      %s220 = ssub.s32 %s31, %s38
      %p221 = scmp.eq.s32.totalorder %s220, 0
      %s223 = sadd.s32 %s222, 1
      %s224 = scalar_select %p221, %s222, %s223
      %p227 = pneg %p221
      %p228 = scmp.eq.s32.totalorder %s23, 1
      %p229 = por %p227, %p228
      %p230 = scmp.ne.s32.totalorder %s222, %s225
      %p231 = scmp.eq.s32.totalorder %s23, 0
      %p232 = por %p230, %p231
      %p233 = scmp.ne.s32.totalorder %s222, %s225
      %p234 = scmp.eq.s32.totalorder %s28, 1
      %p235 = por %p233, %p234
      %p236 = scmp.ne.s32.totalorder %s225, %s226
      %p237 = scmp.eq.s32.totalorder %s28, 0
      %p238 = por %p236, %p237
      %p239 = scmp.ne.s32.totalorder %s225, %s226
      %p240 = scmp.eq.s32.totalorder %s29, 1
      %p241 = por %p239, %p240
      %p243 = scmp.ne.s32.totalorder %s226, %s242
      %p244 = scmp.eq.s32.totalorder %s29, 0
      %p245 = por %p243, %p244
      %s246 = ssub.s32 %s31, %s38
      %p247 = scmp.eq.s32.totalorder %s246, 0
      %s249 = sadd.s32 %s248, 1
      %s250 = scalar_select %p247, %s248, %s249
      %p253 = pneg %p247
      %p254 = scmp.eq.s32.totalorder %s23, 1
      %p255 = por %p253, %p254
      %p256 = scmp.ne.s32.totalorder %s248, %s251
      %p257 = scmp.eq.s32.totalorder %s23, 0
      %p258 = por %p256, %p257
      %p259 = scmp.ne.s32.totalorder %s248, %s251
      %p260 = scmp.eq.s32.totalorder %s28, 1
      %p261 = por %p259, %p260
      %p262 = scmp.ne.s32.totalorder %s251, %s252
      %p263 = scmp.eq.s32.totalorder %s28, 0
      %p264 = por %p262, %p263
      %p265 = scmp.ne.s32.totalorder %s251, %s252
      %p266 = scmp.eq.s32.totalorder %s29, 1
      %p267 = por %p265, %p266
      %p269 = scmp.ne.s32.totalorder %s252, %s268
      %p270 = scmp.eq.s32.totalorder %s29, 0
      %p271 = por %p269, %p270
      %s272 = ssub.s32 %s31, %s38
      %p273 = scmp.eq.s32.totalorder %s272, 0
      %s275 = sadd.s32 %s274, 1
      %s276 = scalar_select %p273, %s274, %s275
      %p279 = pneg %p273
      %p280 = scmp.eq.s32.totalorder %s23, 1
      %p281 = por %p279, %p280
      %p282 = scmp.ne.s32.totalorder %s274, %s277
      %p283 = scmp.eq.s32.totalorder %s23, 0
      %p284 = por %p282, %p283
      %p285 = scmp.ne.s32.totalorder %s274, %s277
      %p286 = scmp.eq.s32.totalorder %s28, 1
      %p287 = por %p285, %p286
      %p288 = scmp.ne.s32.totalorder %s277, %s278
      %p289 = scmp.eq.s32.totalorder %s28, 0
      %p290 = por %p288, %p289
      %p291 = scmp.ne.s32.totalorder %s277, %s278
      %p292 = scmp.eq.s32.totalorder %s29, 1
      %p293 = por %p291, %p292
      %p295 = scmp.ne.s32.totalorder %s278, %s294
      %p296 = scmp.eq.s32.totalorder %s29, 0
      %p297 = por %p295, %p296
      %s298 = ssub.s32 %s31, %s38
      %p299 = scmp.eq.s32.totalorder %s298, 0
      %s301 = sadd.s32 %s300, 1
      %s302 = scalar_select %p299, %s300, %s301
      %p305 = pneg %p299
      %p306 = scmp.eq.s32.totalorder %s23, 1
      %p307 = por %p305, %p306
      %p308 = scmp.ne.s32.totalorder %s300, %s303
      %p309 = scmp.eq.s32.totalorder %s23, 0
      %p310 = por %p308, %p309
      %p311 = scmp.ne.s32.totalorder %s300, %s303
      %p312 = scmp.eq.s32.totalorder %s28, 1
      %p313 = por %p311, %p312
      %p314 = scmp.ne.s32.totalorder %s303, %s304
      %p315 = scmp.eq.s32.totalorder %s28, 0
      %p316 = por %p314, %p315
      %p317 = scmp.ne.s32.totalorder %s303, %s304
      %p318 = scmp.eq.s32.totalorder %s29, 1
      %p319 = por %p317, %p318
      %p321 = scmp.ne.s32.totalorder %s304, %s320
      %p322 = scmp.eq.s32.totalorder %s29, 0
      %p323 = por %p321, %p322
      %s324 = ssub.s32 %s31, %s38
      %p325 = scmp.eq.s32.totalorder %s324, 0
      %s327 = sadd.s32 %s326, 1
      %s328 = scalar_select %p325, %s326, %s327
      %p331 = pneg %p325
      %p332 = scmp.eq.s32.totalorder %s23, 1
      %p333 = por %p331, %p332
      %p334 = scmp.ne.s32.totalorder %s326, %s329
      %p335 = scmp.eq.s32.totalorder %s23, 0
      %p336 = por %p334, %p335
      %p337 = scmp.ne.s32.totalorder %s326, %s329
      %p338 = scmp.eq.s32.totalorder %s28, 1
      %p339 = por %p337, %p338
      %p340 = scmp.ne.s32.totalorder %s329, %s330
      %p341 = scmp.eq.s32.totalorder %s28, 0
      %p342 = por %p340, %p341
      %p343 = scmp.ne.s32.totalorder %s329, %s330
      %p344 = scmp.eq.s32.totalorder %s29, 1
      %p345 = por %p343, %p344
      %p347 = scmp.ne.s32.totalorder %s330, %s346
      %p348 = scmp.eq.s32.totalorder %s29, 0
      %p349 = por %p347, %p348
      %s350 = ssub.s32 %s31, %s38
      %p351 = scmp.eq.s32.totalorder %s350, 0
      %s353 = sadd.s32 %s352, 1
      %s354 = scalar_select %p351, %s352, %s353
      %p357 = pneg %p351
      %p358 = scmp.eq.s32.totalorder %s23, 1
      %p359 = por %p357, %p358
      %p360 = scmp.ne.s32.totalorder %s352, %s355
      %p361 = scmp.eq.s32.totalorder %s23, 0
      %p362 = por %p360, %p361
      %p363 = scmp.ne.s32.totalorder %s352, %s355
      %p364 = scmp.eq.s32.totalorder %s28, 1
      %p365 = por %p363, %p364
      %p366 = scmp.ne.s32.totalorder %s355, %s356
      %p367 = scmp.eq.s32.totalorder %s28, 0
      %p368 = por %p366, %p367
      %p369 = scmp.ne.s32.totalorder %s355, %s356
      %p370 = scmp.eq.s32.totalorder %s29, 1
      %p371 = por %p369, %p370
      %p373 = scmp.ne.s32.totalorder %s356, %s372
      %p374 = scmp.eq.s32.totalorder %s29, 0
      %p375 = por %p373, %p374
      %s376 = ssub.s32 %s31, %s38
      %p377 = scmp.eq.s32.totalorder %s376, 0
      %s379 = sadd.s32 %s378, 1
      %s380 = scalar_select %p377, %s378, %s379
      %p383 = pneg %p377
      %p384 = scmp.eq.s32.totalorder %s23, 1
      %p385 = por %p383, %p384
      %p386 = scmp.ne.s32.totalorder %s378, %s381
      %p387 = scmp.eq.s32.totalorder %s23, 0
      %p388 = por %p386, %p387
      %p389 = scmp.ne.s32.totalorder %s378, %s381
      %p390 = scmp.eq.s32.totalorder %s28, 1
      %p391 = por %p389, %p390
      %p392 = scmp.ne.s32.totalorder %s381, %s382
      %p393 = scmp.eq.s32.totalorder %s28, 0
      %p394 = por %p392, %p393
      %p395 = scmp.ne.s32.totalorder %s381, %s382
      %p396 = scmp.eq.s32.totalorder %s29, 1
      %p397 = por %p395, %p396
      %p399 = scmp.ne.s32.totalorder %s382, %s398
      %p400 = scmp.eq.s32.totalorder %s29, 0
      %p401 = por %p399, %p400
      %s402 = ssub.s32 %s30, %s42
      %p403 = scmp.eq.s32.totalorder %s402, 0
      %s405 = sadd.s32 %s404, 1
      %s406 = scalar_select %p403, %s404, %s405
      %p409 = pneg %p403
      %p410 = scmp.eq.s32.totalorder %s23, 1
      %p411 = por %p409, %p410
      %p412 = scmp.ne.s32.totalorder %s404, %s407
      %p413 = scmp.eq.s32.totalorder %s23, 0
      %p414 = por %p412, %p413
      %p415 = scmp.ne.s32.totalorder %s404, %s407
      %p416 = scmp.eq.s32.totalorder %s28, 1
      %p417 = por %p415, %p416
      %p418 = scmp.ne.s32.totalorder %s407, %s408
      %p419 = scmp.eq.s32.totalorder %s28, 0
      %p420 = por %p418, %p419
      %p421 = scmp.ne.s32.totalorder %s407, %s408
      %p422 = scmp.eq.s32.totalorder %s29, 1
      %p423 = por %p421, %p422
      %p425 = scmp.ne.s32.totalorder %s408, %s424
      %p426 = scmp.eq.s32.totalorder %s29, 0
      %p427 = por %p425, %p426
      %p428 = scmp.le.s32.totalorder 1, %s23
      %p429 = scmp.lt.s32.totalorder %s23, 3
      %p430 = pnand %p428, %p429
      %p431 = pneg %p430
      // Predicated region
      $region9: #{tpu_custom_call.1} parent=5 // pred_check
        _
      $region10: #{tpu_custom_call.1} parent=5 // pred_check_branch
        %433 = sbr.rel (%p430) target = $region12
      $region11: #{tpu_custom_call.1} parent=5 // pred_region
        %s434 = ssub.s32 %s23, 1
        // Predicated region
        $region13: #{tpu_custom_call.1} parent=11 // pred_check
          %p435 = pneg %p61
        $region14: #{tpu_custom_call.1} parent=11 // pred_check_branch
          %437 = sbr.rel (%p435) target = $region16
        $region15: #{tpu_custom_call.1} parent=11 // pred_region
          %s438 = smul.u32 4, %s32
          %s440 = ssub.s32 2048, 2048
          %441 = vsyncadd [#allocation4], %s440
          %s442 = smul.addr %s438, 4
          %s443 = smul.addr %s442, 128
          %s444 = scalar_lea.hbm %s0, %s443
          %s445 = sshll.u32 [#allocation3], 4
          %s446 = int_to_ptr.vmem [resolvable:$true] %s445
          %451 = dma.hbm_to_vmem [thread:$0]  %s444, 2048, %s446, [#allocation4], 128, 128, 8
        $region16: #{tpu_custom_call.1} parent=11 // pred_fallthru
          _
        // Predicated region
        $region17: #{tpu_custom_call.1} parent=11 // pred_check
          %p452 = pneg %p82
        $region18: #{tpu_custom_call.1} parent=11 // pred_check_branch
          %454 = sbr.rel (%p452) target = $region20
        $region19: #{tpu_custom_call.1} parent=11 // pred_region
          %s456 = ssub.s32 512, 512
          %457 = vsyncadd [#allocation7], %s456
          %s458 = sshll.u32 [#allocation6], 4
          %s459 = int_to_ptr.vmem [resolvable:$true] %s458
          %464 = dma.hbm_to_vmem [thread:$0]  %s1, 512, %s459, [#allocation7], 128, 128, 8
        $region20: #{tpu_custom_call.1} parent=11 // pred_fallthru
          _
      $region12: #{tpu_custom_call.1} parent=5 // pred_fallthru
        _
      %p465 = scmp.lt.s32.totalorder %s23, 2
      // Predicated region
      $region21: #{tpu_custom_call.1} parent=5 // pred_check
        %p466 = pneg %p465
      $region22: #{tpu_custom_call.1} parent=5 // pred_check_branch
        %468 = sbr.rel (%p466) target = $region24
      $region23: #{tpu_custom_call.1} parent=5 // pred_region
        // Predicated region
        $region25: #{tpu_custom_call.1} parent=23 // pred_check
          %p469 = pneg %p102
        $region26: #{tpu_custom_call.1} parent=23 // pred_check_branch
          %471 = sbr.rel (%p469) target = $region28
        $region27: #{tpu_custom_call.1} parent=23 // pred_region
          %s472 = sand.u32 %s23, 1
          %s473 = scalar_lea.sflag [#allocation4], %s472
          %s474 = sand.u32 %s92, 1
          %s475 = smul.addr %s474, 192
          %s476 = scalar_lea.vmem [#allocation8], %s475
          %s478 = ssub.s32 3072, 3072
          %479 = vsyncadd %s473, %s478
          %s480 = smul.addr %s31, 48
          %s481 = smul.addr %s480, 64
          %s482 = scalar_lea.hbm %s2, %s481
          %s483 = sshll.u32 %s476, 4
          %s484 = int_to_ptr.vmem [resolvable:$true] %s483
          %489 = dma.hbm_to_vmem [thread:$0]  %s482, 3072, %s484, %s473, 192, 192, 12
        $region28: #{tpu_custom_call.1} parent=23 // pred_fallthru
          _
        // Predicated region
        $region29: #{tpu_custom_call.1} parent=23 // pred_check
          %p490 = pneg %p128
        $region30: #{tpu_custom_call.1} parent=23 // pred_check_branch
          %492 = sbr.rel (%p490) target = $region32
        $region31: #{tpu_custom_call.1} parent=23 // pred_region
          %s493 = sand.u32 %s23, 1
          %s494 = scalar_lea.sflag [#allocation4], %s493
          %s495 = sand.u32 %s118, 1
          %s496 = smul.addr %s495, 3
          %s497 = scalar_lea.vmem [#allocation9], %s496
          %s499 = ssub.s32 48, 48
          %500 = vsyncadd %s494, %s499
          %s501 = smul.addr %s31, 3
          %s502 = smul.addr %s501, 16
          %s503 = scalar_lea.hbm %s3, %s502
          %s505 = sshll.u32 %s497, 4
          %s506 = int_to_ptr.vmem [resolvable:$true] %s505
          %508 = dma.hbm_to_vmem [thread:$0]  %s503, 48, %s506, %s494
        $region32: #{tpu_custom_call.1} parent=23 // pred_fallthru
          _
        // Predicated region
        $region33: #{tpu_custom_call.1} parent=23 // pred_check
          %p509 = pneg %p154
        $region34: #{tpu_custom_call.1} parent=23 // pred_check_branch
          %511 = sbr.rel (%p509) target = $region36
        $region35: #{tpu_custom_call.1} parent=23 // pred_region
          %s512 = sand.u32 %s23, 1
          %s513 = scalar_lea.sflag [#allocation4], %s512
          %s514 = sand.u32 %s144, 1
          %s515 = smul.addr %s514, 64
          %s516 = scalar_lea.vmem [#allocation10], %s515
          %s518 = ssub.s32 1024, 1024
          %519 = vsyncadd %s513, %s518
          %s520 = smul.addr %s31, 16
          %s521 = smul.addr %s520, 64
          %s522 = scalar_lea.hbm %s4, %s521
          %s523 = sshll.u32 %s516, 4
          %s524 = int_to_ptr.vmem [resolvable:$true] %s523
          %529 = dma.hbm_to_vmem [thread:$0]  %s522, 1024, %s524, %s513, 64, 64, 4
        $region36: #{tpu_custom_call.1} parent=23 // pred_fallthru
          _
        // Predicated region
        $region37: #{tpu_custom_call.1} parent=23 // pred_check
          %p530 = pneg %p180
        $region38: #{tpu_custom_call.1} parent=23 // pred_check_branch
          %532 = sbr.rel (%p530) target = $region40
        $region39: #{tpu_custom_call.1} parent=23 // pred_region
          %s533 = sand.u32 %s23, 1
          %s534 = scalar_lea.sflag [#allocation4], %s533
          %s535 = sand.u32 %s170, 1
          %s536 = scalar_lea.vmem [#allocation11], %s535
          %s538 = ssub.s32 16, 16
          %539 = vsyncadd %s534, %s538
          %s540 = smul.addr %s31, 16
          %s541 = scalar_lea.hbm %s5, %s540
          %s543 = sshll.u32 %s536, 4
          %s544 = int_to_ptr.vmem [resolvable:$true] %s543
          %546 = dma.hbm_to_vmem [thread:$0]  %s541, 16, %s544, %s534
        $region40: #{tpu_custom_call.1} parent=23 // pred_fallthru
          _
        // Predicated region
        $region41: #{tpu_custom_call.1} parent=23 // pred_check
          %p547 = pneg %p206
        $region42: #{tpu_custom_call.1} parent=23 // pred_check_branch
          %549 = sbr.rel (%p547) target = $region44
        $region43: #{tpu_custom_call.1} parent=23 // pred_region
          %s550 = sand.u32 %s23, 1
          %s551 = scalar_lea.sflag [#allocation4], %s550
          %s552 = sand.u32 %s196, 1
          %s553 = scalar_lea.vmem [#allocation12], %s552
          %s555 = ssub.s32 16, 16
          %556 = vsyncadd %s551, %s555
          %s557 = smul.addr %s31, 16
          %s558 = scalar_lea.hbm %s6, %s557
          %s560 = sshll.u32 %s553, 4
          %s561 = int_to_ptr.vmem [resolvable:$true] %s560
          %563 = dma.hbm_to_vmem [thread:$0]  %s558, 16, %s561, %s551
        $region44: #{tpu_custom_call.1} parent=23 // pred_fallthru
          _
        // Predicated region
        $region45: #{tpu_custom_call.1} parent=23 // pred_check
          %p564 = pneg %p232
        $region46: #{tpu_custom_call.1} parent=23 // pred_check_branch
          %566 = sbr.rel (%p564) target = $region48
        $region47: #{tpu_custom_call.1} parent=23 // pred_region
          %s567 = sand.u32 %s23, 1
          %s568 = scalar_lea.sflag [#allocation4], %s567
          %s569 = sand.u32 %s222, 1
          %s570 = scalar_lea.vmem [#allocation13], %s569
          %s572 = ssub.s32 16, 16
          %573 = vsyncadd %s568, %s572
          %s574 = smul.addr %s31, 16
          %s575 = scalar_lea.hbm %s7, %s574
          %s577 = sshll.u32 %s570, 4
          %s578 = int_to_ptr.vmem [resolvable:$true] %s577
          %580 = dma.hbm_to_vmem [thread:$0]  %s575, 16, %s578, %s568
        $region48: #{tpu_custom_call.1} parent=23 // pred_fallthru
          _
        // Predicated region
        $region49: #{tpu_custom_call.1} parent=23 // pred_check
          %p581 = pneg %p258
        $region50: #{tpu_custom_call.1} parent=23 // pred_check_branch
          %583 = sbr.rel (%p581) target = $region52
        $region51: #{tpu_custom_call.1} parent=23 // pred_region
          %s584 = sand.u32 %s23, 1
          %s585 = scalar_lea.sflag [#allocation4], %s584
          %s586 = sand.u32 %s248, 1
          %s587 = smul.addr %s586, 128
          %s588 = scalar_lea.vmem [#allocation14], %s587
          %s590 = ssub.s32 2048, 2048
          %591 = vsyncadd %s585, %s590
          %s592 = smul.addr %s31, 32
          %s593 = smul.addr %s592, 64
          %s594 = scalar_lea.hbm %s8, %s593
          %s595 = sshll.u32 %s588, 4
          %s596 = int_to_ptr.vmem [resolvable:$true] %s595
          %601 = dma.hbm_to_vmem [thread:$0]  %s594, 2048, %s596, %s585, 128, 128, 8
        $region52: #{tpu_custom_call.1} parent=23 // pred_fallthru
          _
        // Predicated region
        $region53: #{tpu_custom_call.1} parent=23 // pred_check
          %p602 = pneg %p284
        $region54: #{tpu_custom_call.1} parent=23 // pred_check_branch
          %604 = sbr.rel (%p602) target = $region56
        $region55: #{tpu_custom_call.1} parent=23 // pred_region
          %s605 = sand.u32 %s23, 1
          %s606 = scalar_lea.sflag [#allocation4], %s605
          %s607 = sand.u32 %s274, 1
          %s608 = smul.addr %s607, 2
          %s609 = scalar_lea.vmem [#allocation15], %s608
          %s611 = ssub.s32 32, 32
          %612 = vsyncadd %s606, %s611
          %s613 = smul.addr %s31, 2
          %s614 = smul.addr %s613, 16
          %s615 = scalar_lea.hbm %s9, %s614
          %s617 = sshll.u32 %s609, 4
          %s618 = int_to_ptr.vmem [resolvable:$true] %s617
          %620 = dma.hbm_to_vmem [thread:$0]  %s615, 32, %s618, %s606
        $region56: #{tpu_custom_call.1} parent=23 // pred_fallthru
          _
        // Predicated region
        $region57: #{tpu_custom_call.1} parent=23 // pred_check
          %p621 = pneg %p310
        $region58: #{tpu_custom_call.1} parent=23 // pred_check_branch
          %623 = sbr.rel (%p621) target = $region60
        $region59: #{tpu_custom_call.1} parent=23 // pred_region
          %s624 = sand.u32 %s23, 1
          %s625 = scalar_lea.sflag [#allocation4], %s624
          %s626 = sand.u32 %s300, 1
          %s627 = smul.addr %s626, 128
          %s628 = scalar_lea.vmem [#allocation16], %s627
          %s630 = ssub.s32 2048, 2048
          %631 = vsyncadd %s625, %s630
          %s632 = smul.addr %s31, 32
          %s633 = smul.addr %s632, 64
          %s634 = scalar_lea.hbm %s10, %s633
          %s635 = sshll.u32 %s628, 4
          %s636 = int_to_ptr.vmem [resolvable:$true] %s635
          %641 = dma.hbm_to_vmem [thread:$0]  %s634, 2048, %s636, %s625, 64, 64, 4
        $region60: #{tpu_custom_call.1} parent=23 // pred_fallthru
          _
        // Predicated region
        $region61: #{tpu_custom_call.1} parent=23 // pred_check
          %p642 = pneg %p336
        $region62: #{tpu_custom_call.1} parent=23 // pred_check_branch
          %644 = sbr.rel (%p642) target = $region64
        $region63: #{tpu_custom_call.1} parent=23 // pred_region
          %s645 = sand.u32 %s23, 1
          %s646 = scalar_lea.sflag [#allocation4], %s645
          %s647 = sand.u32 %s326, 1
          %s648 = scalar_lea.vmem [#allocation17], %s647
          %s650 = ssub.s32 16, 16
          %651 = vsyncadd %s646, %s650
          %s652 = smul.addr %s31, 16
          %s653 = scalar_lea.hbm %s11, %s652
          %s655 = sshll.u32 %s648, 4
          %s656 = int_to_ptr.vmem [resolvable:$true] %s655
          %658 = dma.hbm_to_vmem [thread:$0]  %s653, 16, %s656, %s646
        $region64: #{tpu_custom_call.1} parent=23 // pred_fallthru
          _
        // Predicated region
        $region65: #{tpu_custom_call.1} parent=23 // pred_check
          %p659 = pneg %p362
        $region66: #{tpu_custom_call.1} parent=23 // pred_check_branch
          %661 = sbr.rel (%p659) target = $region68
        $region67: #{tpu_custom_call.1} parent=23 // pred_region
          %s662 = sand.u32 %s23, 1
          %s663 = scalar_lea.sflag [#allocation4], %s662
          %s664 = sand.u32 %s352, 1
          %s665 = scalar_lea.vmem [#allocation18], %s664
          %s667 = ssub.s32 16, 16
          %668 = vsyncadd %s663, %s667
          %s669 = smul.addr %s31, 16
          %s670 = scalar_lea.hbm %s12, %s669
          %s672 = sshll.u32 %s665, 4
          %s673 = int_to_ptr.vmem [resolvable:$true] %s672
          %675 = dma.hbm_to_vmem [thread:$0]  %s670, 16, %s673, %s663
        $region68: #{tpu_custom_call.1} parent=23 // pred_fallthru
          _
        // Predicated region
        $region69: #{tpu_custom_call.1} parent=23 // pred_check
          %p676 = pneg %p388
        $region70: #{tpu_custom_call.1} parent=23 // pred_check_branch
          %678 = sbr.rel (%p676) target = $region72
        $region71: #{tpu_custom_call.1} parent=23 // pred_region
          %s679 = sand.u32 %s23, 1
          %s680 = scalar_lea.sflag [#allocation4], %s679
          %s681 = sand.u32 %s378, 1
          %s682 = scalar_lea.vmem [#allocation19], %s681
          %s684 = ssub.s32 16, 16
          %685 = vsyncadd %s680, %s684
          %s686 = smul.addr %s31, 16
          %s687 = scalar_lea.hbm %s13, %s686
          %s689 = sshll.u32 %s682, 4
          %s690 = int_to_ptr.vmem [resolvable:$true] %s689
          %692 = dma.hbm_to_vmem [thread:$0]  %s687, 16, %s690, %s680
        $region72: #{tpu_custom_call.1} parent=23 // pred_fallthru
          _
      $region24: #{tpu_custom_call.1} parent=5 // pred_fallthru
        _
      %p693 = scmp.le.s32.totalorder 1, %s23
      %p694 = scmp.lt.s32.totalorder %s23, 3
      %p695 = pnand %p693, %p694
      %p696 = pneg %p695
      // Predicated region
      $region73: #{tpu_custom_call.1} parent=5 // pred_check
        _
      $region74: #{tpu_custom_call.1} parent=5 // pred_check_branch
        %698 = sbr.rel (%p695) target = $region76
      $region75: #{tpu_custom_call.1} parent=5 // pred_region
        %s699 = ssub.s32 %s23, 1
        // Predicated region
        $region77: #{tpu_custom_call.1} parent=75 // pred_check
          %p700 = pneg %p61
        $region78: #{tpu_custom_call.1} parent=75 // pred_check_branch
          %702 = sbr.rel (%p700) target = $region80
        $region79: #{tpu_custom_call.1} parent=75 // pred_region
          %703 = dma.done [#allocation4], 2048
        $region80: #{tpu_custom_call.1} parent=75 // pred_fallthru
          _
        // Predicated region
        $region81: #{tpu_custom_call.1} parent=75 // pred_check
          %p704 = pneg %p82
        $region82: #{tpu_custom_call.1} parent=75 // pred_check_branch
          %706 = sbr.rel (%p704) target = $region84
        $region83: #{tpu_custom_call.1} parent=75 // pred_region
          %707 = dma.done [#allocation7], 512
        $region84: #{tpu_custom_call.1} parent=75 // pred_fallthru
          _
        %s708 = sand.u32 %s28, 1
        %s709 = scalar_lea.sflag [#allocation4], %s708
        %s710 = sand.u32 %s95, 1
        %s711 = smul.addr %s710, 192
        %s712 = scalar_lea.vmem [#allocation8], %s711
        // Predicated region
        $region85: #{tpu_custom_call.1} parent=75 // pred_check
          %p713 = pneg %p108
        $region86: #{tpu_custom_call.1} parent=75 // pred_check_branch
          %715 = sbr.rel (%p713) target = $region88
        $region87: #{tpu_custom_call.1} parent=75 // pred_region
          %716 = dma.done %s709, 3072
        $region88: #{tpu_custom_call.1} parent=75 // pred_fallthru
          _
        %s717 = sand.u32 %s28, 1
        %s718 = scalar_lea.sflag [#allocation4], %s717
        %s719 = sand.u32 %s121, 1
        %s720 = smul.addr %s719, 3
        %s721 = scalar_lea.vmem [#allocation9], %s720
        // Predicated region
        $region89: #{tpu_custom_call.1} parent=75 // pred_check
          %p722 = pneg %p134
        $region90: #{tpu_custom_call.1} parent=75 // pred_check_branch
          %724 = sbr.rel (%p722) target = $region92
        $region91: #{tpu_custom_call.1} parent=75 // pred_region
          %725 = dma.done %s718, 48
        $region92: #{tpu_custom_call.1} parent=75 // pred_fallthru
          _
        %s726 = sand.u32 %s28, 1
        %s727 = scalar_lea.sflag [#allocation4], %s726
        %s728 = sand.u32 %s147, 1
        %s729 = smul.addr %s728, 64
        %s730 = scalar_lea.vmem [#allocation10], %s729
        // Predicated region
        $region93: #{tpu_custom_call.1} parent=75 // pred_check
          %p731 = pneg %p160
        $region94: #{tpu_custom_call.1} parent=75 // pred_check_branch
          %733 = sbr.rel (%p731) target = $region96
        $region95: #{tpu_custom_call.1} parent=75 // pred_region
          %734 = dma.done %s727, 1024
        $region96: #{tpu_custom_call.1} parent=75 // pred_fallthru
          _
        %s735 = sand.u32 %s28, 1
        %s736 = scalar_lea.sflag [#allocation4], %s735
        %s737 = sand.u32 %s173, 1
        %s738 = scalar_lea.vmem [#allocation11], %s737
        // Predicated region
        $region97: #{tpu_custom_call.1} parent=75 // pred_check
          %p739 = pneg %p186
        $region98: #{tpu_custom_call.1} parent=75 // pred_check_branch
          %741 = sbr.rel (%p739) target = $region100
        $region99: #{tpu_custom_call.1} parent=75 // pred_region
          %742 = dma.done %s736, 16
        $region100: #{tpu_custom_call.1} parent=75 // pred_fallthru
          _
        %s743 = sand.u32 %s28, 1
        %s744 = scalar_lea.sflag [#allocation4], %s743
        %s745 = sand.u32 %s199, 1
        %s746 = scalar_lea.vmem [#allocation12], %s745
        // Predicated region
        $region101: #{tpu_custom_call.1} parent=75 // pred_check
          %p747 = pneg %p212
        $region102: #{tpu_custom_call.1} parent=75 // pred_check_branch
          %749 = sbr.rel (%p747) target = $region104
        $region103: #{tpu_custom_call.1} parent=75 // pred_region
          %750 = dma.done %s744, 16
        $region104: #{tpu_custom_call.1} parent=75 // pred_fallthru
          _
        %s751 = sand.u32 %s28, 1
        %s752 = scalar_lea.sflag [#allocation4], %s751
        %s753 = sand.u32 %s225, 1
        %s754 = scalar_lea.vmem [#allocation13], %s753
        // Predicated region
        $region105: #{tpu_custom_call.1} parent=75 // pred_check
          %p755 = pneg %p238
        $region106: #{tpu_custom_call.1} parent=75 // pred_check_branch
          %757 = sbr.rel (%p755) target = $region108
        $region107: #{tpu_custom_call.1} parent=75 // pred_region
          %758 = dma.done %s752, 16
        $region108: #{tpu_custom_call.1} parent=75 // pred_fallthru
          _
        %s759 = sand.u32 %s28, 1
        %s760 = scalar_lea.sflag [#allocation4], %s759
        %s761 = sand.u32 %s251, 1
        %s762 = smul.addr %s761, 128
        %s763 = scalar_lea.vmem [#allocation14], %s762
        // Predicated region
        $region109: #{tpu_custom_call.1} parent=75 // pred_check
          %p764 = pneg %p264
        $region110: #{tpu_custom_call.1} parent=75 // pred_check_branch
          %766 = sbr.rel (%p764) target = $region112
        $region111: #{tpu_custom_call.1} parent=75 // pred_region
          %767 = dma.done %s760, 2048
        $region112: #{tpu_custom_call.1} parent=75 // pred_fallthru
          _
        %s768 = sand.u32 %s28, 1
        %s769 = scalar_lea.sflag [#allocation4], %s768
        %s770 = sand.u32 %s277, 1
        %s771 = smul.addr %s770, 2
        %s772 = scalar_lea.vmem [#allocation15], %s771
        // Predicated region
        $region113: #{tpu_custom_call.1} parent=75 // pred_check
          %p773 = pneg %p290
        $region114: #{tpu_custom_call.1} parent=75 // pred_check_branch
          %775 = sbr.rel (%p773) target = $region116
        $region115: #{tpu_custom_call.1} parent=75 // pred_region
          %776 = dma.done %s769, 32
        $region116: #{tpu_custom_call.1} parent=75 // pred_fallthru
          _
        %s777 = sand.u32 %s28, 1
        %s778 = scalar_lea.sflag [#allocation4], %s777
        %s779 = sand.u32 %s303, 1
        %s780 = smul.addr %s779, 128
        %s781 = scalar_lea.vmem [#allocation16], %s780
        // Predicated region
        $region117: #{tpu_custom_call.1} parent=75 // pred_check
          %p782 = pneg %p316
        $region118: #{tpu_custom_call.1} parent=75 // pred_check_branch
          %784 = sbr.rel (%p782) target = $region120
        $region119: #{tpu_custom_call.1} parent=75 // pred_region
          %785 = dma.done %s778, 2048
        $region120: #{tpu_custom_call.1} parent=75 // pred_fallthru
          _
        %s786 = sand.u32 %s28, 1
        %s787 = scalar_lea.sflag [#allocation4], %s786
        %s788 = sand.u32 %s329, 1
        %s789 = scalar_lea.vmem [#allocation17], %s788
        // Predicated region
        $region121: #{tpu_custom_call.1} parent=75 // pred_check
          %p790 = pneg %p342
        $region122: #{tpu_custom_call.1} parent=75 // pred_check_branch
          %792 = sbr.rel (%p790) target = $region124
        $region123: #{tpu_custom_call.1} parent=75 // pred_region
          %793 = dma.done %s787, 16
        $region124: #{tpu_custom_call.1} parent=75 // pred_fallthru
          _
        %s794 = sand.u32 %s28, 1
        %s795 = scalar_lea.sflag [#allocation4], %s794
        %s796 = sand.u32 %s355, 1
        %s797 = scalar_lea.vmem [#allocation18], %s796
        // Predicated region
        $region125: #{tpu_custom_call.1} parent=75 // pred_check
          %p798 = pneg %p368
        $region126: #{tpu_custom_call.1} parent=75 // pred_check_branch
          %800 = sbr.rel (%p798) target = $region128
        $region127: #{tpu_custom_call.1} parent=75 // pred_region
          %801 = dma.done %s795, 16
        $region128: #{tpu_custom_call.1} parent=75 // pred_fallthru
          _
        %s802 = sand.u32 %s28, 1
        %s803 = scalar_lea.sflag [#allocation4], %s802
        %s804 = sand.u32 %s381, 1
        %s805 = scalar_lea.vmem [#allocation19], %s804
        // Predicated region
        $region129: #{tpu_custom_call.1} parent=75 // pred_check
          %p806 = pneg %p394
        $region130: #{tpu_custom_call.1} parent=75 // pred_check_branch
          %808 = sbr.rel (%p806) target = $region132
        $region131: #{tpu_custom_call.1} parent=75 // pred_region
          %809 = dma.done %s803, 16
        $region132: #{tpu_custom_call.1} parent=75 // pred_fallthru
          _
        %p810 = pneg %p61
        %p811 = pneg %p58
        %p812 = pneg %p82
        %p813 = pneg %p79
        %s814 = sand.u32 %s28, 1
        %s815 = scalar_lea.sflag [#allocation4], %s814
        %s816 = sand.u32 %s95, 1
        %s817 = smul.addr %s816, 192
        %s818 = scalar_lea.vmem [#allocation8], %s817
        %p819 = pneg %p108
        %p820 = pneg %p105
        %s821 = sand.u32 %s28, 1
        %s822 = scalar_lea.sflag [#allocation4], %s821
        %s823 = sand.u32 %s121, 1
        %s824 = smul.addr %s823, 3
        %s825 = scalar_lea.vmem [#allocation9], %s824
        %p826 = pneg %p134
        %p827 = pneg %p131
        %s828 = sand.u32 %s28, 1
        %s829 = scalar_lea.sflag [#allocation4], %s828
        %s830 = sand.u32 %s147, 1
        %s831 = smul.addr %s830, 64
        %s832 = scalar_lea.vmem [#allocation10], %s831
        %p833 = pneg %p160
        %p834 = pneg %p157
        %s835 = sand.u32 %s28, 1
        %s836 = scalar_lea.sflag [#allocation4], %s835
        %s837 = sand.u32 %s173, 1
        %s838 = scalar_lea.vmem [#allocation11], %s837
        %p839 = pneg %p186
        %p840 = pneg %p183
        %s841 = sand.u32 %s28, 1
        %s842 = scalar_lea.sflag [#allocation4], %s841
        %s843 = sand.u32 %s199, 1
        %s844 = scalar_lea.vmem [#allocation12], %s843
        %p845 = pneg %p212
        %p846 = pneg %p209
        %s847 = sand.u32 %s28, 1
        %s848 = scalar_lea.sflag [#allocation4], %s847
        %s849 = sand.u32 %s225, 1
        %s850 = scalar_lea.vmem [#allocation13], %s849
        %p851 = pneg %p238
        %p852 = pneg %p235
        %s853 = sand.u32 %s28, 1
        %s854 = scalar_lea.sflag [#allocation4], %s853
        %s855 = sand.u32 %s251, 1
        %s856 = smul.addr %s855, 128
        %s857 = scalar_lea.vmem [#allocation14], %s856
        %p858 = pneg %p264
        %p859 = pneg %p261
        %s860 = sand.u32 %s28, 1
        %s861 = scalar_lea.sflag [#allocation4], %s860
        %s862 = sand.u32 %s277, 1
        %s863 = smul.addr %s862, 2
        %s864 = scalar_lea.vmem [#allocation15], %s863
        %p865 = pneg %p290
        %p866 = pneg %p287
        %s867 = sand.u32 %s28, 1
        %s868 = scalar_lea.sflag [#allocation4], %s867
        %s869 = sand.u32 %s303, 1
        %s870 = smul.addr %s869, 128
        %s871 = scalar_lea.vmem [#allocation16], %s870
        %p872 = pneg %p316
        %p873 = pneg %p313
        %s874 = sand.u32 %s28, 1
        %s875 = scalar_lea.sflag [#allocation4], %s874
        %s876 = sand.u32 %s329, 1
        %s877 = scalar_lea.vmem [#allocation17], %s876
        %p878 = pneg %p342
        %p879 = pneg %p339
        %s880 = sand.u32 %s28, 1
        %s881 = scalar_lea.sflag [#allocation4], %s880
        %s882 = sand.u32 %s355, 1
        %s883 = scalar_lea.vmem [#allocation18], %s882
        %p884 = pneg %p368
        %p885 = pneg %p365
        %s886 = sand.u32 %s28, 1
        %s887 = scalar_lea.sflag [#allocation4], %s886
        %s888 = sand.u32 %s381, 1
        %s889 = scalar_lea.vmem [#allocation19], %s888
        %p890 = pneg %p394
        %p891 = pneg %p391
        %p892 = pneg %p420
        %p893 = pneg %p417
        %s894 = smul.u32 4, %s32
        %s895 = smul.u32 4, %s32
        %p897 = scmp.eq.s32.totalorder %s33, 0
        // Predicated region
        $region133: #{tpu_custom_call.1} parent=75 // pred_check
          %p898 = pneg %p897
        $region134: #{tpu_custom_call.1} parent=75 // pred_check_branch
          %900 = sbr.rel (%p898) target = $region136
        $region135: #{tpu_custom_call.1} parent=75 // pred_region
          %v901 = vld [vmem:[#allocation3] sm:$0xff]
          %v902 = vld [vmem:[#allocation3 + $0x8] sm:$0xff]
          %v903 = vld [vmem:[#allocation3 + $0x10] sm:$0xff]
          %v904 = vld [vmem:[#allocation3 + $0x18] sm:$0xff]
          %v905 = vld [vmem:[#allocation3 + $0x20] sm:$0xff]
          %v906 = vld [vmem:[#allocation3 + $0x28] sm:$0xff]
          %v907 = vld [vmem:[#allocation3 + $0x30] sm:$0xff]
          %v908 = vld [vmem:[#allocation3 + $0x38] sm:$0xff]
          %v909 = vld [vmem:[#allocation3 + $0x40] sm:$0xff]
          %v910 = vld [vmem:[#allocation3 + $0x48] sm:$0xff]
          %v911 = vld [vmem:[#allocation3 + $0x50] sm:$0xff]
          %v912 = vld [vmem:[#allocation3 + $0x58] sm:$0xff]
          %v913 = vld [vmem:[#allocation3 + $0x60] sm:$0xff]
          %v914 = vld [vmem:[#allocation3 + $0x68] sm:$0xff]
          %v915 = vld [vmem:[#allocation3 + $0x70] sm:$0xff]
          %v916 = vld [vmem:[#allocation3 + $0x78] sm:$0xff]
          %v917 = vld [vmem:[#allocation6] sm:$0xff]
          %v918 = vld [vmem:[#allocation6 + $0x8] sm:$0xff]
          %v919 = vld [vmem:[#allocation6 + $0x10] sm:$0xff]
          %v920 = vld [vmem:[#allocation6 + $0x18] sm:$0xff]
          %v921 = vadd.f32 %v901, %v917
          %v922 = vadd.f32 %v902, %v918
          %v923 = vadd.f32 %v903, %v919
          %v924 = vadd.f32 %v904, %v920
          %v925 = vadd.f32 %v905, %v917
          %v926 = vadd.f32 %v906, %v918
          %v927 = vadd.f32 %v907, %v919
          %v928 = vadd.f32 %v908, %v920
          %v929 = vadd.f32 %v909, %v917
          %v930 = vadd.f32 %v910, %v918
          %v931 = vadd.f32 %v911, %v919
          %v932 = vadd.f32 %v912, %v920
          %v933 = vadd.f32 %v913, %v917
          %v934 = vadd.f32 %v914, %v918
          %v935 = vadd.f32 %v915, %v919
          %v936 = vadd.f32 %v916, %v920
          %937 = vst [vmem:[#allocation2] sm:$0xff] %v921
          %938 = vst [vmem:[#allocation2 + $0x8] sm:$0xff] %v922
          %939 = vst [vmem:[#allocation2 + $0x10] sm:$0xff] %v923
          %940 = vst [vmem:[#allocation2 + $0x18] sm:$0xff] %v924
          %941 = vst [vmem:[#allocation2 + $0x20] sm:$0xff] %v925
          %942 = vst [vmem:[#allocation2 + $0x28] sm:$0xff] %v926
          %943 = vst [vmem:[#allocation2 + $0x30] sm:$0xff] %v927
          %944 = vst [vmem:[#allocation2 + $0x38] sm:$0xff] %v928
          %945 = vst [vmem:[#allocation2 + $0x40] sm:$0xff] %v929
          %946 = vst [vmem:[#allocation2 + $0x48] sm:$0xff] %v930
          %947 = vst [vmem:[#allocation2 + $0x50] sm:$0xff] %v931
          %948 = vst [vmem:[#allocation2 + $0x58] sm:$0xff] %v932
          %949 = vst [vmem:[#allocation2 + $0x60] sm:$0xff] %v933
          %950 = vst [vmem:[#allocation2 + $0x68] sm:$0xff] %v934
          %951 = vst [vmem:[#allocation2 + $0x70] sm:$0xff] %v935
          %952 = vst [vmem:[#allocation2 + $0x78] sm:$0xff] %v936
        $region136: #{tpu_custom_call.1} parent=75 // pred_fallthru
          _
        %v953 = vld [vmem:[#allocation2] sm:$0xff]
        %v954 = vld [vmem:[#allocation2 + $0x8] sm:$0xff]
        %v955 = vld [vmem:[#allocation2 + $0x10] sm:$0xff]
        %v956 = vld [vmem:[#allocation2 + $0x18] sm:$0xff]
        %v957 = vld [vmem:[#allocation2 + $0x20] sm:$0xff]
        %v958 = vld [vmem:[#allocation2 + $0x28] sm:$0xff]
        %v959 = vld [vmem:[#allocation2 + $0x30] sm:$0xff]
        %v960 = vld [vmem:[#allocation2 + $0x38] sm:$0xff]
        %v961 = vld [vmem:[#allocation2 + $0x40] sm:$0xff]
        %v962 = vld [vmem:[#allocation2 + $0x48] sm:$0xff]
        %v963 = vld [vmem:[#allocation2 + $0x50] sm:$0xff]
        %v964 = vld [vmem:[#allocation2 + $0x58] sm:$0xff]
        %v965 = vld [vmem:[#allocation2 + $0x60] sm:$0xff]
        %v966 = vld [vmem:[#allocation2 + $0x68] sm:$0xff]
        %v967 = vld [vmem:[#allocation2 + $0x70] sm:$0xff]
        %v968 = vld [vmem:[#allocation2 + $0x78] sm:$0xff]
        %v969 = vpack.c.bf16 %v954, %v953
        %v970 = vpack.c.bf16 %v956, %v955
        %v971 = vpack.c.bf16 %v958, %v957
        %v972 = vpack.c.bf16 %v960, %v959
        %v973 = vpack.c.bf16 %v962, %v961
        %v974 = vpack.c.bf16 %v964, %v963
        %v975 = vpack.c.bf16 %v966, %v965
        %v976 = vpack.c.bf16 %v968, %v967
        %v977 = vld [vmem:[%s712] sm:$0xff]
        %v978 = vld [vmem:[%s712 + $0x8] sm:$0xf]
        %v979 = vld [vmem:[%s712 + $0xc] sm:$0xff]
        %v980 = vld [vmem:[%s712 + $0x14] sm:$0xf]
        %v981 = vld [vmem:[%s712 + $0x18] sm:$0xff]
        %v982 = vld [vmem:[%s712 + $0x20] sm:$0xf]
        %v983 = vld [vmem:[%s712 + $0x24] sm:$0xff]
        %v984 = vld [vmem:[%s712 + $0x2c] sm:$0xf]
        %v985 = vld [vmem:[%s712 + $0x30] sm:$0xff]
        %v986 = vld [vmem:[%s712 + $0x38] sm:$0xf]
        %v987 = vld [vmem:[%s712 + $0x3c] sm:$0xff]
        %v988 = vld [vmem:[%s712 + $0x44] sm:$0xf]
        %v989 = vld [vmem:[%s712 + $0x48] sm:$0xff]
        %v990 = vld [vmem:[%s712 + $0x50] sm:$0xf]
        %v991 = vld [vmem:[%s712 + $0x54] sm:$0xff]
        %v992 = vld [vmem:[%s712 + $0x5c] sm:$0xf]
        %v993 = vld [vmem:[%s712 + $0x60] sm:$0xff]
        %v994 = vld [vmem:[%s712 + $0x68] sm:$0xf]
        %v995 = vld [vmem:[%s712 + $0x6c] sm:$0xff]
        %v996 = vld [vmem:[%s712 + $0x74] sm:$0xf]
        %v997 = vld [vmem:[%s712 + $0x78] sm:$0xff]
        %v998 = vld [vmem:[%s712 + $0x80] sm:$0xf]
        %v999 = vld [vmem:[%s712 + $0x84] sm:$0xff]
        %v1000 = vld [vmem:[%s712 + $0x8c] sm:$0xf]
        %v1001 = vld [vmem:[%s712 + $0x90] sm:$0xff]
        %v1002 = vld [vmem:[%s712 + $0x98] sm:$0xf]
        %v1003 = vld [vmem:[%s712 + $0x9c] sm:$0xff]
        %v1004 = vld [vmem:[%s712 + $0xa4] sm:$0xf]
        %v1005 = vld [vmem:[%s712 + $0xa8] sm:$0xff]
        %v1006 = vld [vmem:[%s712 + $0xb0] sm:$0xf]
        %v1007 = vld [vmem:[%s712 + $0xb4] sm:$0xff]
        %v1008 = vld [vmem:[%s712 + $0xbc] sm:$0xf]
        %v1009 = vld [vmem:[%s721] sm:$0x7]
        %v1011 = vlaneseq
        %v1012 = vshrl.u32 %v1011, 7
        %v1013 = vsub.s32 0, %v1012
        %v1014 = vrot.slane %v1009, %v1013
        %v1015 = vlaneseq
        %v1016 = vshrl.u32 %v1015, 7
        %v1017 = vsub.s32 1, %v1016
        %v1018 = vrot.slane %v1009, %v1017
        %v1019 = vlaneseq
        %v1020 = vshrl.u32 %v1019, 7
        %v1021 = vsub.s32 2, %v1020
        %v1022 = vrot.slane %v1009, %v1021
        %v1058 = vunpack.c.l.b16 %v977
        %v1059 = vunpack.c.h.b16 %v977
        %v1060 = vunpack.c.l.b16 %v978
        %v1061 = vunpack.c.l.b16 %v979
        %v1062 = vunpack.c.h.b16 %v979
        %v1063 = vunpack.c.l.b16 %v980
        %v1064 = vunpack.c.l.b16 %v981
        %v1065 = vunpack.c.h.b16 %v981
        %v1066 = vunpack.c.l.b16 %v982
        %v1067 = vunpack.c.l.b16 %v983
        %v1068 = vunpack.c.h.b16 %v983
        %v1069 = vunpack.c.l.b16 %v984
        %v1070 = vunpack.c.l.b16 %v985
        %v1071 = vunpack.c.h.b16 %v985
        %v1072 = vunpack.c.l.b16 %v986
        %v1073 = vunpack.c.l.b16 %v987
        %v1074 = vunpack.c.h.b16 %v987
        %v1075 = vunpack.c.l.b16 %v988
        %v1076 = vunpack.c.l.b16 %v989
        %v1077 = vunpack.c.h.b16 %v989
        %v1078 = vunpack.c.l.b16 %v990
        %v1079 = vunpack.c.l.b16 %v991
        %v1080 = vunpack.c.h.b16 %v991
        %v1081 = vunpack.c.l.b16 %v992
        %v1082 = vunpack.c.l.b16 %v993
        %v1083 = vunpack.c.h.b16 %v993
        %v1084 = vunpack.c.l.b16 %v994
        %v1085 = vunpack.c.l.b16 %v995
        %v1086 = vunpack.c.h.b16 %v995
        %v1087 = vunpack.c.l.b16 %v996
        %v1088 = vunpack.c.l.b16 %v997
        %v1089 = vunpack.c.h.b16 %v997
        %v1090 = vunpack.c.l.b16 %v998
        %v1091 = vunpack.c.l.b16 %v999
        %v1092 = vunpack.c.h.b16 %v999
        %v1093 = vunpack.c.l.b16 %v1000
        %v1094 = vunpack.c.l.b16 %v1001
        %v1095 = vunpack.c.h.b16 %v1001
        %v1096 = vunpack.c.l.b16 %v1002
        %v1097 = vunpack.c.l.b16 %v1003
        %v1098 = vunpack.c.h.b16 %v1003
        %v1099 = vunpack.c.l.b16 %v1004
        %v1100 = vunpack.c.l.b16 %v1005
        %v1101 = vunpack.c.h.b16 %v1005
        %v1102 = vunpack.c.l.b16 %v1006
        %v1103 = vunpack.c.l.b16 %v1007
        %v1104 = vunpack.c.h.b16 %v1007
        %v1105 = vunpack.c.l.b16 %v1008
        %v1106 = vpack.c.b16 %v1061, %v1058
        %v1107 = vpack.c.b16 %v1062, %v1059
        %v1108 = vpack.c.b16 %v1063, %v1060
        %v1109 = vpack.c.b16 %v1067, %v1064
        %v1110 = vpack.c.b16 %v1068, %v1065
        %v1111 = vpack.c.b16 %v1069, %v1066
        %v1112 = vpack.c.b16 %v1073, %v1070
        %v1113 = vpack.c.b16 %v1074, %v1071
        %v1114 = vpack.c.b16 %v1075, %v1072
        %v1115 = vpack.c.b16 %v1079, %v1076
        %v1116 = vpack.c.b16 %v1080, %v1077
        %v1117 = vpack.c.b16 %v1081, %v1078
        %v1118 = vpack.c.b16 %v1085, %v1082
        %v1119 = vpack.c.b16 %v1086, %v1083
        %v1120 = vpack.c.b16 %v1087, %v1084
        %v1121 = vpack.c.b16 %v1091, %v1088
        %v1122 = vpack.c.b16 %v1092, %v1089
        %v1123 = vpack.c.b16 %v1093, %v1090
        %v1124 = vpack.c.b16 %v1097, %v1094
        %v1125 = vpack.c.b16 %v1098, %v1095
        %v1126 = vpack.c.b16 %v1099, %v1096
        %v1127 = vpack.c.b16 %v1103, %v1100
        %v1128 = vpack.c.b16 %v1104, %v1101
        %v1129 = vpack.c.b16 %v1105, %v1102
        %1154 = vmatprep.subr.bf16.mxu0 %v1107
        %1155 = vmatpush1.bf16.msra.mxu0 %v1106
        %1156 = vmatprep.subr.bf16.mxu0 %v1110
        %1157 = vmatpush1.bf16.msra.mxu0 %v1109
        %1158 = vmatprep.subr.bf16.mxu0 %v1113
        %1159 = vmatpush1.bf16.msra.mxu0 %v1112
        %1160 = vmatprep.subr.bf16.mxu0 %v1116
        %1161 = vmatpush1.bf16.msra.mxu0 %v1115
        %1162 = vmatprep.subr.bf16.mxu0 %v1119
        %1163 = vmatpush1.bf16.msra.mxu0 %v1118
        %1164 = vmatprep.subr.bf16.mxu0 %v1122
        %1165 = vmatpush1.bf16.msra.mxu0 %v1121
        %1166 = vmatprep.subr.bf16.mxu0 %v1125
        %1167 = vmatpush1.bf16.msra.mxu0 %v1124
        %1168 = vmatprep.subr.bf16.mxu0 %v1128
        %1169 = vmatpush1.bf16.msra.mxu0 %v1127
        %1170 = vmatprep.subr.bf16.mxu0 0
        %1171 = vmatpush1.bf16.msra.mxu0 0
        %1172 = vmatprep.subr.bf16.mxu0 0
        %1173 = vmatpush1.bf16.msra.mxu0 0
        %1174 = vmatprep.subr.bf16.mxu0 0
        %1175 = vmatpush1.bf16.msra.mxu0 0
        %1176 = vmatprep.subr.bf16.mxu0 0
        %1177 = vmatpush1.bf16.msra.mxu0 0
        %1178 = vmatprep.subr.bf16.mxu0 0
        %1179 = vmatpush1.bf16.msra.mxu0 0
        %1180 = vmatprep.subr.bf16.mxu0 0
        %1181 = vmatpush1.bf16.msra.mxu0 0
        %1182 = vmatprep.subr.bf16.mxu0 0
        %1183 = vmatpush1.bf16.msra.mxu0 0
        %1184 = vmatprep.subr.bf16.mxu0 0
        %1185 = vmatpush1.bf16.msra.mxu0 0
        %1186 = vmatprep.mubr.bf16.mxu0 0
        %1187 = vmatmul.mubr.bf16.gmra.mrb[0].mxu0 %v969
        %v1188 = vpop.f32.mrb[0].mxu0
        %v1189 = vadd.f32 %v1014, %v1188
        %v1190 = vpop.f32.mrb[0].mxu0
        %v1191 = vadd.f32 %v1018, %v1190
        %v1192 = vpop.f32.mrb[0].mxu0
        %v1193 = vadd.f32 %v1014, %v1192
        %v1194 = vpop.f32.mrb[0].mxu0
        %v1195 = vadd.f32 %v1018, %v1194
        %1196 = vmatprep.mubr.bf16.mxu0 0
        %1197 = vmatmul.mubr.bf16.gmra.mrb[0].mxu0 %v970
        %v1198 = vpop.f32.mrb[0].mxu0
        %v1199 = vadd.f32 %v1014, %v1198
        %v1200 = vpop.f32.mrb[0].mxu0
        %v1201 = vadd.f32 %v1018, %v1200
        %v1202 = vpop.f32.mrb[0].mxu0
        %v1203 = vadd.f32 %v1014, %v1202
        %v1204 = vpop.f32.mrb[0].mxu0
        %v1205 = vadd.f32 %v1018, %v1204
        %1206 = vmatprep.mubr.bf16.mxu0 0
        %1207 = vmatmul.mubr.bf16.gmra.mrb[0].mxu0 %v971
        %v1208 = vpop.f32.mrb[0].mxu0
        %v1209 = vadd.f32 %v1014, %v1208
        %v1210 = vpop.f32.mrb[0].mxu0
        %v1211 = vadd.f32 %v1018, %v1210
        %v1212 = vpop.f32.mrb[0].mxu0
        %v1213 = vadd.f32 %v1014, %v1212
        %v1214 = vpop.f32.mrb[0].mxu0
        %v1215 = vadd.f32 %v1018, %v1214
        %1216 = vmatprep.mubr.bf16.mxu0 0
        %1217 = vmatmul.mubr.bf16.gmra.mrb[0].mxu0 %v972
        %v1218 = vpop.f32.mrb[0].mxu0
        %v1219 = vadd.f32 %v1014, %v1218
        %v1220 = vpop.f32.mrb[0].mxu0
        %v1221 = vadd.f32 %v1018, %v1220
        %v1222 = vpop.f32.mrb[0].mxu0
        %v1223 = vadd.f32 %v1014, %v1222
        %v1224 = vpop.f32.mrb[0].mxu0
        %v1225 = vadd.f32 %v1018, %v1224
        %1226 = vmatprep.mubr.bf16.mxu0 0
        %1227 = vmatmul.mubr.bf16.gmra.mrb[0].mxu0 %v973
        %v1228 = vpop.f32.mrb[0].mxu0
        %v1229 = vadd.f32 %v1014, %v1228
        %v1230 = vpop.f32.mrb[0].mxu0
        %v1231 = vadd.f32 %v1018, %v1230
        %v1232 = vpop.f32.mrb[0].mxu0
        %v1233 = vadd.f32 %v1014, %v1232
        %v1234 = vpop.f32.mrb[0].mxu0
        %v1235 = vadd.f32 %v1018, %v1234
        %1236 = vmatprep.mubr.bf16.mxu0 0
        %1237 = vmatmul.mubr.bf16.gmra.mrb[0].mxu0 %v974
        %v1238 = vpop.f32.mrb[0].mxu0
        %v1239 = vadd.f32 %v1014, %v1238
        %v1240 = vpop.f32.mrb[0].mxu0
        %v1241 = vadd.f32 %v1018, %v1240
        %v1242 = vpop.f32.mrb[0].mxu0
        %v1243 = vadd.f32 %v1014, %v1242
        %v1244 = vpop.f32.mrb[0].mxu0
        %v1245 = vadd.f32 %v1018, %v1244
        %1246 = vmatprep.mubr.bf16.mxu0 0
        %1247 = vmatmul.mubr.bf16.gmra.mrb[0].mxu0 %v975
        %v1248 = vpop.f32.mrb[0].mxu0
        %v1249 = vadd.f32 %v1014, %v1248
        %v1250 = vpop.f32.mrb[0].mxu0
        %v1251 = vadd.f32 %v1018, %v1250
        %v1252 = vpop.f32.mrb[0].mxu0
        %v1253 = vadd.f32 %v1014, %v1252
        %v1254 = vpop.f32.mrb[0].mxu0
        %v1255 = vadd.f32 %v1018, %v1254
        %1256 = vmatprep.mubr.bf16.mxu0 0
        %1257 = vmatmul.mubr.bf16.gmra.mrb[0].mxu0 %v976
        %v1258 = vpop.f32.mrb[0].mxu0
        %v1259 = vadd.f32 %v1014, %v1258
        %v1260 = vpop.f32.mrb[0].mxu0
        %v1261 = vadd.f32 %v1018, %v1260
        %v1262 = vpop.f32.mrb[0].mxu0
        %v1263 = vadd.f32 %v1014, %v1262
        %v1264 = vpop.f32.mrb[0].mxu0
        %v1265 = vadd.f32 %v1018, %v1264
        %1266 = vdwg.mxu0
        %1267 = vmatprep.subr.bf16.mxu0 0
        %1268 = vmatpush1.bf16.msra.mxu0 %v1108
        %1269 = vmatprep.subr.bf16.mxu0 0
        %1270 = vmatpush1.bf16.msra.mxu0 %v1111
        %1271 = vmatprep.subr.bf16.mxu0 0
        %1272 = vmatpush1.bf16.msra.mxu0 %v1114
        %1273 = vmatprep.subr.bf16.mxu0 0
        %1274 = vmatpush1.bf16.msra.mxu0 %v1117
        %1275 = vmatprep.subr.bf16.mxu0 0
        %1276 = vmatpush1.bf16.msra.mxu0 %v1120
        %1277 = vmatprep.subr.bf16.mxu0 0
        %1278 = vmatpush1.bf16.msra.mxu0 %v1123
        %1279 = vmatprep.subr.bf16.mxu0 0
        %1280 = vmatpush1.bf16.msra.mxu0 %v1126
        %1281 = vmatprep.subr.bf16.mxu0 0
        %1282 = vmatpush1.bf16.msra.mxu0 %v1129
        %1283 = vmatprep.subr.bf16.mxu0 0
        %1284 = vmatpush1.bf16.msra.mxu0 0
        %1285 = vmatprep.subr.bf16.mxu0 0
        %1286 = vmatpush1.bf16.msra.mxu0 0
        %1287 = vmatprep.subr.bf16.mxu0 0
        %1288 = vmatpush1.bf16.msra.mxu0 0
        %1289 = vmatprep.subr.bf16.mxu0 0
        %1290 = vmatpush1.bf16.msra.mxu0 0
        %1291 = vmatprep.subr.bf16.mxu0 0
        %1292 = vmatpush1.bf16.msra.mxu0 0
        %1293 = vmatprep.subr.bf16.mxu0 0
        %1294 = vmatpush1.bf16.msra.mxu0 0
        %1295 = vmatprep.subr.bf16.mxu0 0
        %1296 = vmatpush1.bf16.msra.mxu0 0
        %1297 = vmatprep.subr.bf16.mxu0 0
        %1298 = vmatpush1.bf16.msra.mxu0 0
        %1299 = vmatprep.mubr.bf16.mxu0 0
        %1300 = vmatmul.mubr.bf16.gmra.mrb[0].mxu0 %v969
        %v1301 = vpop.f32.mrb[0].mxu0
        %v1302 = vadd.f32 %v1022, %v1301
        %v1303 = vpop.f32.mrb[0].mxu0
        %v1304 = vpop.f32.mrb[0].mxu0
        %v1305 = vadd.f32 %v1022, %v1304
        %v1306 = vpop.f32.mrb[0].mxu0
        %1307 = vmatprep.mubr.bf16.mxu0 0
        %1308 = vmatmul.mubr.bf16.gmra.mrb[0].mxu0 %v970
        %v1309 = vpop.f32.mrb[0].mxu0
        %v1310 = vadd.f32 %v1022, %v1309
        %v1311 = vpop.f32.mrb[0].mxu0
        %v1312 = vpop.f32.mrb[0].mxu0
        %v1313 = vadd.f32 %v1022, %v1312
        %v1314 = vpop.f32.mrb[0].mxu0
        %1315 = vmatprep.mubr.bf16.mxu0 0
        %1316 = vmatmul.mubr.bf16.gmra.mrb[0].mxu0 %v971
        %v1317 = vpop.f32.mrb[0].mxu0
        %v1318 = vadd.f32 %v1022, %v1317
        %v1319 = vpop.f32.mrb[0].mxu0
        %v1320 = vpop.f32.mrb[0].mxu0
        %v1321 = vadd.f32 %v1022, %v1320
        %v1322 = vpop.f32.mrb[0].mxu0
        %1323 = vmatprep.mubr.bf16.mxu0 0
        %1324 = vmatmul.mubr.bf16.gmra.mrb[0].mxu0 %v972
        %v1325 = vpop.f32.mrb[0].mxu0
        %v1326 = vadd.f32 %v1022, %v1325
        %v1327 = vpop.f32.mrb[0].mxu0
        %v1328 = vpop.f32.mrb[0].mxu0
        %v1329 = vadd.f32 %v1022, %v1328
        %v1330 = vpop.f32.mrb[0].mxu0
        %1331 = vmatprep.mubr.bf16.mxu0 0
        %1332 = vmatmul.mubr.bf16.gmra.mrb[0].mxu0 %v973
        %v1333 = vpop.f32.mrb[0].mxu0
        %v1334 = vadd.f32 %v1022, %v1333
        %v1335 = vpop.f32.mrb[0].mxu0
        %v1336 = vpop.f32.mrb[0].mxu0
        %v1337 = vadd.f32 %v1022, %v1336
        %v1338 = vpop.f32.mrb[0].mxu0
        %1339 = vmatprep.mubr.bf16.mxu0 0
        %1340 = vmatmul.mubr.bf16.gmra.mrb[0].mxu0 %v974
        %v1341 = vpop.f32.mrb[0].mxu0
        %v1342 = vadd.f32 %v1022, %v1341
        %v1343 = vpop.f32.mrb[0].mxu0
        %v1344 = vpop.f32.mrb[0].mxu0
        %v1345 = vadd.f32 %v1022, %v1344
        %v1346 = vpop.f32.mrb[0].mxu0
        %1347 = vmatprep.mubr.bf16.mxu0 0
        %1348 = vmatmul.mubr.bf16.gmra.mrb[0].mxu0 %v975
        %v1349 = vpop.f32.mrb[0].mxu0
        %v1350 = vadd.f32 %v1022, %v1349
        %v1351 = vpop.f32.mrb[0].mxu0
        %v1352 = vpop.f32.mrb[0].mxu0
        %v1353 = vadd.f32 %v1022, %v1352
        %v1354 = vpop.f32.mrb[0].mxu0
        %1355 = vmatprep.mubr.bf16.mxu0 0
        %1356 = vmatmul.mubr.bf16.gmra.mrb[0].mxu0 %v976
        %v1357 = vpop.f32.mrb[0].mxu0
        %v1358 = vadd.f32 %v1022, %v1357
        %v1359 = vpop.f32.mrb[0].mxu0
        %v1360 = vpop.f32.mrb[0].mxu0
        %v1361 = vadd.f32 %v1022, %v1360
        %v1362 = vpop.f32.mrb[0].mxu0
        %1363 = vdwg.mxu0
        %v1364 = vpack.c.bf16 %v1193, %v1189
        %v1365 = vpack.c.bf16 %v1195, %v1191
        %v1366 = vpack.c.bf16 %v1305, %v1302
        %v1367 = vpack.c.bf16 %v1203, %v1199
        %v1368 = vpack.c.bf16 %v1205, %v1201
        %v1369 = vpack.c.bf16 %v1313, %v1310
        %v1370 = vpack.c.bf16 %v1213, %v1209
        %v1371 = vpack.c.bf16 %v1215, %v1211
        %v1372 = vpack.c.bf16 %v1321, %v1318
        %v1373 = vpack.c.bf16 %v1223, %v1219
        %v1374 = vpack.c.bf16 %v1225, %v1221
        %v1375 = vpack.c.bf16 %v1329, %v1326
        %v1376 = vpack.c.bf16 %v1233, %v1229
        %v1377 = vpack.c.bf16 %v1235, %v1231
        %v1378 = vpack.c.bf16 %v1337, %v1334
        %v1379 = vpack.c.bf16 %v1243, %v1239
        %v1380 = vpack.c.bf16 %v1245, %v1241
        %v1381 = vpack.c.bf16 %v1345, %v1342
        %v1382 = vpack.c.bf16 %v1253, %v1249
        %v1383 = vpack.c.bf16 %v1255, %v1251
        %v1384 = vpack.c.bf16 %v1353, %v1350
        %v1385 = vpack.c.bf16 %v1263, %v1259
        %v1386 = vpack.c.bf16 %v1265, %v1261
        %v1387 = vpack.c.bf16 %v1361, %v1358
        %1396 = vrot.lane.b32.xlu0 %v1364, 96
        %v1397 = vpop.permute.xlu0 %1396
        %1398 = vrot.lane.b32.xlu0 %v1367, 96
        %v1399 = vpop.permute.xlu0 %1398
        %1400 = vrot.lane.b32.xlu0 %v1370, 96
        %v1401 = vpop.permute.xlu0 %1400
        %1402 = vrot.lane.b32.xlu0 %v1373, 96
        %v1403 = vpop.permute.xlu0 %1402
        %1404 = vrot.lane.b32.xlu0 %v1376, 96
        %v1405 = vpop.permute.xlu0 %1404
        %1406 = vrot.lane.b32.xlu0 %v1379, 96
        %v1407 = vpop.permute.xlu0 %1406
        %1408 = vrot.lane.b32.xlu0 %v1382, 96
        %v1409 = vpop.permute.xlu0 %1408
        %1410 = vrot.lane.b32.xlu0 %v1385, 96
        %v1411 = vpop.permute.xlu0 %1410
        %1412 = vrot.lane.b32.xlu0 %v1364, 64
        %v1413 = vpop.permute.xlu0 %1412
        %1414 = vrot.lane.b32.xlu0 %v1367, 64
        %v1415 = vpop.permute.xlu0 %1414
        %1416 = vrot.lane.b32.xlu0 %v1370, 64
        %v1417 = vpop.permute.xlu0 %1416
        %1418 = vrot.lane.b32.xlu0 %v1373, 64
        %v1419 = vpop.permute.xlu0 %1418
        %1420 = vrot.lane.b32.xlu0 %v1376, 64
        %v1421 = vpop.permute.xlu0 %1420
        %1422 = vrot.lane.b32.xlu0 %v1379, 64
        %v1423 = vpop.permute.xlu0 %1422
        %1424 = vrot.lane.b32.xlu0 %v1382, 64
        %v1425 = vpop.permute.xlu0 %1424
        %1426 = vrot.lane.b32.xlu0 %v1385, 64
        %v1427 = vpop.permute.xlu0 %1426
        %1428 = vrot.lane.b32.xlu0 %v1364, 32
        %v1429 = vpop.permute.xlu0 %1428
        %1430 = vrot.lane.b32.xlu0 %v1367, 32
        %v1431 = vpop.permute.xlu0 %1430
        %1432 = vrot.lane.b32.xlu0 %v1370, 32
        %v1433 = vpop.permute.xlu0 %1432
        %1434 = vrot.lane.b32.xlu0 %v1373, 32
        %v1435 = vpop.permute.xlu0 %1434
        %1436 = vrot.lane.b32.xlu0 %v1376, 32
        %v1437 = vpop.permute.xlu0 %1436
        %1438 = vrot.lane.b32.xlu0 %v1379, 32
        %v1439 = vpop.permute.xlu0 %1438
        %1440 = vrot.lane.b32.xlu0 %v1382, 32
        %v1441 = vpop.permute.xlu0 %1440
        %1442 = vrot.lane.b32.xlu0 %v1385, 32
        %v1443 = vpop.permute.xlu0 %1442
        %1452 = vrot.lane.b32.xlu0 %v1365, 96
        %v1453 = vpop.permute.xlu0 %1452
        %1454 = vrot.lane.b32.xlu0 %v1368, 96
        %v1455 = vpop.permute.xlu0 %1454
        %1456 = vrot.lane.b32.xlu0 %v1371, 96
        %v1457 = vpop.permute.xlu0 %1456
        %1458 = vrot.lane.b32.xlu0 %v1374, 96
        %v1459 = vpop.permute.xlu0 %1458
        %1460 = vrot.lane.b32.xlu0 %v1377, 96
        %v1461 = vpop.permute.xlu0 %1460
        %1462 = vrot.lane.b32.xlu0 %v1380, 96
        %v1463 = vpop.permute.xlu0 %1462
        %1464 = vrot.lane.b32.xlu0 %v1383, 96
        %v1465 = vpop.permute.xlu0 %1464
        %1466 = vrot.lane.b32.xlu0 %v1386, 96
        %v1467 = vpop.permute.xlu0 %1466
        %1468 = vrot.lane.b32.xlu0 %v1365, 64
        %v1469 = vpop.permute.xlu0 %1468
        %1470 = vrot.lane.b32.xlu0 %v1368, 64
        %v1471 = vpop.permute.xlu0 %1470
        %1472 = vrot.lane.b32.xlu0 %v1371, 64
        %v1473 = vpop.permute.xlu0 %1472
        %1474 = vrot.lane.b32.xlu0 %v1374, 64
        %v1475 = vpop.permute.xlu0 %1474
        %1476 = vrot.lane.b32.xlu0 %v1377, 64
        %v1477 = vpop.permute.xlu0 %1476
        %1478 = vrot.lane.b32.xlu0 %v1380, 64
        %v1479 = vpop.permute.xlu0 %1478
        %1480 = vrot.lane.b32.xlu0 %v1383, 64
        %v1481 = vpop.permute.xlu0 %1480
        %1482 = vrot.lane.b32.xlu0 %v1386, 64
        %v1483 = vpop.permute.xlu0 %1482
        %1484 = vrot.lane.b32.xlu0 %v1365, 32
        %v1485 = vpop.permute.xlu0 %1484
        %1486 = vrot.lane.b32.xlu0 %v1368, 32
        %v1487 = vpop.permute.xlu0 %1486
        %1488 = vrot.lane.b32.xlu0 %v1371, 32
        %v1489 = vpop.permute.xlu0 %1488
        %1490 = vrot.lane.b32.xlu0 %v1374, 32
        %v1491 = vpop.permute.xlu0 %1490
        %1492 = vrot.lane.b32.xlu0 %v1377, 32
        %v1493 = vpop.permute.xlu0 %1492
        %1494 = vrot.lane.b32.xlu0 %v1380, 32
        %v1495 = vpop.permute.xlu0 %1494
        %1496 = vrot.lane.b32.xlu0 %v1383, 32
        %v1497 = vpop.permute.xlu0 %1496
        %1498 = vrot.lane.b32.xlu0 %v1386, 32
        %v1499 = vpop.permute.xlu0 %1498
        %1508 = vrot.lane.b32.xlu0 %v1366, 96
        %v1509 = vpop.permute.xlu0 %1508
        %1510 = vrot.lane.b32.xlu0 %v1369, 96
        %v1511 = vpop.permute.xlu0 %1510
        %1512 = vrot.lane.b32.xlu0 %v1372, 96
        %v1513 = vpop.permute.xlu0 %1512
        %1514 = vrot.lane.b32.xlu0 %v1375, 96
        %v1515 = vpop.permute.xlu0 %1514
        %1516 = vrot.lane.b32.xlu0 %v1378, 96
        %v1517 = vpop.permute.xlu0 %1516
        %1518 = vrot.lane.b32.xlu0 %v1381, 96
        %v1519 = vpop.permute.xlu0 %1518
        %1520 = vrot.lane.b32.xlu0 %v1384, 96
        %v1521 = vpop.permute.xlu0 %1520
        %1522 = vrot.lane.b32.xlu0 %v1387, 96
        %v1523 = vpop.permute.xlu0 %1522
        %1532 = vrot.lane.b32.xlu0 %v1366, 64
        %v1533 = vpop.permute.xlu0 %1532
        %1534 = vrot.lane.b32.xlu0 %v1369, 64
        %v1535 = vpop.permute.xlu0 %1534
        %1536 = vrot.lane.b32.xlu0 %v1372, 64
        %v1537 = vpop.permute.xlu0 %1536
        %1538 = vrot.lane.b32.xlu0 %v1375, 64
        %v1539 = vpop.permute.xlu0 %1538
        %1540 = vrot.lane.b32.xlu0 %v1378, 64
        %v1541 = vpop.permute.xlu0 %1540
        %1542 = vrot.lane.b32.xlu0 %v1381, 64
        %v1543 = vpop.permute.xlu0 %1542
        %1544 = vrot.lane.b32.xlu0 %v1384, 64
        %v1545 = vpop.permute.xlu0 %1544
        %1546 = vrot.lane.b32.xlu0 %v1387, 64
        %v1547 = vpop.permute.xlu0 %1546
        %1556 = vrot.lane.b32.xlu0 %v1366, 32
        %v1557 = vpop.permute.xlu0 %1556
        %1558 = vrot.lane.b32.xlu0 %v1369, 32
        %v1559 = vpop.permute.xlu0 %1558
        %1560 = vrot.lane.b32.xlu0 %v1372, 32
        %v1561 = vpop.permute.xlu0 %1560
        %1562 = vrot.lane.b32.xlu0 %v1375, 32
        %v1563 = vpop.permute.xlu0 %1562
        %1564 = vrot.lane.b32.xlu0 %v1378, 32
        %v1565 = vpop.permute.xlu0 %1564
        %1566 = vrot.lane.b32.xlu0 %v1381, 32
        %v1567 = vpop.permute.xlu0 %1566
        %1568 = vrot.lane.b32.xlu0 %v1384, 32
        %v1569 = vpop.permute.xlu0 %1568
        %1570 = vrot.lane.b32.xlu0 %v1387, 32
        %v1571 = vpop.permute.xlu0 %1570
        %vm1580 = vcmask 261120
        %v1582 = vsel %vm1580, %v1364, 0
        %v1585 = vsel %vm1580, %v1367, 0
        %v1588 = vsel %vm1580, %v1365, 0
        %v1591 = vsel %vm1580, %v1368, 0
        %1593 = vmatprep.subr.bf16.mxu0 0
        %1594 = vmatpush1.bf16.xpose.msra.mxu0 %v1588
        %1595 = vmatprep.subr.bf16.mxu0 0
        %1596 = vmatpush1.bf16.xpose.msra.mxu0 %v1591
        %1597 = vmatprep.subr.bf16.mxu0 0
        %1598 = vmatpush1.bf16.xpose.msra.mxu0 0
        %1599 = vmatprep.subr.bf16.mxu0 0
        %1600 = vmatpush1.bf16.xpose.msra.mxu0 0
        %1601 = vmatprep.subr.bf16.mxu0 0
        %1602 = vmatpush1.bf16.xpose.msra.mxu0 0
        %1603 = vmatprep.subr.bf16.mxu0 0
        %1604 = vmatpush1.bf16.xpose.msra.mxu0 0
        %1605 = vmatprep.subr.bf16.mxu0 0
        %1606 = vmatpush1.bf16.xpose.msra.mxu0 0
        %1607 = vmatprep.subr.bf16.mxu0 0
        %1608 = vmatpush1.bf16.xpose.msra.mxu0 0
        %1609 = vmatprep.subr.bf16.mxu0 0
        %1610 = vmatpush1.bf16.xpose.msra.mxu0 0
        %1611 = vmatprep.subr.bf16.mxu0 0
        %1612 = vmatpush1.bf16.xpose.msra.mxu0 0
        %1613 = vmatprep.subr.bf16.mxu0 0
        %1614 = vmatpush1.bf16.xpose.msra.mxu0 0
        %1615 = vmatprep.subr.bf16.mxu0 0
        %1616 = vmatpush1.bf16.xpose.msra.mxu0 0
        %1617 = vmatprep.subr.bf16.mxu0 0
        %1618 = vmatpush1.bf16.xpose.msra.mxu0 0
        %1619 = vmatprep.subr.bf16.mxu0 0
        %1620 = vmatpush1.bf16.xpose.msra.mxu0 0
        %1621 = vmatprep.subr.bf16.mxu0 0
        %1622 = vmatpush1.bf16.xpose.msra.mxu0 0
        %1623 = vmatprep.subr.bf16.mxu0 0
        %1624 = vmatpush1.bf16.xpose.msra.mxu0 0
        %1625 = vmatprep.mubr.bf16.mxu0 0
        %1626 = vmatmul.mubr.bf16.gmra.mrb[0].mxu0 %v1582
        %v1627 = vpop.f32.mrb[0].mxu0
        %v1628 = vadd.f32 0.0, %v1627
        %v1629 = vpop.f32.mrb[0].mxu0
        %v1630 = vpop.f32.mrb[0].mxu0
        %v1631 = vadd.f32 0.0, %v1630
        %v1632 = vpop.f32.mrb[0].mxu0
        %1633 = vmatprep.mubr.bf16.mxu0 0
        %1634 = vmatmul.mubr.bf16.gmra.mrb[0].mxu0 %v1585
        %v1635 = vpop.f32.mrb[0].mxu0
        %v1636 = vadd.f32 0.0, %v1635
        %v1637 = vpop.f32.mrb[0].mxu0
        %v1638 = vpop.f32.mrb[0].mxu0
        %v1639 = vadd.f32 0.0, %v1638
        %v1640 = vpop.f32.mrb[0].mxu0
        %1641 = vdwg.mxu0
        %v1643 = vsel %vm1580, %v1370, 0
        %v1646 = vsel %vm1580, %v1373, 0
        %v1649 = vsel %vm1580, %v1371, 0
        %v1652 = vsel %vm1580, %v1374, 0
        %1654 = vmatprep.subr.bf16.mxu0 0
        %1655 = vmatpush1.bf16.xpose.msra.mxu0 %v1649
        %1656 = vmatprep.subr.bf16.mxu0 0
        %1657 = vmatpush1.bf16.xpose.msra.mxu0 %v1652
        %1658 = vmatprep.subr.bf16.mxu0 0
        %1659 = vmatpush1.bf16.xpose.msra.mxu0 0
        %1660 = vmatprep.subr.bf16.mxu0 0
        %1661 = vmatpush1.bf16.xpose.msra.mxu0 0
        %1662 = vmatprep.subr.bf16.mxu0 0
        %1663 = vmatpush1.bf16.xpose.msra.mxu0 0
        %1664 = vmatprep.subr.bf16.mxu0 0
        %1665 = vmatpush1.bf16.xpose.msra.mxu0 0
        %1666 = vmatprep.subr.bf16.mxu0 0
        %1667 = vmatpush1.bf16.xpose.msra.mxu0 0
        %1668 = vmatprep.subr.bf16.mxu0 0
        %1669 = vmatpush1.bf16.xpose.msra.mxu0 0
        %1670 = vmatprep.subr.bf16.mxu0 0
        %1671 = vmatpush1.bf16.xpose.msra.mxu0 0
        %1672 = vmatprep.subr.bf16.mxu0 0
        %1673 = vmatpush1.bf16.xpose.msra.mxu0 0
        %1674 = vmatprep.subr.bf16.mxu0 0
        %1675 = vmatpush1.bf16.xpose.msra.mxu0 0
        %1676 = vmatprep.subr.bf16.mxu0 0
        %1677 = vmatpush1.bf16.xpose.msra.mxu0 0
        %1678 = vmatprep.subr.bf16.mxu0 0
        %1679 = vmatpush1.bf16.xpose.msra.mxu0 0
        %1680 = vmatprep.subr.bf16.mxu0 0
        %1681 = vmatpush1.bf16.xpose.msra.mxu0 0
        %1682 = vmatprep.subr.bf16.mxu0 0
        %1683 = vmatpush1.bf16.xpose.msra.mxu0 0
        %1684 = vmatprep.subr.bf16.mxu0 0
        %1685 = vmatpush1.bf16.xpose.msra.mxu0 0
        %1686 = vmatprep.mubr.bf16.mxu0 0
        %1687 = vmatmul.mubr.bf16.gmra.mrb[0].mxu0 %v1643
        %v1688 = vpop.f32.mrb[0].mxu0
        %v1689 = vadd.f32 0.0, %v1688
        %v1690 = vpop.f32.mrb[0].mxu0
        %v1691 = vpop.f32.mrb[0].mxu0
        %v1692 = vadd.f32 0.0, %v1691
        %v1693 = vpop.f32.mrb[0].mxu0
        %1694 = vmatprep.mubr.bf16.mxu0 0
        %1695 = vmatmul.mubr.bf16.gmra.mrb[0].mxu0 %v1646
        %v1696 = vpop.f32.mrb[0].mxu0
        %v1697 = vadd.f32 0.0, %v1696
        %v1698 = vpop.f32.mrb[0].mxu0
        %v1699 = vpop.f32.mrb[0].mxu0
        %v1700 = vadd.f32 0.0, %v1699
        %v1701 = vpop.f32.mrb[0].mxu0
        %1702 = vdwg.mxu0
        %v1704 = vsel %vm1580, %v1376, 0
        %v1707 = vsel %vm1580, %v1379, 0
        %v1710 = vsel %vm1580, %v1377, 0
        %v1713 = vsel %vm1580, %v1380, 0
        %1715 = vmatprep.subr.bf16.mxu0 0
        %1716 = vmatpush1.bf16.xpose.msra.mxu0 %v1710
        %1717 = vmatprep.subr.bf16.mxu0 0
        %1718 = vmatpush1.bf16.xpose.msra.mxu0 %v1713
        %1719 = vmatprep.subr.bf16.mxu0 0
        %1720 = vmatpush1.bf16.xpose.msra.mxu0 0
        %1721 = vmatprep.subr.bf16.mxu0 0
        %1722 = vmatpush1.bf16.xpose.msra.mxu0 0
        %1723 = vmatprep.subr.bf16.mxu0 0
        %1724 = vmatpush1.bf16.xpose.msra.mxu0 0
        %1725 = vmatprep.subr.bf16.mxu0 0
        %1726 = vmatpush1.bf16.xpose.msra.mxu0 0
        %1727 = vmatprep.subr.bf16.mxu0 0
        %1728 = vmatpush1.bf16.xpose.msra.mxu0 0
        %1729 = vmatprep.subr.bf16.mxu0 0
        %1730 = vmatpush1.bf16.xpose.msra.mxu0 0
        %1731 = vmatprep.subr.bf16.mxu0 0
        %1732 = vmatpush1.bf16.xpose.msra.mxu0 0
        %1733 = vmatprep.subr.bf16.mxu0 0
        %1734 = vmatpush1.bf16.xpose.msra.mxu0 0
        %1735 = vmatprep.subr.bf16.mxu0 0
        %1736 = vmatpush1.bf16.xpose.msra.mxu0 0
        %1737 = vmatprep.subr.bf16.mxu0 0
        %1738 = vmatpush1.bf16.xpose.msra.mxu0 0
        %1739 = vmatprep.subr.bf16.mxu0 0
        %1740 = vmatpush1.bf16.xpose.msra.mxu0 0
        %1741 = vmatprep.subr.bf16.mxu0 0
        %1742 = vmatpush1.bf16.xpose.msra.mxu0 0
        %1743 = vmatprep.subr.bf16.mxu0 0
        %1744 = vmatpush1.bf16.xpose.msra.mxu0 0
        %1745 = vmatprep.subr.bf16.mxu0 0
        %1746 = vmatpush1.bf16.xpose.msra.mxu0 0
        %1747 = vmatprep.mubr.bf16.mxu0 0
        %1748 = vmatmul.mubr.bf16.gmra.mrb[0].mxu0 %v1704
        %v1749 = vpop.f32.mrb[0].mxu0
        %v1750 = vadd.f32 0.0, %v1749
        %v1751 = vpop.f32.mrb[0].mxu0
        %v1752 = vpop.f32.mrb[0].mxu0
        %v1753 = vadd.f32 0.0, %v1752
        %v1754 = vpop.f32.mrb[0].mxu0
        %1755 = vmatprep.mubr.bf16.mxu0 0
        %1756 = vmatmul.mubr.bf16.gmra.mrb[0].mxu0 %v1707
        %v1757 = vpop.f32.mrb[0].mxu0
        %v1758 = vadd.f32 0.0, %v1757
        %v1759 = vpop.f32.mrb[0].mxu0
        %v1760 = vpop.f32.mrb[0].mxu0
        %v1761 = vadd.f32 0.0, %v1760
        %v1762 = vpop.f32.mrb[0].mxu0
        %1763 = vdwg.mxu0
        %v1765 = vsel %vm1580, %v1382, 0
        %v1768 = vsel %vm1580, %v1385, 0
        %v1771 = vsel %vm1580, %v1383, 0
        %v1774 = vsel %vm1580, %v1386, 0
        %1776 = vmatprep.subr.bf16.mxu0 0
        %1777 = vmatpush1.bf16.xpose.msra.mxu0 %v1771
        %1778 = vmatprep.subr.bf16.mxu0 0
        %1779 = vmatpush1.bf16.xpose.msra.mxu0 %v1774
        %1780 = vmatprep.subr.bf16.mxu0 0
        %1781 = vmatpush1.bf16.xpose.msra.mxu0 0
        %1782 = vmatprep.subr.bf16.mxu0 0
        %1783 = vmatpush1.bf16.xpose.msra.mxu0 0
        %1784 = vmatprep.subr.bf16.mxu0 0
        %1785 = vmatpush1.bf16.xpose.msra.mxu0 0
        %1786 = vmatprep.subr.bf16.mxu0 0
        %1787 = vmatpush1.bf16.xpose.msra.mxu0 0
        %1788 = vmatprep.subr.bf16.mxu0 0
        %1789 = vmatpush1.bf16.xpose.msra.mxu0 0
        %1790 = vmatprep.subr.bf16.mxu0 0
        %1791 = vmatpush1.bf16.xpose.msra.mxu0 0
        %1792 = vmatprep.subr.bf16.mxu0 0
        %1793 = vmatpush1.bf16.xpose.msra.mxu0 0
        %1794 = vmatprep.subr.bf16.mxu0 0
        %1795 = vmatpush1.bf16.xpose.msra.mxu0 0
        %1796 = vmatprep.subr.bf16.mxu0 0
        %1797 = vmatpush1.bf16.xpose.msra.mxu0 0
        %1798 = vmatprep.subr.bf16.mxu0 0
        %1799 = vmatpush1.bf16.xpose.msra.mxu0 0
        %1800 = vmatprep.subr.bf16.mxu0 0
        %1801 = vmatpush1.bf16.xpose.msra.mxu0 0
        %1802 = vmatprep.subr.bf16.mxu0 0
        %1803 = vmatpush1.bf16.xpose.msra.mxu0 0
        %1804 = vmatprep.subr.bf16.mxu0 0
        %1805 = vmatpush1.bf16.xpose.msra.mxu0 0
        %1806 = vmatprep.subr.bf16.mxu0 0
        %1807 = vmatpush1.bf16.xpose.msra.mxu0 0
        %1808 = vmatprep.mubr.bf16.mxu0 0
        %1809 = vmatmul.mubr.bf16.gmra.mrb[0].mxu0 %v1765
        %v1810 = vpop.f32.mrb[0].mxu0
        %v1811 = vadd.f32 0.0, %v1810
        %v1812 = vpop.f32.mrb[0].mxu0
        %v1813 = vpop.f32.mrb[0].mxu0
        %v1814 = vadd.f32 0.0, %v1813
        %v1815 = vpop.f32.mrb[0].mxu0
        %1816 = vmatprep.mubr.bf16.mxu0 0
        %1817 = vmatmul.mubr.bf16.gmra.mrb[0].mxu0 %v1768
        %v1818 = vpop.f32.mrb[0].mxu0
        %v1819 = vadd.f32 0.0, %v1818
        %v1820 = vpop.f32.mrb[0].mxu0
        %v1821 = vpop.f32.mrb[0].mxu0
        %v1822 = vadd.f32 0.0, %v1821
        %v1823 = vpop.f32.mrb[0].mxu0
        %1824 = vdwg.mxu0
        %v1826 = vsel %vm1580, %v1397, 0
        %v1829 = vsel %vm1580, %v1399, 0
        %v1832 = vsel %vm1580, %v1453, 0
        %v1835 = vsel %vm1580, %v1455, 0
        %1837 = vmatprep.subr.bf16.mxu0 0
        %1838 = vmatpush1.bf16.xpose.msra.mxu0 %v1832
        %1839 = vmatprep.subr.bf16.mxu0 0
        %1840 = vmatpush1.bf16.xpose.msra.mxu0 %v1835
        %1841 = vmatprep.subr.bf16.mxu0 0
        %1842 = vmatpush1.bf16.xpose.msra.mxu0 0
        %1843 = vmatprep.subr.bf16.mxu0 0
        %1844 = vmatpush1.bf16.xpose.msra.mxu0 0
        %1845 = vmatprep.subr.bf16.mxu0 0
        %1846 = vmatpush1.bf16.xpose.msra.mxu0 0
        %1847 = vmatprep.subr.bf16.mxu0 0
        %1848 = vmatpush1.bf16.xpose.msra.mxu0 0
        %1849 = vmatprep.subr.bf16.mxu0 0
        %1850 = vmatpush1.bf16.xpose.msra.mxu0 0
        %1851 = vmatprep.subr.bf16.mxu0 0
        %1852 = vmatpush1.bf16.xpose.msra.mxu0 0
        %1853 = vmatprep.subr.bf16.mxu0 0
        %1854 = vmatpush1.bf16.xpose.msra.mxu0 0
        %1855 = vmatprep.subr.bf16.mxu0 0
        %1856 = vmatpush1.bf16.xpose.msra.mxu0 0
        %1857 = vmatprep.subr.bf16.mxu0 0
        %1858 = vmatpush1.bf16.xpose.msra.mxu0 0
        %1859 = vmatprep.subr.bf16.mxu0 0
        %1860 = vmatpush1.bf16.xpose.msra.mxu0 0
        %1861 = vmatprep.subr.bf16.mxu0 0
        %1862 = vmatpush1.bf16.xpose.msra.mxu0 0
        %1863 = vmatprep.subr.bf16.mxu0 0
        %1864 = vmatpush1.bf16.xpose.msra.mxu0 0
        %1865 = vmatprep.subr.bf16.mxu0 0
        %1866 = vmatpush1.bf16.xpose.msra.mxu0 0
        %1867 = vmatprep.subr.bf16.mxu0 0
        %1868 = vmatpush1.bf16.xpose.msra.mxu0 0
        %1869 = vmatprep.mubr.bf16.mxu0 0
        %1870 = vmatmul.mubr.bf16.gmra.mrb[0].mxu0 %v1826
        %v1871 = vpop.f32.mrb[0].mxu0
        %v1872 = vadd.f32 0.0, %v1871
        %v1873 = vpop.f32.mrb[0].mxu0
        %v1874 = vpop.f32.mrb[0].mxu0
        %v1875 = vadd.f32 0.0, %v1874
        %v1876 = vpop.f32.mrb[0].mxu0
        %1877 = vmatprep.mubr.bf16.mxu0 0
        %1878 = vmatmul.mubr.bf16.gmra.mrb[0].mxu0 %v1829
        %v1879 = vpop.f32.mrb[0].mxu0
        %v1880 = vadd.f32 0.0, %v1879
        %v1881 = vpop.f32.mrb[0].mxu0
        %v1882 = vpop.f32.mrb[0].mxu0
        %v1883 = vadd.f32 0.0, %v1882
        %v1884 = vpop.f32.mrb[0].mxu0
        %1885 = vdwg.mxu0
        %v1887 = vsel %vm1580, %v1401, 0
        %v1890 = vsel %vm1580, %v1403, 0
        %v1893 = vsel %vm1580, %v1457, 0
        %v1896 = vsel %vm1580, %v1459, 0
        %1898 = vmatprep.subr.bf16.mxu0 0
        %1899 = vmatpush1.bf16.xpose.msra.mxu0 %v1893
        %1900 = vmatprep.subr.bf16.mxu0 0
        %1901 = vmatpush1.bf16.xpose.msra.mxu0 %v1896
        %1902 = vmatprep.subr.bf16.mxu0 0
        %1903 = vmatpush1.bf16.xpose.msra.mxu0 0
        %1904 = vmatprep.subr.bf16.mxu0 0
        %1905 = vmatpush1.bf16.xpose.msra.mxu0 0
        %1906 = vmatprep.subr.bf16.mxu0 0
        %1907 = vmatpush1.bf16.xpose.msra.mxu0 0
        %1908 = vmatprep.subr.bf16.mxu0 0
        %1909 = vmatpush1.bf16.xpose.msra.mxu0 0
        %1910 = vmatprep.subr.bf16.mxu0 0
        %1911 = vmatpush1.bf16.xpose.msra.mxu0 0
        %1912 = vmatprep.subr.bf16.mxu0 0
        %1913 = vmatpush1.bf16.xpose.msra.mxu0 0
        %1914 = vmatprep.subr.bf16.mxu0 0
        %1915 = vmatpush1.bf16.xpose.msra.mxu0 0
        %1916 = vmatprep.subr.bf16.mxu0 0
        %1917 = vmatpush1.bf16.xpose.msra.mxu0 0
        %1918 = vmatprep.subr.bf16.mxu0 0
        %1919 = vmatpush1.bf16.xpose.msra.mxu0 0
        %1920 = vmatprep.subr.bf16.mxu0 0
        %1921 = vmatpush1.bf16.xpose.msra.mxu0 0
        %1922 = vmatprep.subr.bf16.mxu0 0
        %1923 = vmatpush1.bf16.xpose.msra.mxu0 0
        %1924 = vmatprep.subr.bf16.mxu0 0
        %1925 = vmatpush1.bf16.xpose.msra.mxu0 0
        %1926 = vmatprep.subr.bf16.mxu0 0
        %1927 = vmatpush1.bf16.xpose.msra.mxu0 0
        %1928 = vmatprep.subr.bf16.mxu0 0
        %1929 = vmatpush1.bf16.xpose.msra.mxu0 0
        %1930 = vmatprep.mubr.bf16.mxu0 0
        %1931 = vmatmul.mubr.bf16.gmra.mrb[0].mxu0 %v1887
        %v1932 = vpop.f32.mrb[0].mxu0
        %v1933 = vadd.f32 0.0, %v1932
        %v1934 = vpop.f32.mrb[0].mxu0
        %v1935 = vpop.f32.mrb[0].mxu0
        %v1936 = vadd.f32 0.0, %v1935
        %v1937 = vpop.f32.mrb[0].mxu0
        %1938 = vmatprep.mubr.bf16.mxu0 0
        %1939 = vmatmul.mubr.bf16.gmra.mrb[0].mxu0 %v1890
        %v1940 = vpop.f32.mrb[0].mxu0
        %v1941 = vadd.f32 0.0, %v1940
        %v1942 = vpop.f32.mrb[0].mxu0
        %v1943 = vpop.f32.mrb[0].mxu0
        %v1944 = vadd.f32 0.0, %v1943
        %v1945 = vpop.f32.mrb[0].mxu0
        %1946 = vdwg.mxu0
        %v1948 = vsel %vm1580, %v1405, 0
        %v1951 = vsel %vm1580, %v1407, 0
        %v1954 = vsel %vm1580, %v1461, 0
        %v1957 = vsel %vm1580, %v1463, 0
        %1959 = vmatprep.subr.bf16.mxu0 0
        %1960 = vmatpush1.bf16.xpose.msra.mxu0 %v1954
        %1961 = vmatprep.subr.bf16.mxu0 0
        %1962 = vmatpush1.bf16.xpose.msra.mxu0 %v1957
        %1963 = vmatprep.subr.bf16.mxu0 0
        %1964 = vmatpush1.bf16.xpose.msra.mxu0 0
        %1965 = vmatprep.subr.bf16.mxu0 0
        %1966 = vmatpush1.bf16.xpose.msra.mxu0 0
        %1967 = vmatprep.subr.bf16.mxu0 0
        %1968 = vmatpush1.bf16.xpose.msra.mxu0 0
        %1969 = vmatprep.subr.bf16.mxu0 0
        %1970 = vmatpush1.bf16.xpose.msra.mxu0 0
        %1971 = vmatprep.subr.bf16.mxu0 0
        %1972 = vmatpush1.bf16.xpose.msra.mxu0 0
        %1973 = vmatprep.subr.bf16.mxu0 0
        %1974 = vmatpush1.bf16.xpose.msra.mxu0 0
        %1975 = vmatprep.subr.bf16.mxu0 0
        %1976 = vmatpush1.bf16.xpose.msra.mxu0 0
        %1977 = vmatprep.subr.bf16.mxu0 0
        %1978 = vmatpush1.bf16.xpose.msra.mxu0 0
        %1979 = vmatprep.subr.bf16.mxu0 0
        %1980 = vmatpush1.bf16.xpose.msra.mxu0 0
        %1981 = vmatprep.subr.bf16.mxu0 0
        %1982 = vmatpush1.bf16.xpose.msra.mxu0 0
        %1983 = vmatprep.subr.bf16.mxu0 0
        %1984 = vmatpush1.bf16.xpose.msra.mxu0 0
        %1985 = vmatprep.subr.bf16.mxu0 0
        %1986 = vmatpush1.bf16.xpose.msra.mxu0 0
        %1987 = vmatprep.subr.bf16.mxu0 0
        %1988 = vmatpush1.bf16.xpose.msra.mxu0 0
        %1989 = vmatprep.subr.bf16.mxu0 0
        %1990 = vmatpush1.bf16.xpose.msra.mxu0 0
        %1991 = vmatprep.mubr.bf16.mxu0 0
        %1992 = vmatmul.mubr.bf16.gmra.mrb[0].mxu0 %v1948
        %v1993 = vpop.f32.mrb[0].mxu0
        %v1994 = vadd.f32 0.0, %v1993
        %v1995 = vpop.f32.mrb[0].mxu0
        %v1996 = vpop.f32.mrb[0].mxu0
        %v1997 = vadd.f32 0.0, %v1996
        %v1998 = vpop.f32.mrb[0].mxu0
        %1999 = vmatprep.mubr.bf16.mxu0 0
        %2000 = vmatmul.mubr.bf16.gmra.mrb[0].mxu0 %v1951
        %v2001 = vpop.f32.mrb[0].mxu0
        %v2002 = vadd.f32 0.0, %v2001
        %v2003 = vpop.f32.mrb[0].mxu0
        %v2004 = vpop.f32.mrb[0].mxu0
        %v2005 = vadd.f32 0.0, %v2004
        %v2006 = vpop.f32.mrb[0].mxu0
        %2007 = vdwg.mxu0
        %v2009 = vsel %vm1580, %v1409, 0
        %v2012 = vsel %vm1580, %v1411, 0
        %v2015 = vsel %vm1580, %v1465, 0
        %v2018 = vsel %vm1580, %v1467, 0
        %2020 = vmatprep.subr.bf16.mxu0 0
        %2021 = vmatpush1.bf16.xpose.msra.mxu0 %v2015
        %2022 = vmatprep.subr.bf16.mxu0 0
        %2023 = vmatpush1.bf16.xpose.msra.mxu0 %v2018
        %2024 = vmatprep.subr.bf16.mxu0 0
        %2025 = vmatpush1.bf16.xpose.msra.mxu0 0
        %2026 = vmatprep.subr.bf16.mxu0 0
        %2027 = vmatpush1.bf16.xpose.msra.mxu0 0
        %2028 = vmatprep.subr.bf16.mxu0 0
        %2029 = vmatpush1.bf16.xpose.msra.mxu0 0
        %2030 = vmatprep.subr.bf16.mxu0 0
        %2031 = vmatpush1.bf16.xpose.msra.mxu0 0
        %2032 = vmatprep.subr.bf16.mxu0 0
        %2033 = vmatpush1.bf16.xpose.msra.mxu0 0
        %2034 = vmatprep.subr.bf16.mxu0 0
        %2035 = vmatpush1.bf16.xpose.msra.mxu0 0
        %2036 = vmatprep.subr.bf16.mxu0 0
        %2037 = vmatpush1.bf16.xpose.msra.mxu0 0
        %2038 = vmatprep.subr.bf16.mxu0 0
        %2039 = vmatpush1.bf16.xpose.msra.mxu0 0
        %2040 = vmatprep.subr.bf16.mxu0 0
        %2041 = vmatpush1.bf16.xpose.msra.mxu0 0
        %2042 = vmatprep.subr.bf16.mxu0 0
        %2043 = vmatpush1.bf16.xpose.msra.mxu0 0
        %2044 = vmatprep.subr.bf16.mxu0 0
        %2045 = vmatpush1.bf16.xpose.msra.mxu0 0
        %2046 = vmatprep.subr.bf16.mxu0 0
        %2047 = vmatpush1.bf16.xpose.msra.mxu0 0
        %2048 = vmatprep.subr.bf16.mxu0 0
        %2049 = vmatpush1.bf16.xpose.msra.mxu0 0
        %2050 = vmatprep.subr.bf16.mxu0 0
        %2051 = vmatpush1.bf16.xpose.msra.mxu0 0
        %2052 = vmatprep.mubr.bf16.mxu0 0
        %2053 = vmatmul.mubr.bf16.gmra.mrb[0].mxu0 %v2009
        %v2054 = vpop.f32.mrb[0].mxu0
        %v2055 = vadd.f32 0.0, %v2054
        %v2056 = vpop.f32.mrb[0].mxu0
        %v2057 = vpop.f32.mrb[0].mxu0
        %v2058 = vadd.f32 0.0, %v2057
        %v2059 = vpop.f32.mrb[0].mxu0
        %2060 = vmatprep.mubr.bf16.mxu0 0
        %2061 = vmatmul.mubr.bf16.gmra.mrb[0].mxu0 %v2012
        %v2062 = vpop.f32.mrb[0].mxu0
        %v2063 = vadd.f32 0.0, %v2062
        %v2064 = vpop.f32.mrb[0].mxu0
        %v2065 = vpop.f32.mrb[0].mxu0
        %v2066 = vadd.f32 0.0, %v2065
        %v2067 = vpop.f32.mrb[0].mxu0
        %2068 = vdwg.mxu0
        %v2070 = vsel %vm1580, %v1413, 0
        %v2073 = vsel %vm1580, %v1415, 0
        %v2076 = vsel %vm1580, %v1469, 0
        %v2079 = vsel %vm1580, %v1471, 0
        %2081 = vmatprep.subr.bf16.mxu0 0
        %2082 = vmatpush1.bf16.xpose.msra.mxu0 %v2076
        %2083 = vmatprep.subr.bf16.mxu0 0
        %2084 = vmatpush1.bf16.xpose.msra.mxu0 %v2079
        %2085 = vmatprep.subr.bf16.mxu0 0
        %2086 = vmatpush1.bf16.xpose.msra.mxu0 0
        %2087 = vmatprep.subr.bf16.mxu0 0
        %2088 = vmatpush1.bf16.xpose.msra.mxu0 0
        %2089 = vmatprep.subr.bf16.mxu0 0
        %2090 = vmatpush1.bf16.xpose.msra.mxu0 0
        %2091 = vmatprep.subr.bf16.mxu0 0
        %2092 = vmatpush1.bf16.xpose.msra.mxu0 0
        %2093 = vmatprep.subr.bf16.mxu0 0
        %2094 = vmatpush1.bf16.xpose.msra.mxu0 0
        %2095 = vmatprep.subr.bf16.mxu0 0
        %2096 = vmatpush1.bf16.xpose.msra.mxu0 0
        %2097 = vmatprep.subr.bf16.mxu0 0
        %2098 = vmatpush1.bf16.xpose.msra.mxu0 0
        %2099 = vmatprep.subr.bf16.mxu0 0
        %2100 = vmatpush1.bf16.xpose.msra.mxu0 0
        %2101 = vmatprep.subr.bf16.mxu0 0
        %2102 = vmatpush1.bf16.xpose.msra.mxu0 0
        %2103 = vmatprep.subr.bf16.mxu0 0
        %2104 = vmatpush1.bf16.xpose.msra.mxu0 0
        %2105 = vmatprep.subr.bf16.mxu0 0
        %2106 = vmatpush1.bf16.xpose.msra.mxu0 0
        %2107 = vmatprep.subr.bf16.mxu0 0
        %2108 = vmatpush1.bf16.xpose.msra.mxu0 0
        %2109 = vmatprep.subr.bf16.mxu0 0
        %2110 = vmatpush1.bf16.xpose.msra.mxu0 0
        %2111 = vmatprep.subr.bf16.mxu0 0
        %2112 = vmatpush1.bf16.xpose.msra.mxu0 0
        %2113 = vmatprep.mubr.bf16.mxu0 0
        %2114 = vmatmul.mubr.bf16.gmra.mrb[0].mxu0 %v2070
        %v2115 = vpop.f32.mrb[0].mxu0
        %v2116 = vadd.f32 0.0, %v2115
        %v2117 = vpop.f32.mrb[0].mxu0
        %v2118 = vpop.f32.mrb[0].mxu0
        %v2119 = vadd.f32 0.0, %v2118
        %v2120 = vpop.f32.mrb[0].mxu0
        %2121 = vmatprep.mubr.bf16.mxu0 0
        %2122 = vmatmul.mubr.bf16.gmra.mrb[0].mxu0 %v2073
        %v2123 = vpop.f32.mrb[0].mxu0
        %v2124 = vadd.f32 0.0, %v2123
        %v2125 = vpop.f32.mrb[0].mxu0
        %v2126 = vpop.f32.mrb[0].mxu0
        %v2127 = vadd.f32 0.0, %v2126
        %v2128 = vpop.f32.mrb[0].mxu0
        %2129 = vdwg.mxu0
        %v2131 = vsel %vm1580, %v1417, 0
        %v2134 = vsel %vm1580, %v1419, 0
        %v2137 = vsel %vm1580, %v1473, 0
        %v2140 = vsel %vm1580, %v1475, 0
        %2142 = vmatprep.subr.bf16.mxu0 0
        %2143 = vmatpush1.bf16.xpose.msra.mxu0 %v2137
        %2144 = vmatprep.subr.bf16.mxu0 0
        %2145 = vmatpush1.bf16.xpose.msra.mxu0 %v2140
        %2146 = vmatprep.subr.bf16.mxu0 0
        %2147 = vmatpush1.bf16.xpose.msra.mxu0 0
        %2148 = vmatprep.subr.bf16.mxu0 0
        %2149 = vmatpush1.bf16.xpose.msra.mxu0 0
        %2150 = vmatprep.subr.bf16.mxu0 0
        %2151 = vmatpush1.bf16.xpose.msra.mxu0 0
        %2152 = vmatprep.subr.bf16.mxu0 0
        %2153 = vmatpush1.bf16.xpose.msra.mxu0 0
        %2154 = vmatprep.subr.bf16.mxu0 0
        %2155 = vmatpush1.bf16.xpose.msra.mxu0 0
        %2156 = vmatprep.subr.bf16.mxu0 0
        %2157 = vmatpush1.bf16.xpose.msra.mxu0 0
        %2158 = vmatprep.subr.bf16.mxu0 0
        %2159 = vmatpush1.bf16.xpose.msra.mxu0 0
        %2160 = vmatprep.subr.bf16.mxu0 0
        %2161 = vmatpush1.bf16.xpose.msra.mxu0 0
        %2162 = vmatprep.subr.bf16.mxu0 0
        %2163 = vmatpush1.bf16.xpose.msra.mxu0 0
        %2164 = vmatprep.subr.bf16.mxu0 0
        %2165 = vmatpush1.bf16.xpose.msra.mxu0 0
        %2166 = vmatprep.subr.bf16.mxu0 0
        %2167 = vmatpush1.bf16.xpose.msra.mxu0 0
        %2168 = vmatprep.subr.bf16.mxu0 0
        %2169 = vmatpush1.bf16.xpose.msra.mxu0 0
        %2170 = vmatprep.subr.bf16.mxu0 0
        %2171 = vmatpush1.bf16.xpose.msra.mxu0 0
        %2172 = vmatprep.subr.bf16.mxu0 0
        %2173 = vmatpush1.bf16.xpose.msra.mxu0 0
        %2174 = vmatprep.mubr.bf16.mxu0 0
        %2175 = vmatmul.mubr.bf16.gmra.mrb[0].mxu0 %v2131
        %v2176 = vpop.f32.mrb[0].mxu0
        %v2177 = vadd.f32 0.0, %v2176
        %v2178 = vpop.f32.mrb[0].mxu0
        %v2179 = vpop.f32.mrb[0].mxu0
        %v2180 = vadd.f32 0.0, %v2179
        %v2181 = vpop.f32.mrb[0].mxu0
        %2182 = vmatprep.mubr.bf16.mxu0 0
        %2183 = vmatmul.mubr.bf16.gmra.mrb[0].mxu0 %v2134
        %v2184 = vpop.f32.mrb[0].mxu0
        %v2185 = vadd.f32 0.0, %v2184
        %v2186 = vpop.f32.mrb[0].mxu0
        %v2187 = vpop.f32.mrb[0].mxu0
        %v2188 = vadd.f32 0.0, %v2187
        %v2189 = vpop.f32.mrb[0].mxu0
        %2190 = vdwg.mxu0
        %v2192 = vsel %vm1580, %v1421, 0
        %v2195 = vsel %vm1580, %v1423, 0
        %v2198 = vsel %vm1580, %v1477, 0
        %v2201 = vsel %vm1580, %v1479, 0
        %2203 = vmatprep.subr.bf16.mxu0 0
        %2204 = vmatpush1.bf16.xpose.msra.mxu0 %v2198
        %2205 = vmatprep.subr.bf16.mxu0 0
        %2206 = vmatpush1.bf16.xpose.msra.mxu0 %v2201
        %2207 = vmatprep.subr.bf16.mxu0 0
        %2208 = vmatpush1.bf16.xpose.msra.mxu0 0
        %2209 = vmatprep.subr.bf16.mxu0 0
        %2210 = vmatpush1.bf16.xpose.msra.mxu0 0
        %2211 = vmatprep.subr.bf16.mxu0 0
        %2212 = vmatpush1.bf16.xpose.msra.mxu0 0
        %2213 = vmatprep.subr.bf16.mxu0 0
        %2214 = vmatpush1.bf16.xpose.msra.mxu0 0
        %2215 = vmatprep.subr.bf16.mxu0 0
        %2216 = vmatpush1.bf16.xpose.msra.mxu0 0
        %2217 = vmatprep.subr.bf16.mxu0 0
        %2218 = vmatpush1.bf16.xpose.msra.mxu0 0
        %2219 = vmatprep.subr.bf16.mxu0 0
        %2220 = vmatpush1.bf16.xpose.msra.mxu0 0
        %2221 = vmatprep.subr.bf16.mxu0 0
        %2222 = vmatpush1.bf16.xpose.msra.mxu0 0
        %2223 = vmatprep.subr.bf16.mxu0 0
        %2224 = vmatpush1.bf16.xpose.msra.mxu0 0
        %2225 = vmatprep.subr.bf16.mxu0 0
        %2226 = vmatpush1.bf16.xpose.msra.mxu0 0
        %2227 = vmatprep.subr.bf16.mxu0 0
        %2228 = vmatpush1.bf16.xpose.msra.mxu0 0
        %2229 = vmatprep.subr.bf16.mxu0 0
        %2230 = vmatpush1.bf16.xpose.msra.mxu0 0
        %2231 = vmatprep.subr.bf16.mxu0 0
        %2232 = vmatpush1.bf16.xpose.msra.mxu0 0
        %2233 = vmatprep.subr.bf16.mxu0 0
        %2234 = vmatpush1.bf16.xpose.msra.mxu0 0
        %2235 = vmatprep.mubr.bf16.mxu0 0
        %2236 = vmatmul.mubr.bf16.gmra.mrb[0].mxu0 %v2192
        %v2237 = vpop.f32.mrb[0].mxu0
        %v2238 = vadd.f32 0.0, %v2237
        %v2239 = vpop.f32.mrb[0].mxu0
        %v2240 = vpop.f32.mrb[0].mxu0
        %v2241 = vadd.f32 0.0, %v2240
        %v2242 = vpop.f32.mrb[0].mxu0
        %2243 = vmatprep.mubr.bf16.mxu0 0
        %2244 = vmatmul.mubr.bf16.gmra.mrb[0].mxu0 %v2195
        %v2245 = vpop.f32.mrb[0].mxu0
        %v2246 = vadd.f32 0.0, %v2245
        %v2247 = vpop.f32.mrb[0].mxu0
        %v2248 = vpop.f32.mrb[0].mxu0
        %v2249 = vadd.f32 0.0, %v2248
        %v2250 = vpop.f32.mrb[0].mxu0
        %2251 = vdwg.mxu0
        %v2253 = vsel %vm1580, %v1425, 0
        %v2256 = vsel %vm1580, %v1427, 0
        %v2259 = vsel %vm1580, %v1481, 0
        %v2262 = vsel %vm1580, %v1483, 0
        %2264 = vmatprep.subr.bf16.mxu0 0
        %2265 = vmatpush1.bf16.xpose.msra.mxu0 %v2259
        %2266 = vmatprep.subr.bf16.mxu0 0
        %2267 = vmatpush1.bf16.xpose.msra.mxu0 %v2262
        %2268 = vmatprep.subr.bf16.mxu0 0
        %2269 = vmatpush1.bf16.xpose.msra.mxu0 0
        %2270 = vmatprep.subr.bf16.mxu0 0
        %2271 = vmatpush1.bf16.xpose.msra.mxu0 0
        %2272 = vmatprep.subr.bf16.mxu0 0
        %2273 = vmatpush1.bf16.xpose.msra.mxu0 0
        %2274 = vmatprep.subr.bf16.mxu0 0
        %2275 = vmatpush1.bf16.xpose.msra.mxu0 0
        %2276 = vmatprep.subr.bf16.mxu0 0
        %2277 = vmatpush1.bf16.xpose.msra.mxu0 0
        %2278 = vmatprep.subr.bf16.mxu0 0
        %2279 = vmatpush1.bf16.xpose.msra.mxu0 0
        %2280 = vmatprep.subr.bf16.mxu0 0
        %2281 = vmatpush1.bf16.xpose.msra.mxu0 0
        %2282 = vmatprep.subr.bf16.mxu0 0
        %2283 = vmatpush1.bf16.xpose.msra.mxu0 0
        %2284 = vmatprep.subr.bf16.mxu0 0
        %2285 = vmatpush1.bf16.xpose.msra.mxu0 0
        %2286 = vmatprep.subr.bf16.mxu0 0
        %2287 = vmatpush1.bf16.xpose.msra.mxu0 0
        %2288 = vmatprep.subr.bf16.mxu0 0
        %2289 = vmatpush1.bf16.xpose.msra.mxu0 0
        %2290 = vmatprep.subr.bf16.mxu0 0
        %2291 = vmatpush1.bf16.xpose.msra.mxu0 0
        %2292 = vmatprep.subr.bf16.mxu0 0
        %2293 = vmatpush1.bf16.xpose.msra.mxu0 0
        %2294 = vmatprep.subr.bf16.mxu0 0
        %2295 = vmatpush1.bf16.xpose.msra.mxu0 0
        %2296 = vmatprep.mubr.bf16.mxu0 0
        %2297 = vmatmul.mubr.bf16.gmra.mrb[0].mxu0 %v2253
        %v2298 = vpop.f32.mrb[0].mxu0
        %v2299 = vadd.f32 0.0, %v2298
        %v2300 = vpop.f32.mrb[0].mxu0
        %v2301 = vpop.f32.mrb[0].mxu0
        %v2302 = vadd.f32 0.0, %v2301
        %v2303 = vpop.f32.mrb[0].mxu0
        %2304 = vmatprep.mubr.bf16.mxu0 0
        %2305 = vmatmul.mubr.bf16.gmra.mrb[0].mxu0 %v2256
        %v2306 = vpop.f32.mrb[0].mxu0
        %v2307 = vadd.f32 0.0, %v2306
        %v2308 = vpop.f32.mrb[0].mxu0
        %v2309 = vpop.f32.mrb[0].mxu0
        %v2310 = vadd.f32 0.0, %v2309
        %v2311 = vpop.f32.mrb[0].mxu0
        %2312 = vdwg.mxu0
        %v2314 = vsel %vm1580, %v1429, 0
        %v2317 = vsel %vm1580, %v1431, 0
        %v2320 = vsel %vm1580, %v1485, 0
        %v2323 = vsel %vm1580, %v1487, 0
        %2325 = vmatprep.subr.bf16.mxu0 0
        %2326 = vmatpush1.bf16.xpose.msra.mxu0 %v2320
        %2327 = vmatprep.subr.bf16.mxu0 0
        %2328 = vmatpush1.bf16.xpose.msra.mxu0 %v2323
        %2329 = vmatprep.subr.bf16.mxu0 0
        %2330 = vmatpush1.bf16.xpose.msra.mxu0 0
        %2331 = vmatprep.subr.bf16.mxu0 0
        %2332 = vmatpush1.bf16.xpose.msra.mxu0 0
        %2333 = vmatprep.subr.bf16.mxu0 0
        %2334 = vmatpush1.bf16.xpose.msra.mxu0 0
        %2335 = vmatprep.subr.bf16.mxu0 0
        %2336 = vmatpush1.bf16.xpose.msra.mxu0 0
        %2337 = vmatprep.subr.bf16.mxu0 0
        %2338 = vmatpush1.bf16.xpose.msra.mxu0 0
        %2339 = vmatprep.subr.bf16.mxu0 0
        %2340 = vmatpush1.bf16.xpose.msra.mxu0 0
        %2341 = vmatprep.subr.bf16.mxu0 0
        %2342 = vmatpush1.bf16.xpose.msra.mxu0 0
        %2343 = vmatprep.subr.bf16.mxu0 0
        %2344 = vmatpush1.bf16.xpose.msra.mxu0 0
        %2345 = vmatprep.subr.bf16.mxu0 0
        %2346 = vmatpush1.bf16.xpose.msra.mxu0 0
        %2347 = vmatprep.subr.bf16.mxu0 0
        %2348 = vmatpush1.bf16.xpose.msra.mxu0 0
        %2349 = vmatprep.subr.bf16.mxu0 0
        %2350 = vmatpush1.bf16.xpose.msra.mxu0 0
        %2351 = vmatprep.subr.bf16.mxu0 0
        %2352 = vmatpush1.bf16.xpose.msra.mxu0 0
        %2353 = vmatprep.subr.bf16.mxu0 0
        %2354 = vmatpush1.bf16.xpose.msra.mxu0 0
        %2355 = vmatprep.subr.bf16.mxu0 0
        %2356 = vmatpush1.bf16.xpose.msra.mxu0 0
        %2357 = vmatprep.mubr.bf16.mxu0 0
        %2358 = vmatmul.mubr.bf16.gmra.mrb[0].mxu0 %v2314
        %v2359 = vpop.f32.mrb[0].mxu0
        %v2360 = vadd.f32 0.0, %v2359
        %v2361 = vpop.f32.mrb[0].mxu0
        %v2362 = vpop.f32.mrb[0].mxu0
        %v2363 = vadd.f32 0.0, %v2362
        %v2364 = vpop.f32.mrb[0].mxu0
        %2365 = vmatprep.mubr.bf16.mxu0 0
        %2366 = vmatmul.mubr.bf16.gmra.mrb[0].mxu0 %v2317
        %v2367 = vpop.f32.mrb[0].mxu0
        %v2368 = vadd.f32 0.0, %v2367
        %v2369 = vpop.f32.mrb[0].mxu0
        %v2370 = vpop.f32.mrb[0].mxu0
        %v2371 = vadd.f32 0.0, %v2370
        %v2372 = vpop.f32.mrb[0].mxu0
        %2373 = vdwg.mxu0
        %v2375 = vsel %vm1580, %v1433, 0
        %v2378 = vsel %vm1580, %v1435, 0
        %v2381 = vsel %vm1580, %v1489, 0
        %v2384 = vsel %vm1580, %v1491, 0
        %2386 = vmatprep.subr.bf16.mxu0 0
        %2387 = vmatpush1.bf16.xpose.msra.mxu0 %v2381
        %2388 = vmatprep.subr.bf16.mxu0 0
        %2389 = vmatpush1.bf16.xpose.msra.mxu0 %v2384
        %2390 = vmatprep.subr.bf16.mxu0 0
        %2391 = vmatpush1.bf16.xpose.msra.mxu0 0
        %2392 = vmatprep.subr.bf16.mxu0 0
        %2393 = vmatpush1.bf16.xpose.msra.mxu0 0
        %2394 = vmatprep.subr.bf16.mxu0 0
        %2395 = vmatpush1.bf16.xpose.msra.mxu0 0
        %2396 = vmatprep.subr.bf16.mxu0 0
        %2397 = vmatpush1.bf16.xpose.msra.mxu0 0
        %2398 = vmatprep.subr.bf16.mxu0 0
        %2399 = vmatpush1.bf16.xpose.msra.mxu0 0
        %2400 = vmatprep.subr.bf16.mxu0 0
        %2401 = vmatpush1.bf16.xpose.msra.mxu0 0
        %2402 = vmatprep.subr.bf16.mxu0 0
        %2403 = vmatpush1.bf16.xpose.msra.mxu0 0
        %2404 = vmatprep.subr.bf16.mxu0 0
        %2405 = vmatpush1.bf16.xpose.msra.mxu0 0
        %2406 = vmatprep.subr.bf16.mxu0 0
        %2407 = vmatpush1.bf16.xpose.msra.mxu0 0
        %2408 = vmatprep.subr.bf16.mxu0 0
        %2409 = vmatpush1.bf16.xpose.msra.mxu0 0
        %2410 = vmatprep.subr.bf16.mxu0 0
        %2411 = vmatpush1.bf16.xpose.msra.mxu0 0
        %2412 = vmatprep.subr.bf16.mxu0 0
        %2413 = vmatpush1.bf16.xpose.msra.mxu0 0
        %2414 = vmatprep.subr.bf16.mxu0 0
        %2415 = vmatpush1.bf16.xpose.msra.mxu0 0
        %2416 = vmatprep.subr.bf16.mxu0 0
        %2417 = vmatpush1.bf16.xpose.msra.mxu0 0
        %2418 = vmatprep.mubr.bf16.mxu0 0
        %2419 = vmatmul.mubr.bf16.gmra.mrb[0].mxu0 %v2375
        %v2420 = vpop.f32.mrb[0].mxu0
        %v2421 = vadd.f32 0.0, %v2420
        %v2422 = vpop.f32.mrb[0].mxu0
        %v2423 = vpop.f32.mrb[0].mxu0
        %v2424 = vadd.f32 0.0, %v2423
        %v2425 = vpop.f32.mrb[0].mxu0
        %2426 = vmatprep.mubr.bf16.mxu0 0
        %2427 = vmatmul.mubr.bf16.gmra.mrb[0].mxu0 %v2378
        %v2428 = vpop.f32.mrb[0].mxu0
        %v2429 = vadd.f32 0.0, %v2428
        %v2430 = vpop.f32.mrb[0].mxu0
        %v2431 = vpop.f32.mrb[0].mxu0
        %v2432 = vadd.f32 0.0, %v2431
        %v2433 = vpop.f32.mrb[0].mxu0
        %2434 = vdwg.mxu0
        %v2436 = vsel %vm1580, %v1437, 0
        %v2439 = vsel %vm1580, %v1439, 0
        %v2442 = vsel %vm1580, %v1493, 0
        %v2445 = vsel %vm1580, %v1495, 0
        %2447 = vmatprep.subr.bf16.mxu0 0
        %2448 = vmatpush1.bf16.xpose.msra.mxu0 %v2442
        %2449 = vmatprep.subr.bf16.mxu0 0
        %2450 = vmatpush1.bf16.xpose.msra.mxu0 %v2445
        %2451 = vmatprep.subr.bf16.mxu0 0
        %2452 = vmatpush1.bf16.xpose.msra.mxu0 0
        %2453 = vmatprep.subr.bf16.mxu0 0
        %2454 = vmatpush1.bf16.xpose.msra.mxu0 0
        %2455 = vmatprep.subr.bf16.mxu0 0
        %2456 = vmatpush1.bf16.xpose.msra.mxu0 0
        %2457 = vmatprep.subr.bf16.mxu0 0
        %2458 = vmatpush1.bf16.xpose.msra.mxu0 0
        %2459 = vmatprep.subr.bf16.mxu0 0
        %2460 = vmatpush1.bf16.xpose.msra.mxu0 0
        %2461 = vmatprep.subr.bf16.mxu0 0
        %2462 = vmatpush1.bf16.xpose.msra.mxu0 0
        %2463 = vmatprep.subr.bf16.mxu0 0
        %2464 = vmatpush1.bf16.xpose.msra.mxu0 0
        %2465 = vmatprep.subr.bf16.mxu0 0
        %2466 = vmatpush1.bf16.xpose.msra.mxu0 0
        %2467 = vmatprep.subr.bf16.mxu0 0
        %2468 = vmatpush1.bf16.xpose.msra.mxu0 0
        %2469 = vmatprep.subr.bf16.mxu0 0
        %2470 = vmatpush1.bf16.xpose.msra.mxu0 0
        %2471 = vmatprep.subr.bf16.mxu0 0
        %2472 = vmatpush1.bf16.xpose.msra.mxu0 0
        %2473 = vmatprep.subr.bf16.mxu0 0
        %2474 = vmatpush1.bf16.xpose.msra.mxu0 0
        %2475 = vmatprep.subr.bf16.mxu0 0
        %2476 = vmatpush1.bf16.xpose.msra.mxu0 0
        %2477 = vmatprep.subr.bf16.mxu0 0
        %2478 = vmatpush1.bf16.xpose.msra.mxu0 0
        %2479 = vmatprep.mubr.bf16.mxu0 0
        %2480 = vmatmul.mubr.bf16.gmra.mrb[0].mxu0 %v2436
        %v2481 = vpop.f32.mrb[0].mxu0
        %v2482 = vadd.f32 0.0, %v2481
        %v2483 = vpop.f32.mrb[0].mxu0
        %v2484 = vpop.f32.mrb[0].mxu0
        %v2485 = vadd.f32 0.0, %v2484
        %v2486 = vpop.f32.mrb[0].mxu0
        %2487 = vmatprep.mubr.bf16.mxu0 0
        %2488 = vmatmul.mubr.bf16.gmra.mrb[0].mxu0 %v2439
        %v2489 = vpop.f32.mrb[0].mxu0
        %v2490 = vadd.f32 0.0, %v2489
        %v2491 = vpop.f32.mrb[0].mxu0
        %v2492 = vpop.f32.mrb[0].mxu0
        %v2493 = vadd.f32 0.0, %v2492
        %v2494 = vpop.f32.mrb[0].mxu0
        %2495 = vdwg.mxu0
        %v2497 = vsel %vm1580, %v1441, 0
        %v2500 = vsel %vm1580, %v1443, 0
        %v2503 = vsel %vm1580, %v1497, 0
        %v2506 = vsel %vm1580, %v1499, 0
        %2508 = vmatprep.subr.bf16.mxu0 0
        %2509 = vmatpush1.bf16.xpose.msra.mxu0 %v2503
        %2510 = vmatprep.subr.bf16.mxu0 0
        %2511 = vmatpush1.bf16.xpose.msra.mxu0 %v2506
        %2512 = vmatprep.subr.bf16.mxu0 0
        %2513 = vmatpush1.bf16.xpose.msra.mxu0 0
        %2514 = vmatprep.subr.bf16.mxu0 0
        %2515 = vmatpush1.bf16.xpose.msra.mxu0 0
        %2516 = vmatprep.subr.bf16.mxu0 0
        %2517 = vmatpush1.bf16.xpose.msra.mxu0 0
        %2518 = vmatprep.subr.bf16.mxu0 0
        %2519 = vmatpush1.bf16.xpose.msra.mxu0 0
        %2520 = vmatprep.subr.bf16.mxu0 0
        %2521 = vmatpush1.bf16.xpose.msra.mxu0 0
        %2522 = vmatprep.subr.bf16.mxu0 0
        %2523 = vmatpush1.bf16.xpose.msra.mxu0 0
        %2524 = vmatprep.subr.bf16.mxu0 0
        %2525 = vmatpush1.bf16.xpose.msra.mxu0 0
        %2526 = vmatprep.subr.bf16.mxu0 0
        %2527 = vmatpush1.bf16.xpose.msra.mxu0 0
        %2528 = vmatprep.subr.bf16.mxu0 0
        %2529 = vmatpush1.bf16.xpose.msra.mxu0 0
        %2530 = vmatprep.subr.bf16.mxu0 0
        %2531 = vmatpush1.bf16.xpose.msra.mxu0 0
        %2532 = vmatprep.subr.bf16.mxu0 0
        %2533 = vmatpush1.bf16.xpose.msra.mxu0 0
        %2534 = vmatprep.subr.bf16.mxu0 0
        %2535 = vmatpush1.bf16.xpose.msra.mxu0 0
        %2536 = vmatprep.subr.bf16.mxu0 0
        %2537 = vmatpush1.bf16.xpose.msra.mxu0 0
        %2538 = vmatprep.subr.bf16.mxu0 0
        %2539 = vmatpush1.bf16.xpose.msra.mxu0 0
        %2540 = vmatprep.mubr.bf16.mxu0 0
        %2541 = vmatmul.mubr.bf16.gmra.mrb[0].mxu0 %v2497
        %v2542 = vpop.f32.mrb[0].mxu0
        %v2543 = vadd.f32 0.0, %v2542
        %v2544 = vpop.f32.mrb[0].mxu0
        %v2545 = vpop.f32.mrb[0].mxu0
        %v2546 = vadd.f32 0.0, %v2545
        %v2547 = vpop.f32.mrb[0].mxu0
        %2548 = vmatprep.mubr.bf16.mxu0 0
        %2549 = vmatmul.mubr.bf16.gmra.mrb[0].mxu0 %v2500
        %v2550 = vpop.f32.mrb[0].mxu0
        %v2551 = vadd.f32 0.0, %v2550
        %v2552 = vpop.f32.mrb[0].mxu0
        %v2553 = vpop.f32.mrb[0].mxu0
        %v2554 = vadd.f32 0.0, %v2553
        %v2555 = vpop.f32.mrb[0].mxu0
        %2556 = vdwg.mxu0
        %v2557 = vsel %vm1580, %v1628, -inf
        %2558 = vmax.xlane.f32.xlu0 %v2557
        %v2559 = vpop.xlane.xlu0 %2558
        %v2560 = vsel %vm1580, %v1631, -inf
        %2561 = vmax.xlane.f32.xlu0 %v2560
        %v2562 = vpop.xlane.xlu0 %2561
        %v2563 = vsel %vm1580, %v1636, -inf
        %2564 = vmax.xlane.f32.xlu0 %v2563
        %v2565 = vpop.xlane.xlu0 %2564
        %v2566 = vsel %vm1580, %v1639, -inf
        %2567 = vmax.xlane.f32.xlu0 %v2566
        %v2568 = vpop.xlane.xlu0 %2567
        %v2569 = vsel %vm1580, %v1689, -inf
        %2570 = vmax.xlane.f32.xlu0 %v2569
        %v2571 = vpop.xlane.xlu0 %2570
        %v2572 = vsel %vm1580, %v1692, -inf
        %2573 = vmax.xlane.f32.xlu0 %v2572
        %v2574 = vpop.xlane.xlu0 %2573
        %v2575 = vsel %vm1580, %v1697, -inf
        %2576 = vmax.xlane.f32.xlu0 %v2575
        %v2577 = vpop.xlane.xlu0 %2576
        %v2578 = vsel %vm1580, %v1700, -inf
        %2579 = vmax.xlane.f32.xlu0 %v2578
        %v2580 = vpop.xlane.xlu0 %2579
        %v2581 = vsel %vm1580, %v1750, -inf
        %2582 = vmax.xlane.f32.xlu0 %v2581
        %v2583 = vpop.xlane.xlu0 %2582
        %v2584 = vsel %vm1580, %v1753, -inf
        %2585 = vmax.xlane.f32.xlu0 %v2584
        %v2586 = vpop.xlane.xlu0 %2585
        %v2587 = vsel %vm1580, %v1758, -inf
        %2588 = vmax.xlane.f32.xlu0 %v2587
        %v2589 = vpop.xlane.xlu0 %2588
        %v2590 = vsel %vm1580, %v1761, -inf
        %2591 = vmax.xlane.f32.xlu0 %v2590
        %v2592 = vpop.xlane.xlu0 %2591
        %v2593 = vsel %vm1580, %v1811, -inf
        %2594 = vmax.xlane.f32.xlu0 %v2593
        %v2595 = vpop.xlane.xlu0 %2594
        %v2596 = vsel %vm1580, %v1814, -inf
        %2597 = vmax.xlane.f32.xlu0 %v2596
        %v2598 = vpop.xlane.xlu0 %2597
        %v2599 = vsel %vm1580, %v1819, -inf
        %2600 = vmax.xlane.f32.xlu0 %v2599
        %v2601 = vpop.xlane.xlu0 %2600
        %v2602 = vsel %vm1580, %v1822, -inf
        %2603 = vmax.xlane.f32.xlu0 %v2602
        %v2604 = vpop.xlane.xlu0 %2603
        %v2605 = vsel %vm1580, %v1872, -inf
        %2606 = vmax.xlane.f32.xlu0 %v2605
        %v2607 = vpop.xlane.xlu0 %2606
        %v2608 = vsel %vm1580, %v1875, -inf
        %2609 = vmax.xlane.f32.xlu0 %v2608
        %v2610 = vpop.xlane.xlu0 %2609
        %v2611 = vsel %vm1580, %v1880, -inf
        %2612 = vmax.xlane.f32.xlu0 %v2611
        %v2613 = vpop.xlane.xlu0 %2612
        %v2614 = vsel %vm1580, %v1883, -inf
        %2615 = vmax.xlane.f32.xlu0 %v2614
        %v2616 = vpop.xlane.xlu0 %2615
        %v2617 = vsel %vm1580, %v1933, -inf
        %2618 = vmax.xlane.f32.xlu0 %v2617
        %v2619 = vpop.xlane.xlu0 %2618
        %v2620 = vsel %vm1580, %v1936, -inf
        %2621 = vmax.xlane.f32.xlu0 %v2620
        %v2622 = vpop.xlane.xlu0 %2621
        %v2623 = vsel %vm1580, %v1941, -inf
        %2624 = vmax.xlane.f32.xlu0 %v2623
        %v2625 = vpop.xlane.xlu0 %2624
        %v2626 = vsel %vm1580, %v1944, -inf
        %2627 = vmax.xlane.f32.xlu0 %v2626
        %v2628 = vpop.xlane.xlu0 %2627
        %v2629 = vsel %vm1580, %v1994, -inf
        %2630 = vmax.xlane.f32.xlu0 %v2629
        %v2631 = vpop.xlane.xlu0 %2630
        %v2632 = vsel %vm1580, %v1997, -inf
        %2633 = vmax.xlane.f32.xlu0 %v2632
        %v2634 = vpop.xlane.xlu0 %2633
        %v2635 = vsel %vm1580, %v2002, -inf
        %2636 = vmax.xlane.f32.xlu0 %v2635
        %v2637 = vpop.xlane.xlu0 %2636
        %v2638 = vsel %vm1580, %v2005, -inf
        %2639 = vmax.xlane.f32.xlu0 %v2638
        %v2640 = vpop.xlane.xlu0 %2639
        %v2641 = vsel %vm1580, %v2055, -inf
        %2642 = vmax.xlane.f32.xlu0 %v2641
        %v2643 = vpop.xlane.xlu0 %2642
        %v2644 = vsel %vm1580, %v2058, -inf
        %2645 = vmax.xlane.f32.xlu0 %v2644
        %v2646 = vpop.xlane.xlu0 %2645
        %v2647 = vsel %vm1580, %v2063, -inf
        %2648 = vmax.xlane.f32.xlu0 %v2647
        %v2649 = vpop.xlane.xlu0 %2648
        %v2650 = vsel %vm1580, %v2066, -inf
        %2651 = vmax.xlane.f32.xlu0 %v2650
        %v2652 = vpop.xlane.xlu0 %2651
        %v2653 = vsel %vm1580, %v2116, -inf
        %2654 = vmax.xlane.f32.xlu0 %v2653
        %v2655 = vpop.xlane.xlu0 %2654
        %v2656 = vsel %vm1580, %v2119, -inf
        %2657 = vmax.xlane.f32.xlu0 %v2656
        %v2658 = vpop.xlane.xlu0 %2657
        %v2659 = vsel %vm1580, %v2124, -inf
        %2660 = vmax.xlane.f32.xlu0 %v2659
        %v2661 = vpop.xlane.xlu0 %2660
        %v2662 = vsel %vm1580, %v2127, -inf
        %2663 = vmax.xlane.f32.xlu0 %v2662
        %v2664 = vpop.xlane.xlu0 %2663
        %v2665 = vsel %vm1580, %v2177, -inf
        %2666 = vmax.xlane.f32.xlu0 %v2665
        %v2667 = vpop.xlane.xlu0 %2666
        %v2668 = vsel %vm1580, %v2180, -inf
        %2669 = vmax.xlane.f32.xlu0 %v2668
        %v2670 = vpop.xlane.xlu0 %2669
        %v2671 = vsel %vm1580, %v2185, -inf
        %2672 = vmax.xlane.f32.xlu0 %v2671
        %v2673 = vpop.xlane.xlu0 %2672
        %v2674 = vsel %vm1580, %v2188, -inf
        %2675 = vmax.xlane.f32.xlu0 %v2674
        %v2676 = vpop.xlane.xlu0 %2675
        %v2677 = vsel %vm1580, %v2238, -inf
        %2678 = vmax.xlane.f32.xlu0 %v2677
        %v2679 = vpop.xlane.xlu0 %2678
        %v2680 = vsel %vm1580, %v2241, -inf
        %2681 = vmax.xlane.f32.xlu0 %v2680
        %v2682 = vpop.xlane.xlu0 %2681
        %v2683 = vsel %vm1580, %v2246, -inf
        %2684 = vmax.xlane.f32.xlu0 %v2683
        %v2685 = vpop.xlane.xlu0 %2684
        %v2686 = vsel %vm1580, %v2249, -inf
        %2687 = vmax.xlane.f32.xlu0 %v2686
        %v2688 = vpop.xlane.xlu0 %2687
        %v2689 = vsel %vm1580, %v2299, -inf
        %2690 = vmax.xlane.f32.xlu0 %v2689
        %v2691 = vpop.xlane.xlu0 %2690
        %v2692 = vsel %vm1580, %v2302, -inf
        %2693 = vmax.xlane.f32.xlu0 %v2692
        %v2694 = vpop.xlane.xlu0 %2693
        %v2695 = vsel %vm1580, %v2307, -inf
        %2696 = vmax.xlane.f32.xlu0 %v2695
        %v2697 = vpop.xlane.xlu0 %2696
        %v2698 = vsel %vm1580, %v2310, -inf
        %2699 = vmax.xlane.f32.xlu0 %v2698
        %v2700 = vpop.xlane.xlu0 %2699
        %v2701 = vsel %vm1580, %v2360, -inf
        %2702 = vmax.xlane.f32.xlu0 %v2701
        %v2703 = vpop.xlane.xlu0 %2702
        %v2704 = vsel %vm1580, %v2363, -inf
        %2705 = vmax.xlane.f32.xlu0 %v2704
        %v2706 = vpop.xlane.xlu0 %2705
        %v2707 = vsel %vm1580, %v2368, -inf
        %2708 = vmax.xlane.f32.xlu0 %v2707
        %v2709 = vpop.xlane.xlu0 %2708
        %v2710 = vsel %vm1580, %v2371, -inf
        %2711 = vmax.xlane.f32.xlu0 %v2710
        %v2712 = vpop.xlane.xlu0 %2711
        %v2713 = vsel %vm1580, %v2421, -inf
        %2714 = vmax.xlane.f32.xlu0 %v2713
        %v2715 = vpop.xlane.xlu0 %2714
        %v2716 = vsel %vm1580, %v2424, -inf
        %2717 = vmax.xlane.f32.xlu0 %v2716
        %v2718 = vpop.xlane.xlu0 %2717
        %v2719 = vsel %vm1580, %v2429, -inf
        %2720 = vmax.xlane.f32.xlu0 %v2719
        %v2721 = vpop.xlane.xlu0 %2720
        %v2722 = vsel %vm1580, %v2432, -inf
        %2723 = vmax.xlane.f32.xlu0 %v2722
        %v2724 = vpop.xlane.xlu0 %2723
        %v2725 = vsel %vm1580, %v2482, -inf
        %2726 = vmax.xlane.f32.xlu0 %v2725
        %v2727 = vpop.xlane.xlu0 %2726
        %v2728 = vsel %vm1580, %v2485, -inf
        %2729 = vmax.xlane.f32.xlu0 %v2728
        %v2730 = vpop.xlane.xlu0 %2729
        %v2731 = vsel %vm1580, %v2490, -inf
        %2732 = vmax.xlane.f32.xlu0 %v2731
        %v2733 = vpop.xlane.xlu0 %2732
        %v2734 = vsel %vm1580, %v2493, -inf
        %2735 = vmax.xlane.f32.xlu0 %v2734
        %v2736 = vpop.xlane.xlu0 %2735
        %v2737 = vsel %vm1580, %v2543, -inf
        %2738 = vmax.xlane.f32.xlu0 %v2737
        %v2739 = vpop.xlane.xlu0 %2738
        %v2740 = vsel %vm1580, %v2546, -inf
        %2741 = vmax.xlane.f32.xlu0 %v2740
        %v2742 = vpop.xlane.xlu0 %2741
        %v2743 = vsel %vm1580, %v2551, -inf
        %2744 = vmax.xlane.f32.xlu0 %v2743
        %v2745 = vpop.xlane.xlu0 %2744
        %v2746 = vsel %vm1580, %v2554, -inf
        %2747 = vmax.xlane.f32.xlu0 %v2746
        %v2748 = vpop.xlane.xlu0 %2747
        %v2749 = vsub.f32 %v1628, %v2559
        %v2750 = vsub.f32 %v1631, %v2562
        %v2751 = vsub.f32 %v1636, %v2565
        %v2752 = vsub.f32 %v1639, %v2568
        %v2753 = vsub.f32 %v1689, %v2571
        %v2754 = vsub.f32 %v1692, %v2574
        %v2755 = vsub.f32 %v1697, %v2577
        %v2756 = vsub.f32 %v1700, %v2580
        %v2757 = vsub.f32 %v1750, %v2583
        %v2758 = vsub.f32 %v1753, %v2586
        %v2759 = vsub.f32 %v1758, %v2589
        %v2760 = vsub.f32 %v1761, %v2592
        %v2761 = vsub.f32 %v1811, %v2595
        %v2762 = vsub.f32 %v1814, %v2598
        %v2763 = vsub.f32 %v1819, %v2601
        %v2764 = vsub.f32 %v1822, %v2604
        %v2765 = vsub.f32 %v1872, %v2607
        %v2766 = vsub.f32 %v1875, %v2610
        %v2767 = vsub.f32 %v1880, %v2613
        %v2768 = vsub.f32 %v1883, %v2616
        %v2769 = vsub.f32 %v1933, %v2619
        %v2770 = vsub.f32 %v1936, %v2622
        %v2771 = vsub.f32 %v1941, %v2625
        %v2772 = vsub.f32 %v1944, %v2628
        %v2773 = vsub.f32 %v1994, %v2631
        %v2774 = vsub.f32 %v1997, %v2634
        %v2775 = vsub.f32 %v2002, %v2637
        %v2776 = vsub.f32 %v2005, %v2640
        %v2777 = vsub.f32 %v2055, %v2643
        %v2778 = vsub.f32 %v2058, %v2646
        %v2779 = vsub.f32 %v2063, %v2649
        %v2780 = vsub.f32 %v2066, %v2652
        %v2781 = vsub.f32 %v2116, %v2655
        %v2782 = vsub.f32 %v2119, %v2658
        %v2783 = vsub.f32 %v2124, %v2661
        %v2784 = vsub.f32 %v2127, %v2664
        %v2785 = vsub.f32 %v2177, %v2667
        %v2786 = vsub.f32 %v2180, %v2670
        %v2787 = vsub.f32 %v2185, %v2673
        %v2788 = vsub.f32 %v2188, %v2676
        %v2789 = vsub.f32 %v2238, %v2679
        %v2790 = vsub.f32 %v2241, %v2682
        %v2791 = vsub.f32 %v2246, %v2685
        %v2792 = vsub.f32 %v2249, %v2688
        %v2793 = vsub.f32 %v2299, %v2691
        %v2794 = vsub.f32 %v2302, %v2694
        %v2795 = vsub.f32 %v2307, %v2697
        %v2796 = vsub.f32 %v2310, %v2700
        %v2797 = vsub.f32 %v2360, %v2703
        %v2798 = vsub.f32 %v2363, %v2706
        %v2799 = vsub.f32 %v2368, %v2709
        %v2800 = vsub.f32 %v2371, %v2712
        %v2801 = vsub.f32 %v2421, %v2715
        %v2802 = vsub.f32 %v2424, %v2718
        %v2803 = vsub.f32 %v2429, %v2721
        %v2804 = vsub.f32 %v2432, %v2724
        %v2805 = vsub.f32 %v2482, %v2727
        %v2806 = vsub.f32 %v2485, %v2730
        %v2807 = vsub.f32 %v2490, %v2733
        %v2808 = vsub.f32 %v2493, %v2736
        %v2809 = vsub.f32 %v2543, %v2739
        %v2810 = vsub.f32 %v2546, %v2742
        %v2811 = vsub.f32 %v2551, %v2745
        %v2812 = vsub.f32 %v2554, %v2748
        %v2813 = vmul.f32 %v2749, 1.442695
        %v2814 = vpow.pop %v2813
        %v2815 = vmul.f32 %v2750, 1.442695
        %v2816 = vpow.pop %v2815
        %v2817 = vmul.f32 %v2751, 1.442695
        %v2818 = vpow.pop %v2817
        %v2819 = vmul.f32 %v2752, 1.442695
        %v2820 = vpow.pop %v2819
        %v2821 = vmul.f32 %v2753, 1.442695
        %v2822 = vpow.pop %v2821
        %v2823 = vmul.f32 %v2754, 1.442695
        %v2824 = vpow.pop %v2823
        %v2825 = vmul.f32 %v2755, 1.442695
        %v2826 = vpow.pop %v2825
        %v2827 = vmul.f32 %v2756, 1.442695
        %v2828 = vpow.pop %v2827
        %v2829 = vmul.f32 %v2757, 1.442695
        %v2830 = vpow.pop %v2829
        %v2831 = vmul.f32 %v2758, 1.442695
        %v2832 = vpow.pop %v2831
        %v2833 = vmul.f32 %v2759, 1.442695
        %v2834 = vpow.pop %v2833
        %v2835 = vmul.f32 %v2760, 1.442695
        %v2836 = vpow.pop %v2835
        %v2837 = vmul.f32 %v2761, 1.442695
        %v2838 = vpow.pop %v2837
        %v2839 = vmul.f32 %v2762, 1.442695
        %v2840 = vpow.pop %v2839
        %v2841 = vmul.f32 %v2763, 1.442695
        %v2842 = vpow.pop %v2841
        %v2843 = vmul.f32 %v2764, 1.442695
        %v2844 = vpow.pop %v2843
        %v2845 = vmul.f32 %v2765, 1.442695
        %v2846 = vpow.pop %v2845
        %v2847 = vmul.f32 %v2766, 1.442695
        %v2848 = vpow.pop %v2847
        %v2849 = vmul.f32 %v2767, 1.442695
        %v2850 = vpow.pop %v2849
        %v2851 = vmul.f32 %v2768, 1.442695
        %v2852 = vpow.pop %v2851
        %v2853 = vmul.f32 %v2769, 1.442695
        %v2854 = vpow.pop %v2853
        %v2855 = vmul.f32 %v2770, 1.442695
        %v2856 = vpow.pop %v2855
        %v2857 = vmul.f32 %v2771, 1.442695
        %v2858 = vpow.pop %v2857
        %v2859 = vmul.f32 %v2772, 1.442695
        %v2860 = vpow.pop %v2859
        %v2861 = vmul.f32 %v2773, 1.442695
        %v2862 = vpow.pop %v2861
        %v2863 = vmul.f32 %v2774, 1.442695
        %v2864 = vpow.pop %v2863
        %v2865 = vmul.f32 %v2775, 1.442695
        %v2866 = vpow.pop %v2865
        %v2867 = vmul.f32 %v2776, 1.442695
        %v2868 = vpow.pop %v2867
        %v2869 = vmul.f32 %v2777, 1.442695
        %v2870 = vpow.pop %v2869
        %v2871 = vmul.f32 %v2778, 1.442695
        %v2872 = vpow.pop %v2871
        %v2873 = vmul.f32 %v2779, 1.442695
        %v2874 = vpow.pop %v2873
        %v2875 = vmul.f32 %v2780, 1.442695
        %v2876 = vpow.pop %v2875
        %v2877 = vmul.f32 %v2781, 1.442695
        %v2878 = vpow.pop %v2877
        %v2879 = vmul.f32 %v2782, 1.442695
        %v2880 = vpow.pop %v2879
        %v2881 = vmul.f32 %v2783, 1.442695
        %v2882 = vpow.pop %v2881
        %v2883 = vmul.f32 %v2784, 1.442695
        %v2884 = vpow.pop %v2883
        %v2885 = vmul.f32 %v2785, 1.442695
        %v2886 = vpow.pop %v2885
        %v2887 = vmul.f32 %v2786, 1.442695
        %v2888 = vpow.pop %v2887
        %v2889 = vmul.f32 %v2787, 1.442695
        %v2890 = vpow.pop %v2889
        %v2891 = vmul.f32 %v2788, 1.442695
        %v2892 = vpow.pop %v2891
        %v2893 = vmul.f32 %v2789, 1.442695
        %v2894 = vpow.pop %v2893
        %v2895 = vmul.f32 %v2790, 1.442695
        %v2896 = vpow.pop %v2895
        %v2897 = vmul.f32 %v2791, 1.442695
        %v2898 = vpow.pop %v2897
        %v2899 = vmul.f32 %v2792, 1.442695
        %v2900 = vpow.pop %v2899
        %v2901 = vmul.f32 %v2793, 1.442695
        %v2902 = vpow.pop %v2901
        %v2903 = vmul.f32 %v2794, 1.442695
        %v2904 = vpow.pop %v2903
        %v2905 = vmul.f32 %v2795, 1.442695
        %v2906 = vpow.pop %v2905
        %v2907 = vmul.f32 %v2796, 1.442695
        %v2908 = vpow.pop %v2907
        %v2909 = vmul.f32 %v2797, 1.442695
        %v2910 = vpow.pop %v2909
        %v2911 = vmul.f32 %v2798, 1.442695
        %v2912 = vpow.pop %v2911
        %v2913 = vmul.f32 %v2799, 1.442695
        %v2914 = vpow.pop %v2913
        %v2915 = vmul.f32 %v2800, 1.442695
        %v2916 = vpow.pop %v2915
        %v2917 = vmul.f32 %v2801, 1.442695
        %v2918 = vpow.pop %v2917
        %v2919 = vmul.f32 %v2802, 1.442695
        %v2920 = vpow.pop %v2919
        %v2921 = vmul.f32 %v2803, 1.442695
        %v2922 = vpow.pop %v2921
        %v2923 = vmul.f32 %v2804, 1.442695
        %v2924 = vpow.pop %v2923
        %v2925 = vmul.f32 %v2805, 1.442695
        %v2926 = vpow.pop %v2925
        %v2927 = vmul.f32 %v2806, 1.442695
        %v2928 = vpow.pop %v2927
        %v2929 = vmul.f32 %v2807, 1.442695
        %v2930 = vpow.pop %v2929
        %v2931 = vmul.f32 %v2808, 1.442695
        %v2932 = vpow.pop %v2931
        %v2933 = vmul.f32 %v2809, 1.442695
        %v2934 = vpow.pop %v2933
        %v2935 = vmul.f32 %v2810, 1.442695
        %v2936 = vpow.pop %v2935
        %v2937 = vmul.f32 %v2811, 1.442695
        %v2938 = vpow.pop %v2937
        %v2939 = vmul.f32 %v2812, 1.442695
        %v2940 = vpow.pop %v2939
        %v2941 = vsel %vm1580, %v2814, 0.0
        %2942 = vadd.xlane.f32.xlu0 %v2941
        %v2943 = vpop.xlane.xlu0 %2942
        %v2944 = vsel %vm1580, %v2816, 0.0
        %2945 = vadd.xlane.f32.xlu0 %v2944
        %v2946 = vpop.xlane.xlu0 %2945
        %v2947 = vsel %vm1580, %v2818, 0.0
        %2948 = vadd.xlane.f32.xlu0 %v2947
        %v2949 = vpop.xlane.xlu0 %2948
        %v2950 = vsel %vm1580, %v2820, 0.0
        %2951 = vadd.xlane.f32.xlu0 %v2950
        %v2952 = vpop.xlane.xlu0 %2951
        %v2953 = vsel %vm1580, %v2822, 0.0
        %2954 = vadd.xlane.f32.xlu0 %v2953
        %v2955 = vpop.xlane.xlu0 %2954
        %v2956 = vsel %vm1580, %v2824, 0.0
        %2957 = vadd.xlane.f32.xlu0 %v2956
        %v2958 = vpop.xlane.xlu0 %2957
        %v2959 = vsel %vm1580, %v2826, 0.0
        %2960 = vadd.xlane.f32.xlu0 %v2959
        %v2961 = vpop.xlane.xlu0 %2960
        %v2962 = vsel %vm1580, %v2828, 0.0
        %2963 = vadd.xlane.f32.xlu0 %v2962
        %v2964 = vpop.xlane.xlu0 %2963
        %v2965 = vsel %vm1580, %v2830, 0.0
        %2966 = vadd.xlane.f32.xlu0 %v2965
        %v2967 = vpop.xlane.xlu0 %2966
        %v2968 = vsel %vm1580, %v2832, 0.0
        %2969 = vadd.xlane.f32.xlu0 %v2968
        %v2970 = vpop.xlane.xlu0 %2969
        %v2971 = vsel %vm1580, %v2834, 0.0
        %2972 = vadd.xlane.f32.xlu0 %v2971
        %v2973 = vpop.xlane.xlu0 %2972
        %v2974 = vsel %vm1580, %v2836, 0.0
        %2975 = vadd.xlane.f32.xlu0 %v2974
        %v2976 = vpop.xlane.xlu0 %2975
        %v2977 = vsel %vm1580, %v2838, 0.0
        %2978 = vadd.xlane.f32.xlu0 %v2977
        %v2979 = vpop.xlane.xlu0 %2978
        %v2980 = vsel %vm1580, %v2840, 0.0
        %2981 = vadd.xlane.f32.xlu0 %v2980
        %v2982 = vpop.xlane.xlu0 %2981
        %v2983 = vsel %vm1580, %v2842, 0.0
        %2984 = vadd.xlane.f32.xlu0 %v2983
        %v2985 = vpop.xlane.xlu0 %2984
        %v2986 = vsel %vm1580, %v2844, 0.0
        %2987 = vadd.xlane.f32.xlu0 %v2986
        %v2988 = vpop.xlane.xlu0 %2987
        %v2989 = vsel %vm1580, %v2846, 0.0
        %2990 = vadd.xlane.f32.xlu0 %v2989
        %v2991 = vpop.xlane.xlu0 %2990
        %v2992 = vsel %vm1580, %v2848, 0.0
        %2993 = vadd.xlane.f32.xlu0 %v2992
        %v2994 = vpop.xlane.xlu0 %2993
        %v2995 = vsel %vm1580, %v2850, 0.0
        %2996 = vadd.xlane.f32.xlu0 %v2995
        %v2997 = vpop.xlane.xlu0 %2996
        %v2998 = vsel %vm1580, %v2852, 0.0
        %2999 = vadd.xlane.f32.xlu0 %v2998
        %v3000 = vpop.xlane.xlu0 %2999
        %v3001 = vsel %vm1580, %v2854, 0.0
        %3002 = vadd.xlane.f32.xlu0 %v3001
        %v3003 = vpop.xlane.xlu0 %3002
        %v3004 = vsel %vm1580, %v2856, 0.0
        %3005 = vadd.xlane.f32.xlu0 %v3004
        %v3006 = vpop.xlane.xlu0 %3005
        %v3007 = vsel %vm1580, %v2858, 0.0
        %3008 = vadd.xlane.f32.xlu0 %v3007
        %v3009 = vpop.xlane.xlu0 %3008
        %v3010 = vsel %vm1580, %v2860, 0.0
        %3011 = vadd.xlane.f32.xlu0 %v3010
        %v3012 = vpop.xlane.xlu0 %3011
        %v3013 = vsel %vm1580, %v2862, 0.0
        %3014 = vadd.xlane.f32.xlu0 %v3013
        %v3015 = vpop.xlane.xlu0 %3014
        %v3016 = vsel %vm1580, %v2864, 0.0
        %3017 = vadd.xlane.f32.xlu0 %v3016
        %v3018 = vpop.xlane.xlu0 %3017
        %v3019 = vsel %vm1580, %v2866, 0.0
        %3020 = vadd.xlane.f32.xlu0 %v3019
        %v3021 = vpop.xlane.xlu0 %3020
        %v3022 = vsel %vm1580, %v2868, 0.0
        %3023 = vadd.xlane.f32.xlu0 %v3022
        %v3024 = vpop.xlane.xlu0 %3023
        %v3025 = vsel %vm1580, %v2870, 0.0
        %3026 = vadd.xlane.f32.xlu0 %v3025
        %v3027 = vpop.xlane.xlu0 %3026
        %v3028 = vsel %vm1580, %v2872, 0.0
        %3029 = vadd.xlane.f32.xlu0 %v3028
        %v3030 = vpop.xlane.xlu0 %3029
        %v3031 = vsel %vm1580, %v2874, 0.0
        %3032 = vadd.xlane.f32.xlu0 %v3031
        %v3033 = vpop.xlane.xlu0 %3032
        %v3034 = vsel %vm1580, %v2876, 0.0
        %3035 = vadd.xlane.f32.xlu0 %v3034
        %v3036 = vpop.xlane.xlu0 %3035
        %v3037 = vsel %vm1580, %v2878, 0.0
        %3038 = vadd.xlane.f32.xlu0 %v3037
        %v3039 = vpop.xlane.xlu0 %3038
        %v3040 = vsel %vm1580, %v2880, 0.0
        %3041 = vadd.xlane.f32.xlu0 %v3040
        %v3042 = vpop.xlane.xlu0 %3041
        %v3043 = vsel %vm1580, %v2882, 0.0
        %3044 = vadd.xlane.f32.xlu0 %v3043
        %v3045 = vpop.xlane.xlu0 %3044
        %v3046 = vsel %vm1580, %v2884, 0.0
        %3047 = vadd.xlane.f32.xlu0 %v3046
        %v3048 = vpop.xlane.xlu0 %3047
        %v3049 = vsel %vm1580, %v2886, 0.0
        %3050 = vadd.xlane.f32.xlu0 %v3049
        %v3051 = vpop.xlane.xlu0 %3050
        %v3052 = vsel %vm1580, %v2888, 0.0
        %3053 = vadd.xlane.f32.xlu0 %v3052
        %v3054 = vpop.xlane.xlu0 %3053
        %v3055 = vsel %vm1580, %v2890, 0.0
        %3056 = vadd.xlane.f32.xlu0 %v3055
        %v3057 = vpop.xlane.xlu0 %3056
        %v3058 = vsel %vm1580, %v2892, 0.0
        %3059 = vadd.xlane.f32.xlu0 %v3058
        %v3060 = vpop.xlane.xlu0 %3059
        %v3061 = vsel %vm1580, %v2894, 0.0
        %3062 = vadd.xlane.f32.xlu0 %v3061
        %v3063 = vpop.xlane.xlu0 %3062
        %v3064 = vsel %vm1580, %v2896, 0.0
        %3065 = vadd.xlane.f32.xlu0 %v3064
        %v3066 = vpop.xlane.xlu0 %3065
        %v3067 = vsel %vm1580, %v2898, 0.0
        %3068 = vadd.xlane.f32.xlu0 %v3067
        %v3069 = vpop.xlane.xlu0 %3068
        %v3070 = vsel %vm1580, %v2900, 0.0
        %3071 = vadd.xlane.f32.xlu0 %v3070
        %v3072 = vpop.xlane.xlu0 %3071
        %v3073 = vsel %vm1580, %v2902, 0.0
        %3074 = vadd.xlane.f32.xlu0 %v3073
        %v3075 = vpop.xlane.xlu0 %3074
        %v3076 = vsel %vm1580, %v2904, 0.0
        %3077 = vadd.xlane.f32.xlu0 %v3076
        %v3078 = vpop.xlane.xlu0 %3077
        %v3079 = vsel %vm1580, %v2906, 0.0
        %3080 = vadd.xlane.f32.xlu0 %v3079
        %v3081 = vpop.xlane.xlu0 %3080
        %v3082 = vsel %vm1580, %v2908, 0.0
        %3083 = vadd.xlane.f32.xlu0 %v3082
        %v3084 = vpop.xlane.xlu0 %3083
        %v3085 = vsel %vm1580, %v2910, 0.0
        %3086 = vadd.xlane.f32.xlu0 %v3085
        %v3087 = vpop.xlane.xlu0 %3086
        %v3088 = vsel %vm1580, %v2912, 0.0
        %3089 = vadd.xlane.f32.xlu0 %v3088
        %v3090 = vpop.xlane.xlu0 %3089
        %v3091 = vsel %vm1580, %v2914, 0.0
        %3092 = vadd.xlane.f32.xlu0 %v3091
        %v3093 = vpop.xlane.xlu0 %3092
        %v3094 = vsel %vm1580, %v2916, 0.0
        %3095 = vadd.xlane.f32.xlu0 %v3094
        %v3096 = vpop.xlane.xlu0 %3095
        %v3097 = vsel %vm1580, %v2918, 0.0
        %3098 = vadd.xlane.f32.xlu0 %v3097
        %v3099 = vpop.xlane.xlu0 %3098
        %v3100 = vsel %vm1580, %v2920, 0.0
        %3101 = vadd.xlane.f32.xlu0 %v3100
        %v3102 = vpop.xlane.xlu0 %3101
        %v3103 = vsel %vm1580, %v2922, 0.0
        %3104 = vadd.xlane.f32.xlu0 %v3103
        %v3105 = vpop.xlane.xlu0 %3104
        %v3106 = vsel %vm1580, %v2924, 0.0
        %3107 = vadd.xlane.f32.xlu0 %v3106
        %v3108 = vpop.xlane.xlu0 %3107
        %v3109 = vsel %vm1580, %v2926, 0.0
        %3110 = vadd.xlane.f32.xlu0 %v3109
        %v3111 = vpop.xlane.xlu0 %3110
        %v3112 = vsel %vm1580, %v2928, 0.0
        %3113 = vadd.xlane.f32.xlu0 %v3112
        %v3114 = vpop.xlane.xlu0 %3113
        %v3115 = vsel %vm1580, %v2930, 0.0
        %3116 = vadd.xlane.f32.xlu0 %v3115
        %v3117 = vpop.xlane.xlu0 %3116
        %v3118 = vsel %vm1580, %v2932, 0.0
        %3119 = vadd.xlane.f32.xlu0 %v3118
        %v3120 = vpop.xlane.xlu0 %3119
        %v3121 = vsel %vm1580, %v2934, 0.0
        %3122 = vadd.xlane.f32.xlu0 %v3121
        %v3123 = vpop.xlane.xlu0 %3122
        %v3124 = vsel %vm1580, %v2936, 0.0
        %3125 = vadd.xlane.f32.xlu0 %v3124
        %v3126 = vpop.xlane.xlu0 %3125
        %v3127 = vsel %vm1580, %v2938, 0.0
        %3128 = vadd.xlane.f32.xlu0 %v3127
        %v3129 = vpop.xlane.xlu0 %3128
        %v3130 = vsel %vm1580, %v2940, 0.0
        %3131 = vadd.xlane.f32.xlu0 %v3130
        %v3132 = vpop.xlane.xlu0 %3131
        %v3133 = vrcp.pop %v2943
        %v3134 = vrcp.pop %v2946
        %v3135 = vrcp.pop %v2949
        %v3136 = vrcp.pop %v2952
        %v3137 = vrcp.pop %v2955
        %v3138 = vrcp.pop %v2958
        %v3139 = vrcp.pop %v2961
        %v3140 = vrcp.pop %v2964
        %v3141 = vrcp.pop %v2967
        %v3142 = vrcp.pop %v2970
        %v3143 = vrcp.pop %v2973
        %v3144 = vrcp.pop %v2976
        %v3145 = vrcp.pop %v2979
        %v3146 = vrcp.pop %v2982
        %v3147 = vrcp.pop %v2985
        %v3148 = vrcp.pop %v2988
        %v3149 = vrcp.pop %v2991
        %v3150 = vrcp.pop %v2994
        %v3151 = vrcp.pop %v2997
        %v3152 = vrcp.pop %v3000
        %v3153 = vrcp.pop %v3003
        %v3154 = vrcp.pop %v3006
        %v3155 = vrcp.pop %v3009
        %v3156 = vrcp.pop %v3012
        %v3157 = vrcp.pop %v3015
        %v3158 = vrcp.pop %v3018
        %v3159 = vrcp.pop %v3021
        %v3160 = vrcp.pop %v3024
        %v3161 = vrcp.pop %v3027
        %v3162 = vrcp.pop %v3030
        %v3163 = vrcp.pop %v3033
        %v3164 = vrcp.pop %v3036
        %v3165 = vrcp.pop %v3039
        %v3166 = vrcp.pop %v3042
        %v3167 = vrcp.pop %v3045
        %v3168 = vrcp.pop %v3048
        %v3169 = vrcp.pop %v3051
        %v3170 = vrcp.pop %v3054
        %v3171 = vrcp.pop %v3057
        %v3172 = vrcp.pop %v3060
        %v3173 = vrcp.pop %v3063
        %v3174 = vrcp.pop %v3066
        %v3175 = vrcp.pop %v3069
        %v3176 = vrcp.pop %v3072
        %v3177 = vrcp.pop %v3075
        %v3178 = vrcp.pop %v3078
        %v3179 = vrcp.pop %v3081
        %v3180 = vrcp.pop %v3084
        %v3181 = vrcp.pop %v3087
        %v3182 = vrcp.pop %v3090
        %v3183 = vrcp.pop %v3093
        %v3184 = vrcp.pop %v3096
        %v3185 = vrcp.pop %v3099
        %v3186 = vrcp.pop %v3102
        %v3187 = vrcp.pop %v3105
        %v3188 = vrcp.pop %v3108
        %v3189 = vrcp.pop %v3111
        %v3190 = vrcp.pop %v3114
        %v3191 = vrcp.pop %v3117
        %v3192 = vrcp.pop %v3120
        %v3193 = vrcp.pop %v3123
        %v3194 = vrcp.pop %v3126
        %v3195 = vrcp.pop %v3129
        %v3196 = vrcp.pop %v3132
        %v3197 = vmul.f32 %v2814, %v3133
        %v3198 = vmul.f32 %v2816, %v3134
        %v3199 = vmul.f32 %v2818, %v3135
        %v3200 = vmul.f32 %v2820, %v3136
        %v3201 = vmul.f32 %v2822, %v3137
        %v3202 = vmul.f32 %v2824, %v3138
        %v3203 = vmul.f32 %v2826, %v3139
        %v3204 = vmul.f32 %v2828, %v3140
        %v3205 = vmul.f32 %v2830, %v3141
        %v3206 = vmul.f32 %v2832, %v3142
        %v3207 = vmul.f32 %v2834, %v3143
        %v3208 = vmul.f32 %v2836, %v3144
        %v3209 = vmul.f32 %v2838, %v3145
        %v3210 = vmul.f32 %v2840, %v3146
        %v3211 = vmul.f32 %v2842, %v3147
        %v3212 = vmul.f32 %v2844, %v3148
        %v3213 = vmul.f32 %v2846, %v3149
        %v3214 = vmul.f32 %v2848, %v3150
        %v3215 = vmul.f32 %v2850, %v3151
        %v3216 = vmul.f32 %v2852, %v3152
        %v3217 = vmul.f32 %v2854, %v3153
        %v3218 = vmul.f32 %v2856, %v3154
        %v3219 = vmul.f32 %v2858, %v3155
        %v3220 = vmul.f32 %v2860, %v3156
        %v3221 = vmul.f32 %v2862, %v3157
        %v3222 = vmul.f32 %v2864, %v3158
        %v3223 = vmul.f32 %v2866, %v3159
        %v3224 = vmul.f32 %v2868, %v3160
        %v3225 = vmul.f32 %v2870, %v3161
        %v3226 = vmul.f32 %v2872, %v3162
        %v3227 = vmul.f32 %v2874, %v3163
        %v3228 = vmul.f32 %v2876, %v3164
        %v3229 = vmul.f32 %v2878, %v3165
        %v3230 = vmul.f32 %v2880, %v3166
        %v3231 = vmul.f32 %v2882, %v3167
        %v3232 = vmul.f32 %v2884, %v3168
        %v3233 = vmul.f32 %v2886, %v3169
        %v3234 = vmul.f32 %v2888, %v3170
        %v3235 = vmul.f32 %v2890, %v3171
        %v3236 = vmul.f32 %v2892, %v3172
        %v3237 = vmul.f32 %v2894, %v3173
        %v3238 = vmul.f32 %v2896, %v3174
        %v3239 = vmul.f32 %v2898, %v3175
        %v3240 = vmul.f32 %v2900, %v3176
        %v3241 = vmul.f32 %v2902, %v3177
        %v3242 = vmul.f32 %v2904, %v3178
        %v3243 = vmul.f32 %v2906, %v3179
        %v3244 = vmul.f32 %v2908, %v3180
        %v3245 = vmul.f32 %v2910, %v3181
        %v3246 = vmul.f32 %v2912, %v3182
        %v3247 = vmul.f32 %v2914, %v3183
        %v3248 = vmul.f32 %v2916, %v3184
        %v3249 = vmul.f32 %v2918, %v3185
        %v3250 = vmul.f32 %v2920, %v3186
        %v3251 = vmul.f32 %v2922, %v3187
        %v3252 = vmul.f32 %v2924, %v3188
        %v3253 = vmul.f32 %v2926, %v3189
        %v3254 = vmul.f32 %v2928, %v3190
        %v3255 = vmul.f32 %v2930, %v3191
        %v3256 = vmul.f32 %v2932, %v3192
        %v3257 = vmul.f32 %v2934, %v3193
        %v3258 = vmul.f32 %v2936, %v3194
        %v3259 = vmul.f32 %v2938, %v3195
        %v3260 = vmul.f32 %v2940, %v3196
        %v3261 = vpack.c.bf16 %v3198, %v3197
        %v3262 = vpack.c.bf16 %v3200, %v3199
        %v3263 = vpack.c.bf16 %v3202, %v3201
        %v3264 = vpack.c.bf16 %v3204, %v3203
        %v3265 = vpack.c.bf16 %v3206, %v3205
        %v3266 = vpack.c.bf16 %v3208, %v3207
        %v3267 = vpack.c.bf16 %v3210, %v3209
        %v3268 = vpack.c.bf16 %v3212, %v3211
        %v3269 = vpack.c.bf16 %v3214, %v3213
        %v3270 = vpack.c.bf16 %v3216, %v3215
        %v3271 = vpack.c.bf16 %v3218, %v3217
        %v3272 = vpack.c.bf16 %v3220, %v3219
        %v3273 = vpack.c.bf16 %v3222, %v3221
        %v3274 = vpack.c.bf16 %v3224, %v3223
        %v3275 = vpack.c.bf16 %v3226, %v3225
        %v3276 = vpack.c.bf16 %v3228, %v3227
        %v3277 = vpack.c.bf16 %v3230, %v3229
        %v3278 = vpack.c.bf16 %v3232, %v3231
        %v3279 = vpack.c.bf16 %v3234, %v3233
        %v3280 = vpack.c.bf16 %v3236, %v3235
        %v3281 = vpack.c.bf16 %v3238, %v3237
        %v3282 = vpack.c.bf16 %v3240, %v3239
        %v3283 = vpack.c.bf16 %v3242, %v3241
        %v3284 = vpack.c.bf16 %v3244, %v3243
        %v3285 = vpack.c.bf16 %v3246, %v3245
        %v3286 = vpack.c.bf16 %v3248, %v3247
        %v3287 = vpack.c.bf16 %v3250, %v3249
        %v3288 = vpack.c.bf16 %v3252, %v3251
        %v3289 = vpack.c.bf16 %v3254, %v3253
        %v3290 = vpack.c.bf16 %v3256, %v3255
        %v3291 = vpack.c.bf16 %v3258, %v3257
        %v3292 = vpack.c.bf16 %v3260, %v3259
        %v3294 = vsel %vm1580, %v3261, 0
        %v3297 = vsel %vm1580, %v3262, 0
        %3299 = vmatprep.subr.bf16.mxu0 0
        %3300 = vmatpush1.bf16.msra.mxu0 %v1366
        %3301 = vmatprep.subr.bf16.mxu0 0
        %3302 = vmatpush1.bf16.msra.mxu0 %v1369
        %3303 = vmatprep.subr.bf16.mxu0 0
        %3304 = vmatpush1.bf16.msra.mxu0 0
        %3305 = vmatprep.subr.bf16.mxu0 0
        %3306 = vmatpush1.bf16.msra.mxu0 0
        %3307 = vmatprep.subr.bf16.mxu0 0
        %3308 = vmatpush1.bf16.msra.mxu0 0
        %3309 = vmatprep.subr.bf16.mxu0 0
        %3310 = vmatpush1.bf16.msra.mxu0 0
        %3311 = vmatprep.subr.bf16.mxu0 0
        %3312 = vmatpush1.bf16.msra.mxu0 0
        %3313 = vmatprep.subr.bf16.mxu0 0
        %3314 = vmatpush1.bf16.msra.mxu0 0
        %3315 = vmatprep.subr.bf16.mxu0 0
        %3316 = vmatpush1.bf16.msra.mxu0 0
        %3317 = vmatprep.subr.bf16.mxu0 0
        %3318 = vmatpush1.bf16.msra.mxu0 0
        %3319 = vmatprep.subr.bf16.mxu0 0
        %3320 = vmatpush1.bf16.msra.mxu0 0
        %3321 = vmatprep.subr.bf16.mxu0 0
        %3322 = vmatpush1.bf16.msra.mxu0 0
        %3323 = vmatprep.subr.bf16.mxu0 0
        %3324 = vmatpush1.bf16.msra.mxu0 0
        %3325 = vmatprep.subr.bf16.mxu0 0
        %3326 = vmatpush1.bf16.msra.mxu0 0
        %3327 = vmatprep.subr.bf16.mxu0 0
        %3328 = vmatpush1.bf16.msra.mxu0 0
        %3329 = vmatprep.subr.bf16.mxu0 0
        %3330 = vmatpush1.bf16.msra.mxu0 0
        %3331 = vmatprep.mubr.bf16.mxu0 0
        %3332 = vmatmul.mubr.bf16.gmra.mrb[0].mxu0 %v3294
        %v3333 = vpop.f32.mrb[0].mxu0
        %v3334 = vadd.f32 0.0, %v3333
        %v3335 = vpop.f32.mrb[0].mxu0
        %v3336 = vpop.f32.mrb[0].mxu0
        %v3337 = vadd.f32 0.0, %v3336
        %v3338 = vpop.f32.mrb[0].mxu0
        %3339 = vmatprep.mubr.bf16.mxu0 0
        %3340 = vmatmul.mubr.bf16.gmra.mrb[0].mxu0 %v3297
        %v3341 = vpop.f32.mrb[0].mxu0
        %v3342 = vadd.f32 0.0, %v3341
        %v3343 = vpop.f32.mrb[0].mxu0
        %v3344 = vpop.f32.mrb[0].mxu0
        %v3345 = vadd.f32 0.0, %v3344
        %v3346 = vpop.f32.mrb[0].mxu0
        %3347 = vdwg.mxu0
        %v3349 = vsel %vm1580, %v3263, 0
        %v3352 = vsel %vm1580, %v3264, 0
        %3354 = vmatprep.subr.bf16.mxu0 0
        %3355 = vmatpush1.bf16.msra.mxu0 %v1372
        %3356 = vmatprep.subr.bf16.mxu0 0
        %3357 = vmatpush1.bf16.msra.mxu0 %v1375
        %3358 = vmatprep.subr.bf16.mxu0 0
        %3359 = vmatpush1.bf16.msra.mxu0 0
        %3360 = vmatprep.subr.bf16.mxu0 0
        %3361 = vmatpush1.bf16.msra.mxu0 0
        %3362 = vmatprep.subr.bf16.mxu0 0
        %3363 = vmatpush1.bf16.msra.mxu0 0
        %3364 = vmatprep.subr.bf16.mxu0 0
        %3365 = vmatpush1.bf16.msra.mxu0 0
        %3366 = vmatprep.subr.bf16.mxu0 0
        %3367 = vmatpush1.bf16.msra.mxu0 0
        %3368 = vmatprep.subr.bf16.mxu0 0
        %3369 = vmatpush1.bf16.msra.mxu0 0
        %3370 = vmatprep.subr.bf16.mxu0 0
        %3371 = vmatpush1.bf16.msra.mxu0 0
        %3372 = vmatprep.subr.bf16.mxu0 0
        %3373 = vmatpush1.bf16.msra.mxu0 0
        %3374 = vmatprep.subr.bf16.mxu0 0
        %3375 = vmatpush1.bf16.msra.mxu0 0
        %3376 = vmatprep.subr.bf16.mxu0 0
        %3377 = vmatpush1.bf16.msra.mxu0 0
        %3378 = vmatprep.subr.bf16.mxu0 0
        %3379 = vmatpush1.bf16.msra.mxu0 0
        %3380 = vmatprep.subr.bf16.mxu0 0
        %3381 = vmatpush1.bf16.msra.mxu0 0
        %3382 = vmatprep.subr.bf16.mxu0 0
        %3383 = vmatpush1.bf16.msra.mxu0 0
        %3384 = vmatprep.subr.bf16.mxu0 0
        %3385 = vmatpush1.bf16.msra.mxu0 0
        %3386 = vmatprep.mubr.bf16.mxu0 0
        %3387 = vmatmul.mubr.bf16.gmra.mrb[0].mxu0 %v3349
        %v3388 = vpop.f32.mrb[0].mxu0
        %v3389 = vadd.f32 0.0, %v3388
        %v3390 = vpop.f32.mrb[0].mxu0
        %v3391 = vpop.f32.mrb[0].mxu0
        %v3392 = vadd.f32 0.0, %v3391
        %v3393 = vpop.f32.mrb[0].mxu0
        %3394 = vmatprep.mubr.bf16.mxu0 0
        %3395 = vmatmul.mubr.bf16.gmra.mrb[0].mxu0 %v3352
        %v3396 = vpop.f32.mrb[0].mxu0
        %v3397 = vadd.f32 0.0, %v3396
        %v3398 = vpop.f32.mrb[0].mxu0
        %v3399 = vpop.f32.mrb[0].mxu0
        %v3400 = vadd.f32 0.0, %v3399
        %v3401 = vpop.f32.mrb[0].mxu0
        %3402 = vdwg.mxu0
        %v3404 = vsel %vm1580, %v3265, 0
        %v3407 = vsel %vm1580, %v3266, 0
        %3409 = vmatprep.subr.bf16.mxu0 0
        %3410 = vmatpush1.bf16.msra.mxu0 %v1378
        %3411 = vmatprep.subr.bf16.mxu0 0
        %3412 = vmatpush1.bf16.msra.mxu0 %v1381
        %3413 = vmatprep.subr.bf16.mxu0 0
        %3414 = vmatpush1.bf16.msra.mxu0 0
        %3415 = vmatprep.subr.bf16.mxu0 0
        %3416 = vmatpush1.bf16.msra.mxu0 0
        %3417 = vmatprep.subr.bf16.mxu0 0
        %3418 = vmatpush1.bf16.msra.mxu0 0
        %3419 = vmatprep.subr.bf16.mxu0 0
        %3420 = vmatpush1.bf16.msra.mxu0 0
        %3421 = vmatprep.subr.bf16.mxu0 0
        %3422 = vmatpush1.bf16.msra.mxu0 0
        %3423 = vmatprep.subr.bf16.mxu0 0
        %3424 = vmatpush1.bf16.msra.mxu0 0
        %3425 = vmatprep.subr.bf16.mxu0 0
        %3426 = vmatpush1.bf16.msra.mxu0 0
        %3427 = vmatprep.subr.bf16.mxu0 0
        %3428 = vmatpush1.bf16.msra.mxu0 0
        %3429 = vmatprep.subr.bf16.mxu0 0
        %3430 = vmatpush1.bf16.msra.mxu0 0
        %3431 = vmatprep.subr.bf16.mxu0 0
        %3432 = vmatpush1.bf16.msra.mxu0 0
        %3433 = vmatprep.subr.bf16.mxu0 0
        %3434 = vmatpush1.bf16.msra.mxu0 0
        %3435 = vmatprep.subr.bf16.mxu0 0
        %3436 = vmatpush1.bf16.msra.mxu0 0
        %3437 = vmatprep.subr.bf16.mxu0 0
        %3438 = vmatpush1.bf16.msra.mxu0 0
        %3439 = vmatprep.subr.bf16.mxu0 0
        %3440 = vmatpush1.bf16.msra.mxu0 0
        %3441 = vmatprep.mubr.bf16.mxu0 0
        %3442 = vmatmul.mubr.bf16.gmra.mrb[0].mxu0 %v3404
        %v3443 = vpop.f32.mrb[0].mxu0
        %v3444 = vadd.f32 0.0, %v3443
        %v3445 = vpop.f32.mrb[0].mxu0
        %v3446 = vpop.f32.mrb[0].mxu0
        %v3447 = vadd.f32 0.0, %v3446
        %v3448 = vpop.f32.mrb[0].mxu0
        %3449 = vmatprep.mubr.bf16.mxu0 0
        %3450 = vmatmul.mubr.bf16.gmra.mrb[0].mxu0 %v3407
        %v3451 = vpop.f32.mrb[0].mxu0
        %v3452 = vadd.f32 0.0, %v3451
        %v3453 = vpop.f32.mrb[0].mxu0
        %v3454 = vpop.f32.mrb[0].mxu0
        %v3455 = vadd.f32 0.0, %v3454
        %v3456 = vpop.f32.mrb[0].mxu0
        %3457 = vdwg.mxu0
        %v3459 = vsel %vm1580, %v3267, 0
        %v3462 = vsel %vm1580, %v3268, 0
        %3464 = vmatprep.subr.bf16.mxu0 0
        %3465 = vmatpush1.bf16.msra.mxu0 %v1384
        %3466 = vmatprep.subr.bf16.mxu0 0
        %3467 = vmatpush1.bf16.msra.mxu0 %v1387
        %3468 = vmatprep.subr.bf16.mxu0 0
        %3469 = vmatpush1.bf16.msra.mxu0 0
        %3470 = vmatprep.subr.bf16.mxu0 0
        %3471 = vmatpush1.bf16.msra.mxu0 0
        %3472 = vmatprep.subr.bf16.mxu0 0
        %3473 = vmatpush1.bf16.msra.mxu0 0
        %3474 = vmatprep.subr.bf16.mxu0 0
        %3475 = vmatpush1.bf16.msra.mxu0 0
        %3476 = vmatprep.subr.bf16.mxu0 0
        %3477 = vmatpush1.bf16.msra.mxu0 0
        %3478 = vmatprep.subr.bf16.mxu0 0
        %3479 = vmatpush1.bf16.msra.mxu0 0
        %3480 = vmatprep.subr.bf16.mxu0 0
        %3481 = vmatpush1.bf16.msra.mxu0 0
        %3482 = vmatprep.subr.bf16.mxu0 0
        %3483 = vmatpush1.bf16.msra.mxu0 0
        %3484 = vmatprep.subr.bf16.mxu0 0
        %3485 = vmatpush1.bf16.msra.mxu0 0
        %3486 = vmatprep.subr.bf16.mxu0 0
        %3487 = vmatpush1.bf16.msra.mxu0 0
        %3488 = vmatprep.subr.bf16.mxu0 0
        %3489 = vmatpush1.bf16.msra.mxu0 0
        %3490 = vmatprep.subr.bf16.mxu0 0
        %3491 = vmatpush1.bf16.msra.mxu0 0
        %3492 = vmatprep.subr.bf16.mxu0 0
        %3493 = vmatpush1.bf16.msra.mxu0 0
        %3494 = vmatprep.subr.bf16.mxu0 0
        %3495 = vmatpush1.bf16.msra.mxu0 0
        %3496 = vmatprep.mubr.bf16.mxu0 0
        %3497 = vmatmul.mubr.bf16.gmra.mrb[0].mxu0 %v3459
        %v3498 = vpop.f32.mrb[0].mxu0
        %v3499 = vadd.f32 0.0, %v3498
        %v3500 = vpop.f32.mrb[0].mxu0
        %v3501 = vpop.f32.mrb[0].mxu0
        %v3502 = vadd.f32 0.0, %v3501
        %v3503 = vpop.f32.mrb[0].mxu0
        %3504 = vmatprep.mubr.bf16.mxu0 0
        %3505 = vmatmul.mubr.bf16.gmra.mrb[0].mxu0 %v3462
        %v3506 = vpop.f32.mrb[0].mxu0
        %v3507 = vadd.f32 0.0, %v3506
        %v3508 = vpop.f32.mrb[0].mxu0
        %v3509 = vpop.f32.mrb[0].mxu0
        %v3510 = vadd.f32 0.0, %v3509
        %v3511 = vpop.f32.mrb[0].mxu0
        %3512 = vdwg.mxu0
        %v3514 = vsel %vm1580, %v3269, 0
        %v3517 = vsel %vm1580, %v3270, 0
        %3519 = vmatprep.subr.bf16.mxu0 0
        %3520 = vmatpush1.bf16.msra.mxu0 %v1509
        %3521 = vmatprep.subr.bf16.mxu0 0
        %3522 = vmatpush1.bf16.msra.mxu0 %v1511
        %3523 = vmatprep.subr.bf16.mxu0 0
        %3524 = vmatpush1.bf16.msra.mxu0 0
        %3525 = vmatprep.subr.bf16.mxu0 0
        %3526 = vmatpush1.bf16.msra.mxu0 0
        %3527 = vmatprep.subr.bf16.mxu0 0
        %3528 = vmatpush1.bf16.msra.mxu0 0
        %3529 = vmatprep.subr.bf16.mxu0 0
        %3530 = vmatpush1.bf16.msra.mxu0 0
        %3531 = vmatprep.subr.bf16.mxu0 0
        %3532 = vmatpush1.bf16.msra.mxu0 0
        %3533 = vmatprep.subr.bf16.mxu0 0
        %3534 = vmatpush1.bf16.msra.mxu0 0
        %3535 = vmatprep.subr.bf16.mxu0 0
        %3536 = vmatpush1.bf16.msra.mxu0 0
        %3537 = vmatprep.subr.bf16.mxu0 0
        %3538 = vmatpush1.bf16.msra.mxu0 0
        %3539 = vmatprep.subr.bf16.mxu0 0
        %3540 = vmatpush1.bf16.msra.mxu0 0
        %3541 = vmatprep.subr.bf16.mxu0 0
        %3542 = vmatpush1.bf16.msra.mxu0 0
        %3543 = vmatprep.subr.bf16.mxu0 0
        %3544 = vmatpush1.bf16.msra.mxu0 0
        %3545 = vmatprep.subr.bf16.mxu0 0
        %3546 = vmatpush1.bf16.msra.mxu0 0
        %3547 = vmatprep.subr.bf16.mxu0 0
        %3548 = vmatpush1.bf16.msra.mxu0 0
        %3549 = vmatprep.subr.bf16.mxu0 0
        %3550 = vmatpush1.bf16.msra.mxu0 0
        %3551 = vmatprep.mubr.bf16.mxu0 0
        %3552 = vmatmul.mubr.bf16.gmra.mrb[0].mxu0 %v3514
        %v3553 = vpop.f32.mrb[0].mxu0
        %v3554 = vadd.f32 0.0, %v3553
        %v3555 = vpop.f32.mrb[0].mxu0
        %v3556 = vpop.f32.mrb[0].mxu0
        %v3557 = vadd.f32 0.0, %v3556
        %v3558 = vpop.f32.mrb[0].mxu0
        %3559 = vmatprep.mubr.bf16.mxu0 0
        %3560 = vmatmul.mubr.bf16.gmra.mrb[0].mxu0 %v3517
        %v3561 = vpop.f32.mrb[0].mxu0
        %v3562 = vadd.f32 0.0, %v3561
        %v3563 = vpop.f32.mrb[0].mxu0
        %v3564 = vpop.f32.mrb[0].mxu0
        %v3565 = vadd.f32 0.0, %v3564
        %v3566 = vpop.f32.mrb[0].mxu0
        %3567 = vdwg.mxu0
        %v3569 = vsel %vm1580, %v3271, 0
        %v3572 = vsel %vm1580, %v3272, 0
        %3574 = vmatprep.subr.bf16.mxu0 0
        %3575 = vmatpush1.bf16.msra.mxu0 %v1513
        %3576 = vmatprep.subr.bf16.mxu0 0
        %3577 = vmatpush1.bf16.msra.mxu0 %v1515
        %3578 = vmatprep.subr.bf16.mxu0 0
        %3579 = vmatpush1.bf16.msra.mxu0 0
        %3580 = vmatprep.subr.bf16.mxu0 0
        %3581 = vmatpush1.bf16.msra.mxu0 0
        %3582 = vmatprep.subr.bf16.mxu0 0
        %3583 = vmatpush1.bf16.msra.mxu0 0
        %3584 = vmatprep.subr.bf16.mxu0 0
        %3585 = vmatpush1.bf16.msra.mxu0 0
        %3586 = vmatprep.subr.bf16.mxu0 0
        %3587 = vmatpush1.bf16.msra.mxu0 0
        %3588 = vmatprep.subr.bf16.mxu0 0
        %3589 = vmatpush1.bf16.msra.mxu0 0
        %3590 = vmatprep.subr.bf16.mxu0 0
        %3591 = vmatpush1.bf16.msra.mxu0 0
        %3592 = vmatprep.subr.bf16.mxu0 0
        %3593 = vmatpush1.bf16.msra.mxu0 0
        %3594 = vmatprep.subr.bf16.mxu0 0
        %3595 = vmatpush1.bf16.msra.mxu0 0
        %3596 = vmatprep.subr.bf16.mxu0 0
        %3597 = vmatpush1.bf16.msra.mxu0 0
        %3598 = vmatprep.subr.bf16.mxu0 0
        %3599 = vmatpush1.bf16.msra.mxu0 0
        %3600 = vmatprep.subr.bf16.mxu0 0
        %3601 = vmatpush1.bf16.msra.mxu0 0
        %3602 = vmatprep.subr.bf16.mxu0 0
        %3603 = vmatpush1.bf16.msra.mxu0 0
        %3604 = vmatprep.subr.bf16.mxu0 0
        %3605 = vmatpush1.bf16.msra.mxu0 0
        %3606 = vmatprep.mubr.bf16.mxu0 0
        %3607 = vmatmul.mubr.bf16.gmra.mrb[0].mxu0 %v3569
        %v3608 = vpop.f32.mrb[0].mxu0
        %v3609 = vadd.f32 0.0, %v3608
        %v3610 = vpop.f32.mrb[0].mxu0
        %v3611 = vpop.f32.mrb[0].mxu0
        %v3612 = vadd.f32 0.0, %v3611
        %v3613 = vpop.f32.mrb[0].mxu0
        %3614 = vmatprep.mubr.bf16.mxu0 0
        %3615 = vmatmul.mubr.bf16.gmra.mrb[0].mxu0 %v3572
        %v3616 = vpop.f32.mrb[0].mxu0
        %v3617 = vadd.f32 0.0, %v3616
        %v3618 = vpop.f32.mrb[0].mxu0
        %v3619 = vpop.f32.mrb[0].mxu0
        %v3620 = vadd.f32 0.0, %v3619
        %v3621 = vpop.f32.mrb[0].mxu0
        %3622 = vdwg.mxu0
        %v3624 = vsel %vm1580, %v3273, 0
        %v3627 = vsel %vm1580, %v3274, 0
        %3629 = vmatprep.subr.bf16.mxu0 0
        %3630 = vmatpush1.bf16.msra.mxu0 %v1517
        %3631 = vmatprep.subr.bf16.mxu0 0
        %3632 = vmatpush1.bf16.msra.mxu0 %v1519
        %3633 = vmatprep.subr.bf16.mxu0 0
        %3634 = vmatpush1.bf16.msra.mxu0 0
        %3635 = vmatprep.subr.bf16.mxu0 0
        %3636 = vmatpush1.bf16.msra.mxu0 0
        %3637 = vmatprep.subr.bf16.mxu0 0
        %3638 = vmatpush1.bf16.msra.mxu0 0
        %3639 = vmatprep.subr.bf16.mxu0 0
        %3640 = vmatpush1.bf16.msra.mxu0 0
        %3641 = vmatprep.subr.bf16.mxu0 0
        %3642 = vmatpush1.bf16.msra.mxu0 0
        %3643 = vmatprep.subr.bf16.mxu0 0
        %3644 = vmatpush1.bf16.msra.mxu0 0
        %3645 = vmatprep.subr.bf16.mxu0 0
        %3646 = vmatpush1.bf16.msra.mxu0 0
        %3647 = vmatprep.subr.bf16.mxu0 0
        %3648 = vmatpush1.bf16.msra.mxu0 0
        %3649 = vmatprep.subr.bf16.mxu0 0
        %3650 = vmatpush1.bf16.msra.mxu0 0
        %3651 = vmatprep.subr.bf16.mxu0 0
        %3652 = vmatpush1.bf16.msra.mxu0 0
        %3653 = vmatprep.subr.bf16.mxu0 0
        %3654 = vmatpush1.bf16.msra.mxu0 0
        %3655 = vmatprep.subr.bf16.mxu0 0
        %3656 = vmatpush1.bf16.msra.mxu0 0
        %3657 = vmatprep.subr.bf16.mxu0 0
        %3658 = vmatpush1.bf16.msra.mxu0 0
        %3659 = vmatprep.subr.bf16.mxu0 0
        %3660 = vmatpush1.bf16.msra.mxu0 0
        %3661 = vmatprep.mubr.bf16.mxu0 0
        %3662 = vmatmul.mubr.bf16.gmra.mrb[0].mxu0 %v3624
        %v3663 = vpop.f32.mrb[0].mxu0
        %v3664 = vadd.f32 0.0, %v3663
        %v3665 = vpop.f32.mrb[0].mxu0
        %v3666 = vpop.f32.mrb[0].mxu0
        %v3667 = vadd.f32 0.0, %v3666
        %v3668 = vpop.f32.mrb[0].mxu0
        %3669 = vmatprep.mubr.bf16.mxu0 0
        %3670 = vmatmul.mubr.bf16.gmra.mrb[0].mxu0 %v3627
        %v3671 = vpop.f32.mrb[0].mxu0
        %v3672 = vadd.f32 0.0, %v3671
        %v3673 = vpop.f32.mrb[0].mxu0
        %v3674 = vpop.f32.mrb[0].mxu0
        %v3675 = vadd.f32 0.0, %v3674
        %v3676 = vpop.f32.mrb[0].mxu0
        %3677 = vdwg.mxu0
        %v3679 = vsel %vm1580, %v3275, 0
        %v3682 = vsel %vm1580, %v3276, 0
        %3684 = vmatprep.subr.bf16.mxu0 0
        %3685 = vmatpush1.bf16.msra.mxu0 %v1521
        %3686 = vmatprep.subr.bf16.mxu0 0
        %3687 = vmatpush1.bf16.msra.mxu0 %v1523
        %3688 = vmatprep.subr.bf16.mxu0 0
        %3689 = vmatpush1.bf16.msra.mxu0 0
        %3690 = vmatprep.subr.bf16.mxu0 0
        %3691 = vmatpush1.bf16.msra.mxu0 0
        %3692 = vmatprep.subr.bf16.mxu0 0
        %3693 = vmatpush1.bf16.msra.mxu0 0
        %3694 = vmatprep.subr.bf16.mxu0 0
        %3695 = vmatpush1.bf16.msra.mxu0 0
        %3696 = vmatprep.subr.bf16.mxu0 0
        %3697 = vmatpush1.bf16.msra.mxu0 0
        %3698 = vmatprep.subr.bf16.mxu0 0
        %3699 = vmatpush1.bf16.msra.mxu0 0
        %3700 = vmatprep.subr.bf16.mxu0 0
        %3701 = vmatpush1.bf16.msra.mxu0 0
        %3702 = vmatprep.subr.bf16.mxu0 0
        %3703 = vmatpush1.bf16.msra.mxu0 0
        %3704 = vmatprep.subr.bf16.mxu0 0
        %3705 = vmatpush1.bf16.msra.mxu0 0
        %3706 = vmatprep.subr.bf16.mxu0 0
        %3707 = vmatpush1.bf16.msra.mxu0 0
        %3708 = vmatprep.subr.bf16.mxu0 0
        %3709 = vmatpush1.bf16.msra.mxu0 0
        %3710 = vmatprep.subr.bf16.mxu0 0
        %3711 = vmatpush1.bf16.msra.mxu0 0
        %3712 = vmatprep.subr.bf16.mxu0 0
        %3713 = vmatpush1.bf16.msra.mxu0 0
        %3714 = vmatprep.subr.bf16.mxu0 0
        %3715 = vmatpush1.bf16.msra.mxu0 0
        %3716 = vmatprep.mubr.bf16.mxu0 0
        %3717 = vmatmul.mubr.bf16.gmra.mrb[0].mxu0 %v3679
        %v3718 = vpop.f32.mrb[0].mxu0
        %v3719 = vadd.f32 0.0, %v3718
        %v3720 = vpop.f32.mrb[0].mxu0
        %v3721 = vpop.f32.mrb[0].mxu0
        %v3722 = vadd.f32 0.0, %v3721
        %v3723 = vpop.f32.mrb[0].mxu0
        %3724 = vmatprep.mubr.bf16.mxu0 0
        %3725 = vmatmul.mubr.bf16.gmra.mrb[0].mxu0 %v3682
        %v3726 = vpop.f32.mrb[0].mxu0
        %v3727 = vadd.f32 0.0, %v3726
        %v3728 = vpop.f32.mrb[0].mxu0
        %v3729 = vpop.f32.mrb[0].mxu0
        %v3730 = vadd.f32 0.0, %v3729
        %v3731 = vpop.f32.mrb[0].mxu0
        %3732 = vdwg.mxu0
        %v3734 = vsel %vm1580, %v3277, 0
        %v3737 = vsel %vm1580, %v3278, 0
        %3739 = vmatprep.subr.bf16.mxu0 0
        %3740 = vmatpush1.bf16.msra.mxu0 %v1533
        %3741 = vmatprep.subr.bf16.mxu0 0
        %3742 = vmatpush1.bf16.msra.mxu0 %v1535
        %3743 = vmatprep.subr.bf16.mxu0 0
        %3744 = vmatpush1.bf16.msra.mxu0 0
        %3745 = vmatprep.subr.bf16.mxu0 0
        %3746 = vmatpush1.bf16.msra.mxu0 0
        %3747 = vmatprep.subr.bf16.mxu0 0
        %3748 = vmatpush1.bf16.msra.mxu0 0
        %3749 = vmatprep.subr.bf16.mxu0 0
        %3750 = vmatpush1.bf16.msra.mxu0 0
        %3751 = vmatprep.subr.bf16.mxu0 0
        %3752 = vmatpush1.bf16.msra.mxu0 0
        %3753 = vmatprep.subr.bf16.mxu0 0
        %3754 = vmatpush1.bf16.msra.mxu0 0
        %3755 = vmatprep.subr.bf16.mxu0 0
        %3756 = vmatpush1.bf16.msra.mxu0 0
        %3757 = vmatprep.subr.bf16.mxu0 0
        %3758 = vmatpush1.bf16.msra.mxu0 0
        %3759 = vmatprep.subr.bf16.mxu0 0
        %3760 = vmatpush1.bf16.msra.mxu0 0
        %3761 = vmatprep.subr.bf16.mxu0 0
        %3762 = vmatpush1.bf16.msra.mxu0 0
        %3763 = vmatprep.subr.bf16.mxu0 0
        %3764 = vmatpush1.bf16.msra.mxu0 0
        %3765 = vmatprep.subr.bf16.mxu0 0
        %3766 = vmatpush1.bf16.msra.mxu0 0
        %3767 = vmatprep.subr.bf16.mxu0 0
        %3768 = vmatpush1.bf16.msra.mxu0 0
        %3769 = vmatprep.subr.bf16.mxu0 0
        %3770 = vmatpush1.bf16.msra.mxu0 0
        %3771 = vmatprep.mubr.bf16.mxu0 0
        %3772 = vmatmul.mubr.bf16.gmra.mrb[0].mxu0 %v3734
        %v3773 = vpop.f32.mrb[0].mxu0
        %v3774 = vadd.f32 0.0, %v3773
        %v3775 = vpop.f32.mrb[0].mxu0
        %v3776 = vpop.f32.mrb[0].mxu0
        %v3777 = vadd.f32 0.0, %v3776
        %v3778 = vpop.f32.mrb[0].mxu0
        %3779 = vmatprep.mubr.bf16.mxu0 0
        %3780 = vmatmul.mubr.bf16.gmra.mrb[0].mxu0 %v3737
        %v3781 = vpop.f32.mrb[0].mxu0
        %v3782 = vadd.f32 0.0, %v3781
        %v3783 = vpop.f32.mrb[0].mxu0
        %v3784 = vpop.f32.mrb[0].mxu0
        %v3785 = vadd.f32 0.0, %v3784
        %v3786 = vpop.f32.mrb[0].mxu0
        %3787 = vdwg.mxu0
        %v3789 = vsel %vm1580, %v3279, 0
        %v3792 = vsel %vm1580, %v3280, 0
        %3794 = vmatprep.subr.bf16.mxu0 0
        %3795 = vmatpush1.bf16.msra.mxu0 %v1537
        %3796 = vmatprep.subr.bf16.mxu0 0
        %3797 = vmatpush1.bf16.msra.mxu0 %v1539
        %3798 = vmatprep.subr.bf16.mxu0 0
        %3799 = vmatpush1.bf16.msra.mxu0 0
        %3800 = vmatprep.subr.bf16.mxu0 0
        %3801 = vmatpush1.bf16.msra.mxu0 0
        %3802 = vmatprep.subr.bf16.mxu0 0
        %3803 = vmatpush1.bf16.msra.mxu0 0
        %3804 = vmatprep.subr.bf16.mxu0 0
        %3805 = vmatpush1.bf16.msra.mxu0 0
        %3806 = vmatprep.subr.bf16.mxu0 0
        %3807 = vmatpush1.bf16.msra.mxu0 0
        %3808 = vmatprep.subr.bf16.mxu0 0
        %3809 = vmatpush1.bf16.msra.mxu0 0
        %3810 = vmatprep.subr.bf16.mxu0 0
        %3811 = vmatpush1.bf16.msra.mxu0 0
        %3812 = vmatprep.subr.bf16.mxu0 0
        %3813 = vmatpush1.bf16.msra.mxu0 0
        %3814 = vmatprep.subr.bf16.mxu0 0
        %3815 = vmatpush1.bf16.msra.mxu0 0
        %3816 = vmatprep.subr.bf16.mxu0 0
        %3817 = vmatpush1.bf16.msra.mxu0 0
        %3818 = vmatprep.subr.bf16.mxu0 0
        %3819 = vmatpush1.bf16.msra.mxu0 0
        %3820 = vmatprep.subr.bf16.mxu0 0
        %3821 = vmatpush1.bf16.msra.mxu0 0
        %3822 = vmatprep.subr.bf16.mxu0 0
        %3823 = vmatpush1.bf16.msra.mxu0 0
        %3824 = vmatprep.subr.bf16.mxu0 0
        %3825 = vmatpush1.bf16.msra.mxu0 0
        %3826 = vmatprep.mubr.bf16.mxu0 0
        %3827 = vmatmul.mubr.bf16.gmra.mrb[0].mxu0 %v3789
        %v3828 = vpop.f32.mrb[0].mxu0
        %v3829 = vadd.f32 0.0, %v3828
        %v3830 = vpop.f32.mrb[0].mxu0
        %v3831 = vpop.f32.mrb[0].mxu0
        %v3832 = vadd.f32 0.0, %v3831
        %v3833 = vpop.f32.mrb[0].mxu0
        %3834 = vmatprep.mubr.bf16.mxu0 0
        %3835 = vmatmul.mubr.bf16.gmra.mrb[0].mxu0 %v3792
        %v3836 = vpop.f32.mrb[0].mxu0
        %v3837 = vadd.f32 0.0, %v3836
        %v3838 = vpop.f32.mrb[0].mxu0
        %v3839 = vpop.f32.mrb[0].mxu0
        %v3840 = vadd.f32 0.0, %v3839
        %v3841 = vpop.f32.mrb[0].mxu0
        %3842 = vdwg.mxu0
        %v3844 = vsel %vm1580, %v3281, 0
        %v3847 = vsel %vm1580, %v3282, 0
        %3849 = vmatprep.subr.bf16.mxu0 0
        %3850 = vmatpush1.bf16.msra.mxu0 %v1541
        %3851 = vmatprep.subr.bf16.mxu0 0
        %3852 = vmatpush1.bf16.msra.mxu0 %v1543
        %3853 = vmatprep.subr.bf16.mxu0 0
        %3854 = vmatpush1.bf16.msra.mxu0 0
        %3855 = vmatprep.subr.bf16.mxu0 0
        %3856 = vmatpush1.bf16.msra.mxu0 0
        %3857 = vmatprep.subr.bf16.mxu0 0
        %3858 = vmatpush1.bf16.msra.mxu0 0
        %3859 = vmatprep.subr.bf16.mxu0 0
        %3860 = vmatpush1.bf16.msra.mxu0 0
        %3861 = vmatprep.subr.bf16.mxu0 0
        %3862 = vmatpush1.bf16.msra.mxu0 0
        %3863 = vmatprep.subr.bf16.mxu0 0
        %3864 = vmatpush1.bf16.msra.mxu0 0
        %3865 = vmatprep.subr.bf16.mxu0 0
        %3866 = vmatpush1.bf16.msra.mxu0 0
        %3867 = vmatprep.subr.bf16.mxu0 0
        %3868 = vmatpush1.bf16.msra.mxu0 0
        %3869 = vmatprep.subr.bf16.mxu0 0
        %3870 = vmatpush1.bf16.msra.mxu0 0
        %3871 = vmatprep.subr.bf16.mxu0 0
        %3872 = vmatpush1.bf16.msra.mxu0 0
        %3873 = vmatprep.subr.bf16.mxu0 0
        %3874 = vmatpush1.bf16.msra.mxu0 0
        %3875 = vmatprep.subr.bf16.mxu0 0
        %3876 = vmatpush1.bf16.msra.mxu0 0
        %3877 = vmatprep.subr.bf16.mxu0 0
        %3878 = vmatpush1.bf16.msra.mxu0 0
        %3879 = vmatprep.subr.bf16.mxu0 0
        %3880 = vmatpush1.bf16.msra.mxu0 0
        %3881 = vmatprep.mubr.bf16.mxu0 0
        %3882 = vmatmul.mubr.bf16.gmra.mrb[0].mxu0 %v3844
        %v3883 = vpop.f32.mrb[0].mxu0
        %v3884 = vadd.f32 0.0, %v3883
        %v3885 = vpop.f32.mrb[0].mxu0
        %v3886 = vpop.f32.mrb[0].mxu0
        %v3887 = vadd.f32 0.0, %v3886
        %v3888 = vpop.f32.mrb[0].mxu0
        %3889 = vmatprep.mubr.bf16.mxu0 0
        %3890 = vmatmul.mubr.bf16.gmra.mrb[0].mxu0 %v3847
        %v3891 = vpop.f32.mrb[0].mxu0
        %v3892 = vadd.f32 0.0, %v3891
        %v3893 = vpop.f32.mrb[0].mxu0
        %v3894 = vpop.f32.mrb[0].mxu0
        %v3895 = vadd.f32 0.0, %v3894
        %v3896 = vpop.f32.mrb[0].mxu0
        %3897 = vdwg.mxu0
        %v3899 = vsel %vm1580, %v3283, 0
        %v3902 = vsel %vm1580, %v3284, 0
        %3904 = vmatprep.subr.bf16.mxu0 0
        %3905 = vmatpush1.bf16.msra.mxu0 %v1545
        %3906 = vmatprep.subr.bf16.mxu0 0
        %3907 = vmatpush1.bf16.msra.mxu0 %v1547
        %3908 = vmatprep.subr.bf16.mxu0 0
        %3909 = vmatpush1.bf16.msra.mxu0 0
        %3910 = vmatprep.subr.bf16.mxu0 0
        %3911 = vmatpush1.bf16.msra.mxu0 0
        %3912 = vmatprep.subr.bf16.mxu0 0
        %3913 = vmatpush1.bf16.msra.mxu0 0
        %3914 = vmatprep.subr.bf16.mxu0 0
        %3915 = vmatpush1.bf16.msra.mxu0 0
        %3916 = vmatprep.subr.bf16.mxu0 0
        %3917 = vmatpush1.bf16.msra.mxu0 0
        %3918 = vmatprep.subr.bf16.mxu0 0
        %3919 = vmatpush1.bf16.msra.mxu0 0
        %3920 = vmatprep.subr.bf16.mxu0 0
        %3921 = vmatpush1.bf16.msra.mxu0 0
        %3922 = vmatprep.subr.bf16.mxu0 0
        %3923 = vmatpush1.bf16.msra.mxu0 0
        %3924 = vmatprep.subr.bf16.mxu0 0
        %3925 = vmatpush1.bf16.msra.mxu0 0
        %3926 = vmatprep.subr.bf16.mxu0 0
        %3927 = vmatpush1.bf16.msra.mxu0 0
        %3928 = vmatprep.subr.bf16.mxu0 0
        %3929 = vmatpush1.bf16.msra.mxu0 0
        %3930 = vmatprep.subr.bf16.mxu0 0
        %3931 = vmatpush1.bf16.msra.mxu0 0
        %3932 = vmatprep.subr.bf16.mxu0 0
        %3933 = vmatpush1.bf16.msra.mxu0 0
        %3934 = vmatprep.subr.bf16.mxu0 0
        %3935 = vmatpush1.bf16.msra.mxu0 0
        %3936 = vmatprep.mubr.bf16.mxu0 0
        %3937 = vmatmul.mubr.bf16.gmra.mrb[0].mxu0 %v3899
        %v3938 = vpop.f32.mrb[0].mxu0
        %v3939 = vadd.f32 0.0, %v3938
        %v3940 = vpop.f32.mrb[0].mxu0
        %v3941 = vpop.f32.mrb[0].mxu0
        %v3942 = vadd.f32 0.0, %v3941
        %v3943 = vpop.f32.mrb[0].mxu0
        %3944 = vmatprep.mubr.bf16.mxu0 0
        %3945 = vmatmul.mubr.bf16.gmra.mrb[0].mxu0 %v3902
        %v3946 = vpop.f32.mrb[0].mxu0
        %v3947 = vadd.f32 0.0, %v3946
        %v3948 = vpop.f32.mrb[0].mxu0
        %v3949 = vpop.f32.mrb[0].mxu0
        %v3950 = vadd.f32 0.0, %v3949
        %v3951 = vpop.f32.mrb[0].mxu0
        %3952 = vdwg.mxu0
        %v3954 = vsel %vm1580, %v3285, 0
        %v3957 = vsel %vm1580, %v3286, 0
        %3959 = vmatprep.subr.bf16.mxu0 0
        %3960 = vmatpush1.bf16.msra.mxu0 %v1557
        %3961 = vmatprep.subr.bf16.mxu0 0
        %3962 = vmatpush1.bf16.msra.mxu0 %v1559
        %3963 = vmatprep.subr.bf16.mxu0 0
        %3964 = vmatpush1.bf16.msra.mxu0 0
        %3965 = vmatprep.subr.bf16.mxu0 0
        %3966 = vmatpush1.bf16.msra.mxu0 0
        %3967 = vmatprep.subr.bf16.mxu0 0
        %3968 = vmatpush1.bf16.msra.mxu0 0
        %3969 = vmatprep.subr.bf16.mxu0 0
        %3970 = vmatpush1.bf16.msra.mxu0 0
        %3971 = vmatprep.subr.bf16.mxu0 0
        %3972 = vmatpush1.bf16.msra.mxu0 0
        %3973 = vmatprep.subr.bf16.mxu0 0
        %3974 = vmatpush1.bf16.msra.mxu0 0
        %3975 = vmatprep.subr.bf16.mxu0 0
        %3976 = vmatpush1.bf16.msra.mxu0 0
        %3977 = vmatprep.subr.bf16.mxu0 0
        %3978 = vmatpush1.bf16.msra.mxu0 0
        %3979 = vmatprep.subr.bf16.mxu0 0
        %3980 = vmatpush1.bf16.msra.mxu0 0
        %3981 = vmatprep.subr.bf16.mxu0 0
        %3982 = vmatpush1.bf16.msra.mxu0 0
        %3983 = vmatprep.subr.bf16.mxu0 0
        %3984 = vmatpush1.bf16.msra.mxu0 0
        %3985 = vmatprep.subr.bf16.mxu0 0
        %3986 = vmatpush1.bf16.msra.mxu0 0
        %3987 = vmatprep.subr.bf16.mxu0 0
        %3988 = vmatpush1.bf16.msra.mxu0 0
        %3989 = vmatprep.subr.bf16.mxu0 0
        %3990 = vmatpush1.bf16.msra.mxu0 0
        %3991 = vmatprep.mubr.bf16.mxu0 0
        %3992 = vmatmul.mubr.bf16.gmra.mrb[0].mxu0 %v3954
        %v3993 = vpop.f32.mrb[0].mxu0
        %v3994 = vadd.f32 0.0, %v3993
        %v3995 = vpop.f32.mrb[0].mxu0
        %v3996 = vpop.f32.mrb[0].mxu0
        %v3997 = vadd.f32 0.0, %v3996
        %v3998 = vpop.f32.mrb[0].mxu0
        %3999 = vmatprep.mubr.bf16.mxu0 0
        %4000 = vmatmul.mubr.bf16.gmra.mrb[0].mxu0 %v3957
        %v4001 = vpop.f32.mrb[0].mxu0
        %v4002 = vadd.f32 0.0, %v4001
        %v4003 = vpop.f32.mrb[0].mxu0
        %v4004 = vpop.f32.mrb[0].mxu0
        %v4005 = vadd.f32 0.0, %v4004
        %v4006 = vpop.f32.mrb[0].mxu0
        %4007 = vdwg.mxu0
        %v4009 = vsel %vm1580, %v3287, 0
        %v4012 = vsel %vm1580, %v3288, 0
        %4014 = vmatprep.subr.bf16.mxu0 0
        %4015 = vmatpush1.bf16.msra.mxu0 %v1561
        %4016 = vmatprep.subr.bf16.mxu0 0
        %4017 = vmatpush1.bf16.msra.mxu0 %v1563
        %4018 = vmatprep.subr.bf16.mxu0 0
        %4019 = vmatpush1.bf16.msra.mxu0 0
        %4020 = vmatprep.subr.bf16.mxu0 0
        %4021 = vmatpush1.bf16.msra.mxu0 0
        %4022 = vmatprep.subr.bf16.mxu0 0
        %4023 = vmatpush1.bf16.msra.mxu0 0
        %4024 = vmatprep.subr.bf16.mxu0 0
        %4025 = vmatpush1.bf16.msra.mxu0 0
        %4026 = vmatprep.subr.bf16.mxu0 0
        %4027 = vmatpush1.bf16.msra.mxu0 0
        %4028 = vmatprep.subr.bf16.mxu0 0
        %4029 = vmatpush1.bf16.msra.mxu0 0
        %4030 = vmatprep.subr.bf16.mxu0 0
        %4031 = vmatpush1.bf16.msra.mxu0 0
        %4032 = vmatprep.subr.bf16.mxu0 0
        %4033 = vmatpush1.bf16.msra.mxu0 0
        %4034 = vmatprep.subr.bf16.mxu0 0
        %4035 = vmatpush1.bf16.msra.mxu0 0
        %4036 = vmatprep.subr.bf16.mxu0 0
        %4037 = vmatpush1.bf16.msra.mxu0 0
        %4038 = vmatprep.subr.bf16.mxu0 0
        %4039 = vmatpush1.bf16.msra.mxu0 0
        %4040 = vmatprep.subr.bf16.mxu0 0
        %4041 = vmatpush1.bf16.msra.mxu0 0
        %4042 = vmatprep.subr.bf16.mxu0 0
        %4043 = vmatpush1.bf16.msra.mxu0 0
        %4044 = vmatprep.subr.bf16.mxu0 0
        %4045 = vmatpush1.bf16.msra.mxu0 0
        %4046 = vmatprep.mubr.bf16.mxu0 0
        %4047 = vmatmul.mubr.bf16.gmra.mrb[0].mxu0 %v4009
        %v4048 = vpop.f32.mrb[0].mxu0
        %v4049 = vadd.f32 0.0, %v4048
        %v4050 = vpop.f32.mrb[0].mxu0
        %v4051 = vpop.f32.mrb[0].mxu0
        %v4052 = vadd.f32 0.0, %v4051
        %v4053 = vpop.f32.mrb[0].mxu0
        %4054 = vmatprep.mubr.bf16.mxu0 0
        %4055 = vmatmul.mubr.bf16.gmra.mrb[0].mxu0 %v4012
        %v4056 = vpop.f32.mrb[0].mxu0
        %v4057 = vadd.f32 0.0, %v4056
        %v4058 = vpop.f32.mrb[0].mxu0
        %v4059 = vpop.f32.mrb[0].mxu0
        %v4060 = vadd.f32 0.0, %v4059
        %v4061 = vpop.f32.mrb[0].mxu0
        %4062 = vdwg.mxu0
        %v4064 = vsel %vm1580, %v3289, 0
        %v4067 = vsel %vm1580, %v3290, 0
        %4069 = vmatprep.subr.bf16.mxu0 0
        %4070 = vmatpush1.bf16.msra.mxu0 %v1565
        %4071 = vmatprep.subr.bf16.mxu0 0
        %4072 = vmatpush1.bf16.msra.mxu0 %v1567
        %4073 = vmatprep.subr.bf16.mxu0 0
        %4074 = vmatpush1.bf16.msra.mxu0 0
        %4075 = vmatprep.subr.bf16.mxu0 0
        %4076 = vmatpush1.bf16.msra.mxu0 0
        %4077 = vmatprep.subr.bf16.mxu0 0
        %4078 = vmatpush1.bf16.msra.mxu0 0
        %4079 = vmatprep.subr.bf16.mxu0 0
        %4080 = vmatpush1.bf16.msra.mxu0 0
        %4081 = vmatprep.subr.bf16.mxu0 0
        %4082 = vmatpush1.bf16.msra.mxu0 0
        %4083 = vmatprep.subr.bf16.mxu0 0
        %4084 = vmatpush1.bf16.msra.mxu0 0
        %4085 = vmatprep.subr.bf16.mxu0 0
        %4086 = vmatpush1.bf16.msra.mxu0 0
        %4087 = vmatprep.subr.bf16.mxu0 0
        %4088 = vmatpush1.bf16.msra.mxu0 0
        %4089 = vmatprep.subr.bf16.mxu0 0
        %4090 = vmatpush1.bf16.msra.mxu0 0
        %4091 = vmatprep.subr.bf16.mxu0 0
        %4092 = vmatpush1.bf16.msra.mxu0 0
        %4093 = vmatprep.subr.bf16.mxu0 0
        %4094 = vmatpush1.bf16.msra.mxu0 0
        %4095 = vmatprep.subr.bf16.mxu0 0
        %4096 = vmatpush1.bf16.msra.mxu0 0
        %4097 = vmatprep.subr.bf16.mxu0 0
        %4098 = vmatpush1.bf16.msra.mxu0 0
        %4099 = vmatprep.subr.bf16.mxu0 0
        %4100 = vmatpush1.bf16.msra.mxu0 0
        %4101 = vmatprep.mubr.bf16.mxu0 0
        %4102 = vmatmul.mubr.bf16.gmra.mrb[0].mxu0 %v4064
        %v4103 = vpop.f32.mrb[0].mxu0
        %v4104 = vadd.f32 0.0, %v4103
        %v4105 = vpop.f32.mrb[0].mxu0
        %v4106 = vpop.f32.mrb[0].mxu0
        %v4107 = vadd.f32 0.0, %v4106
        %v4108 = vpop.f32.mrb[0].mxu0
        %4109 = vmatprep.mubr.bf16.mxu0 0
        %4110 = vmatmul.mubr.bf16.gmra.mrb[0].mxu0 %v4067
        %v4111 = vpop.f32.mrb[0].mxu0
        %v4112 = vadd.f32 0.0, %v4111
        %v4113 = vpop.f32.mrb[0].mxu0
        %v4114 = vpop.f32.mrb[0].mxu0
        %v4115 = vadd.f32 0.0, %v4114
        %v4116 = vpop.f32.mrb[0].mxu0
        %4117 = vdwg.mxu0
        %v4119 = vsel %vm1580, %v3291, 0
        %v4122 = vsel %vm1580, %v3292, 0
        %4124 = vmatprep.subr.bf16.mxu0 0
        %4125 = vmatpush1.bf16.msra.mxu0 %v1569
        %4126 = vmatprep.subr.bf16.mxu0 0
        %4127 = vmatpush1.bf16.msra.mxu0 %v1571
        %4128 = vmatprep.subr.bf16.mxu0 0
        %4129 = vmatpush1.bf16.msra.mxu0 0
        %4130 = vmatprep.subr.bf16.mxu0 0
        %4131 = vmatpush1.bf16.msra.mxu0 0
        %4132 = vmatprep.subr.bf16.mxu0 0
        %4133 = vmatpush1.bf16.msra.mxu0 0
        %4134 = vmatprep.subr.bf16.mxu0 0
        %4135 = vmatpush1.bf16.msra.mxu0 0
        %4136 = vmatprep.subr.bf16.mxu0 0
        %4137 = vmatpush1.bf16.msra.mxu0 0
        %4138 = vmatprep.subr.bf16.mxu0 0
        %4139 = vmatpush1.bf16.msra.mxu0 0
        %4140 = vmatprep.subr.bf16.mxu0 0
        %4141 = vmatpush1.bf16.msra.mxu0 0
        %4142 = vmatprep.subr.bf16.mxu0 0
        %4143 = vmatpush1.bf16.msra.mxu0 0
        %4144 = vmatprep.subr.bf16.mxu0 0
        %4145 = vmatpush1.bf16.msra.mxu0 0
        %4146 = vmatprep.subr.bf16.mxu0 0
        %4147 = vmatpush1.bf16.msra.mxu0 0
        %4148 = vmatprep.subr.bf16.mxu0 0
        %4149 = vmatpush1.bf16.msra.mxu0 0
        %4150 = vmatprep.subr.bf16.mxu0 0
        %4151 = vmatpush1.bf16.msra.mxu0 0
        %4152 = vmatprep.subr.bf16.mxu0 0
        %4153 = vmatpush1.bf16.msra.mxu0 0
        %4154 = vmatprep.subr.bf16.mxu0 0
        %4155 = vmatpush1.bf16.msra.mxu0 0
        %4156 = vmatprep.mubr.bf16.mxu0 0
        %4157 = vmatmul.mubr.bf16.gmra.mrb[0].mxu0 %v4119
        %v4158 = vpop.f32.mrb[0].mxu0
        %v4159 = vadd.f32 0.0, %v4158
        %v4160 = vpop.f32.mrb[0].mxu0
        %v4161 = vpop.f32.mrb[0].mxu0
        %v4162 = vadd.f32 0.0, %v4161
        %v4163 = vpop.f32.mrb[0].mxu0
        %4164 = vmatprep.mubr.bf16.mxu0 0
        %4165 = vmatmul.mubr.bf16.gmra.mrb[0].mxu0 %v4122
        %v4166 = vpop.f32.mrb[0].mxu0
        %v4167 = vadd.f32 0.0, %v4166
        %v4168 = vpop.f32.mrb[0].mxu0
        %v4169 = vpop.f32.mrb[0].mxu0
        %v4170 = vadd.f32 0.0, %v4169
        %v4171 = vpop.f32.mrb[0].mxu0
        %4172 = vdwg.mxu0
        %4189 = vrot.lane.b32.xlu0 %v3554, 32
        %v4190 = vpop.permute.xlu0 %4189
        %4191 = vrot.lane.b32.xlu0 %v3557, 32
        %v4192 = vpop.permute.xlu0 %4191
        %4193 = vrot.lane.b32.xlu0 %v3562, 32
        %v4194 = vpop.permute.xlu0 %4193
        %4195 = vrot.lane.b32.xlu0 %v3565, 32
        %v4196 = vpop.permute.xlu0 %4195
        %4197 = vrot.lane.b32.xlu0 %v3609, 32
        %v4198 = vpop.permute.xlu0 %4197
        %4199 = vrot.lane.b32.xlu0 %v3612, 32
        %v4200 = vpop.permute.xlu0 %4199
        %4201 = vrot.lane.b32.xlu0 %v3617, 32
        %v4202 = vpop.permute.xlu0 %4201
        %4203 = vrot.lane.b32.xlu0 %v3620, 32
        %v4204 = vpop.permute.xlu0 %4203
        %4205 = vrot.lane.b32.xlu0 %v3664, 32
        %v4206 = vpop.permute.xlu0 %4205
        %4207 = vrot.lane.b32.xlu0 %v3667, 32
        %v4208 = vpop.permute.xlu0 %4207
        %4209 = vrot.lane.b32.xlu0 %v3672, 32
        %v4210 = vpop.permute.xlu0 %4209
        %4211 = vrot.lane.b32.xlu0 %v3675, 32
        %v4212 = vpop.permute.xlu0 %4211
        %4213 = vrot.lane.b32.xlu0 %v3719, 32
        %v4214 = vpop.permute.xlu0 %4213
        %4215 = vrot.lane.b32.xlu0 %v3722, 32
        %v4216 = vpop.permute.xlu0 %4215
        %4217 = vrot.lane.b32.xlu0 %v3727, 32
        %v4218 = vpop.permute.xlu0 %4217
        %4219 = vrot.lane.b32.xlu0 %v3730, 32
        %v4220 = vpop.permute.xlu0 %4219
        %4253 = vrot.lane.b32.xlu0 %v3774, 64
        %v4254 = vpop.permute.xlu0 %4253
        %4255 = vrot.lane.b32.xlu0 %v3777, 64
        %v4256 = vpop.permute.xlu0 %4255
        %4257 = vrot.lane.b32.xlu0 %v3782, 64
        %v4258 = vpop.permute.xlu0 %4257
        %4259 = vrot.lane.b32.xlu0 %v3785, 64
        %v4260 = vpop.permute.xlu0 %4259
        %4261 = vrot.lane.b32.xlu0 %v3829, 64
        %v4262 = vpop.permute.xlu0 %4261
        %4263 = vrot.lane.b32.xlu0 %v3832, 64
        %v4264 = vpop.permute.xlu0 %4263
        %4265 = vrot.lane.b32.xlu0 %v3837, 64
        %v4266 = vpop.permute.xlu0 %4265
        %4267 = vrot.lane.b32.xlu0 %v3840, 64
        %v4268 = vpop.permute.xlu0 %4267
        %4269 = vrot.lane.b32.xlu0 %v3884, 64
        %v4270 = vpop.permute.xlu0 %4269
        %4271 = vrot.lane.b32.xlu0 %v3887, 64
        %v4272 = vpop.permute.xlu0 %4271
        %4273 = vrot.lane.b32.xlu0 %v3892, 64
        %v4274 = vpop.permute.xlu0 %4273
        %4275 = vrot.lane.b32.xlu0 %v3895, 64
        %v4276 = vpop.permute.xlu0 %4275
        %4277 = vrot.lane.b32.xlu0 %v3939, 64
        %v4278 = vpop.permute.xlu0 %4277
        %4279 = vrot.lane.b32.xlu0 %v3942, 64
        %v4280 = vpop.permute.xlu0 %4279
        %4281 = vrot.lane.b32.xlu0 %v3947, 64
        %v4282 = vpop.permute.xlu0 %4281
        %4283 = vrot.lane.b32.xlu0 %v3950, 64
        %v4284 = vpop.permute.xlu0 %4283
        %4317 = vrot.lane.b32.xlu0 %v3994, 96
        %v4318 = vpop.permute.xlu0 %4317
        %4319 = vrot.lane.b32.xlu0 %v3997, 96
        %v4320 = vpop.permute.xlu0 %4319
        %4321 = vrot.lane.b32.xlu0 %v4002, 96
        %v4322 = vpop.permute.xlu0 %4321
        %4323 = vrot.lane.b32.xlu0 %v4005, 96
        %v4324 = vpop.permute.xlu0 %4323
        %4325 = vrot.lane.b32.xlu0 %v4049, 96
        %v4326 = vpop.permute.xlu0 %4325
        %4327 = vrot.lane.b32.xlu0 %v4052, 96
        %v4328 = vpop.permute.xlu0 %4327
        %4329 = vrot.lane.b32.xlu0 %v4057, 96
        %v4330 = vpop.permute.xlu0 %4329
        %4331 = vrot.lane.b32.xlu0 %v4060, 96
        %v4332 = vpop.permute.xlu0 %4331
        %4333 = vrot.lane.b32.xlu0 %v4104, 96
        %v4334 = vpop.permute.xlu0 %4333
        %4335 = vrot.lane.b32.xlu0 %v4107, 96
        %v4336 = vpop.permute.xlu0 %4335
        %4337 = vrot.lane.b32.xlu0 %v4112, 96
        %v4338 = vpop.permute.xlu0 %4337
        %4339 = vrot.lane.b32.xlu0 %v4115, 96
        %v4340 = vpop.permute.xlu0 %4339
        %4341 = vrot.lane.b32.xlu0 %v4159, 96
        %v4342 = vpop.permute.xlu0 %4341
        %4343 = vrot.lane.b32.xlu0 %v4162, 96
        %v4344 = vpop.permute.xlu0 %4343
        %4345 = vrot.lane.b32.xlu0 %v4167, 96
        %v4346 = vpop.permute.xlu0 %4345
        %4347 = vrot.lane.b32.xlu0 %v4170, 96
        %v4348 = vpop.permute.xlu0 %4347
        %v4365 = vsel %vm1580, %v3334, %v4190
        %v4366 = vsel %vm1580, %v3337, %v4192
        %v4367 = vsel %vm1580, %v3342, %v4194
        %v4368 = vsel %vm1580, %v3345, %v4196
        %v4369 = vsel %vm1580, %v3389, %v4198
        %v4370 = vsel %vm1580, %v3392, %v4200
        %v4371 = vsel %vm1580, %v3397, %v4202
        %v4372 = vsel %vm1580, %v3400, %v4204
        %v4373 = vsel %vm1580, %v3444, %v4206
        %v4374 = vsel %vm1580, %v3447, %v4208
        %v4375 = vsel %vm1580, %v3452, %v4210
        %v4376 = vsel %vm1580, %v3455, %v4212
        %v4377 = vsel %vm1580, %v3499, %v4214
        %v4378 = vsel %vm1580, %v3502, %v4216
        %v4379 = vsel %vm1580, %v3507, %v4218
        %v4380 = vsel %vm1580, %v3510, %v4220
        %vm4381 = vcmask 523264
        %v4382 = vsel %vm4381, %v4365, %v4254
        %v4383 = vsel %vm4381, %v4366, %v4256
        %v4384 = vsel %vm4381, %v4367, %v4258
        %v4385 = vsel %vm4381, %v4368, %v4260
        %v4386 = vsel %vm4381, %v4369, %v4262
        %v4387 = vsel %vm4381, %v4370, %v4264
        %v4388 = vsel %vm4381, %v4371, %v4266
        %v4389 = vsel %vm4381, %v4372, %v4268
        %v4390 = vsel %vm4381, %v4373, %v4270
        %v4391 = vsel %vm4381, %v4374, %v4272
        %v4392 = vsel %vm4381, %v4375, %v4274
        %v4393 = vsel %vm4381, %v4376, %v4276
        %v4394 = vsel %vm4381, %v4377, %v4278
        %v4395 = vsel %vm4381, %v4378, %v4280
        %v4396 = vsel %vm4381, %v4379, %v4282
        %v4397 = vsel %vm4381, %v4380, %v4284
        %vm4398 = vcmask 785408
        %v4399 = vsel %vm4398, %v4382, %v4318
        %v4400 = vsel %vm4398, %v4383, %v4320
        %v4401 = vsel %vm4398, %v4384, %v4322
        %v4402 = vsel %vm4398, %v4385, %v4324
        %v4403 = vsel %vm4398, %v4386, %v4326
        %v4404 = vsel %vm4398, %v4387, %v4328
        %v4405 = vsel %vm4398, %v4388, %v4330
        %v4406 = vsel %vm4398, %v4389, %v4332
        %v4407 = vsel %vm4398, %v4390, %v4334
        %v4408 = vsel %vm4398, %v4391, %v4336
        %v4409 = vsel %vm4398, %v4392, %v4338
        %v4410 = vsel %vm4398, %v4393, %v4340
        %v4411 = vsel %vm4398, %v4394, %v4342
        %v4412 = vsel %vm4398, %v4395, %v4344
        %v4413 = vsel %vm4398, %v4396, %v4346
        %v4414 = vsel %vm4398, %v4397, %v4348
        %v4415 = vpack.c.bf16 %v4400, %v4399
        %v4416 = vpack.c.bf16 %v4402, %v4401
        %v4417 = vpack.c.bf16 %v4404, %v4403
        %v4418 = vpack.c.bf16 %v4406, %v4405
        %v4419 = vpack.c.bf16 %v4408, %v4407
        %v4420 = vpack.c.bf16 %v4410, %v4409
        %v4421 = vpack.c.bf16 %v4412, %v4411
        %v4422 = vpack.c.bf16 %v4414, %v4413
        %v4423 = vld [vmem:[%s730] sm:$0xf]
        %v4424 = vld [vmem:[%s730 + $0x4] sm:$0xf]
        %v4425 = vld [vmem:[%s730 + $0x8] sm:$0xf]
        %v4426 = vld [vmem:[%s730 + $0xc] sm:$0xf]
        %v4427 = vld [vmem:[%s730 + $0x10] sm:$0xf]
        %v4428 = vld [vmem:[%s730 + $0x14] sm:$0xf]
        %v4429 = vld [vmem:[%s730 + $0x18] sm:$0xf]
        %v4430 = vld [vmem:[%s730 + $0x1c] sm:$0xf]
        %v4431 = vld [vmem:[%s730 + $0x20] sm:$0xf]
        %v4432 = vld [vmem:[%s730 + $0x24] sm:$0xf]
        %v4433 = vld [vmem:[%s730 + $0x28] sm:$0xf]
        %v4434 = vld [vmem:[%s730 + $0x2c] sm:$0xf]
        %v4435 = vld [vmem:[%s730 + $0x30] sm:$0xf]
        %v4436 = vld [vmem:[%s730 + $0x34] sm:$0xf]
        %v4437 = vld [vmem:[%s730 + $0x38] sm:$0xf]
        %v4438 = vld [vmem:[%s730 + $0x3c] sm:$0xf]
        %v4439 = vld [vmem:[%s738] sm:$0x1]
        %v4441 = vlaneseq
        %v4442 = vshrl.u32 %v4441, 7
        %v4443 = vsub.s32 0, %v4442
        %v4444 = vrot.slane %v4439, %v4443
        %v4462 = vunpack.c.l.b16 %v4423
        %v4463 = vunpack.c.l.b16 %v4424
        %v4464 = vunpack.c.l.b16 %v4425
        %v4465 = vunpack.c.l.b16 %v4426
        %v4466 = vunpack.c.l.b16 %v4427
        %v4467 = vunpack.c.l.b16 %v4428
        %v4468 = vunpack.c.l.b16 %v4429
        %v4469 = vunpack.c.l.b16 %v4430
        %v4470 = vunpack.c.l.b16 %v4431
        %v4471 = vunpack.c.l.b16 %v4432
        %v4472 = vunpack.c.l.b16 %v4433
        %v4473 = vunpack.c.l.b16 %v4434
        %v4474 = vunpack.c.l.b16 %v4435
        %v4475 = vunpack.c.l.b16 %v4436
        %v4476 = vunpack.c.l.b16 %v4437
        %v4477 = vunpack.c.l.b16 %v4438
        %v4478 = vpack.c.b16 %v4463, %v4462
        %v4479 = vpack.c.b16 %v4465, %v4464
        %v4480 = vpack.c.b16 %v4467, %v4466
        %v4481 = vpack.c.b16 %v4469, %v4468
        %v4482 = vpack.c.b16 %v4471, %v4470
        %v4483 = vpack.c.b16 %v4473, %v4472
        %v4484 = vpack.c.b16 %v4475, %v4474
        %v4485 = vpack.c.b16 %v4477, %v4476
        %4494 = vmatprep.subr.bf16.mxu0 0
        %4495 = vmatpush1.bf16.msra.mxu0 %v4478
        %4496 = vmatprep.subr.bf16.mxu0 0
        %4497 = vmatpush1.bf16.msra.mxu0 %v4479
        %4498 = vmatprep.subr.bf16.mxu0 0
        %4499 = vmatpush1.bf16.msra.mxu0 %v4480
        %4500 = vmatprep.subr.bf16.mxu0 0
        %4501 = vmatpush1.bf16.msra.mxu0 %v4481
        %4502 = vmatprep.subr.bf16.mxu0 0
        %4503 = vmatpush1.bf16.msra.mxu0 %v4482
        %4504 = vmatprep.subr.bf16.mxu0 0
        %4505 = vmatpush1.bf16.msra.mxu0 %v4483
        %4506 = vmatprep.subr.bf16.mxu0 0
        %4507 = vmatpush1.bf16.msra.mxu0 %v4484
        %4508 = vmatprep.subr.bf16.mxu0 0
        %4509 = vmatpush1.bf16.msra.mxu0 %v4485
        %4510 = vmatprep.subr.bf16.mxu0 0
        %4511 = vmatpush1.bf16.msra.mxu0 0
        %4512 = vmatprep.subr.bf16.mxu0 0
        %4513 = vmatpush1.bf16.msra.mxu0 0
        %4514 = vmatprep.subr.bf16.mxu0 0
        %4515 = vmatpush1.bf16.msra.mxu0 0
        %4516 = vmatprep.subr.bf16.mxu0 0
        %4517 = vmatpush1.bf16.msra.mxu0 0
        %4518 = vmatprep.subr.bf16.mxu0 0
        %4519 = vmatpush1.bf16.msra.mxu0 0
        %4520 = vmatprep.subr.bf16.mxu0 0
        %4521 = vmatpush1.bf16.msra.mxu0 0
        %4522 = vmatprep.subr.bf16.mxu0 0
        %4523 = vmatpush1.bf16.msra.mxu0 0
        %4524 = vmatprep.subr.bf16.mxu0 0
        %4525 = vmatpush1.bf16.msra.mxu0 0
        %4526 = vmatprep.mubr.bf16.mxu0 0
        %4527 = vmatmul.mubr.bf16.gmra.mrb[0].mxu0 %v4415
        %v4528 = vpop.f32.mrb[0].mxu0
        %v4529 = vadd.f32 %v4444, %v4528
        %v4530 = vpop.f32.mrb[0].mxu0
        %v4531 = vpop.f32.mrb[0].mxu0
        %v4532 = vadd.f32 %v4444, %v4531
        %v4533 = vpop.f32.mrb[0].mxu0
        %4534 = vmatprep.mubr.bf16.mxu0 0
        %4535 = vmatmul.mubr.bf16.gmra.mrb[0].mxu0 %v4416
        %v4536 = vpop.f32.mrb[0].mxu0
        %v4537 = vadd.f32 %v4444, %v4536
        %v4538 = vpop.f32.mrb[0].mxu0
        %v4539 = vpop.f32.mrb[0].mxu0
        %v4540 = vadd.f32 %v4444, %v4539
        %v4541 = vpop.f32.mrb[0].mxu0
        %4542 = vmatprep.mubr.bf16.mxu0 0
        %4543 = vmatmul.mubr.bf16.gmra.mrb[0].mxu0 %v4417
        %v4544 = vpop.f32.mrb[0].mxu0
        %v4545 = vadd.f32 %v4444, %v4544
        %v4546 = vpop.f32.mrb[0].mxu0
        %v4547 = vpop.f32.mrb[0].mxu0
        %v4548 = vadd.f32 %v4444, %v4547
        %v4549 = vpop.f32.mrb[0].mxu0
        %4550 = vmatprep.mubr.bf16.mxu0 0
        %4551 = vmatmul.mubr.bf16.gmra.mrb[0].mxu0 %v4418
        %v4552 = vpop.f32.mrb[0].mxu0
        %v4553 = vadd.f32 %v4444, %v4552
        %v4554 = vpop.f32.mrb[0].mxu0
        %v4555 = vpop.f32.mrb[0].mxu0
        %v4556 = vadd.f32 %v4444, %v4555
        %v4557 = vpop.f32.mrb[0].mxu0
        %4558 = vmatprep.mubr.bf16.mxu0 0
        %4559 = vmatmul.mubr.bf16.gmra.mrb[0].mxu0 %v4419
        %v4560 = vpop.f32.mrb[0].mxu0
        %v4561 = vadd.f32 %v4444, %v4560
        %v4562 = vpop.f32.mrb[0].mxu0
        %v4563 = vpop.f32.mrb[0].mxu0
        %v4564 = vadd.f32 %v4444, %v4563
        %v4565 = vpop.f32.mrb[0].mxu0
        %4566 = vmatprep.mubr.bf16.mxu0 0
        %4567 = vmatmul.mubr.bf16.gmra.mrb[0].mxu0 %v4420
        %v4568 = vpop.f32.mrb[0].mxu0
        %v4569 = vadd.f32 %v4444, %v4568
        %v4570 = vpop.f32.mrb[0].mxu0
        %v4571 = vpop.f32.mrb[0].mxu0
        %v4572 = vadd.f32 %v4444, %v4571
        %v4573 = vpop.f32.mrb[0].mxu0
        %4574 = vmatprep.mubr.bf16.mxu0 0
        %4575 = vmatmul.mubr.bf16.gmra.mrb[0].mxu0 %v4421
        %v4576 = vpop.f32.mrb[0].mxu0
        %v4577 = vadd.f32 %v4444, %v4576
        %v4578 = vpop.f32.mrb[0].mxu0
        %v4579 = vpop.f32.mrb[0].mxu0
        %v4580 = vadd.f32 %v4444, %v4579
        %v4581 = vpop.f32.mrb[0].mxu0
        %4582 = vmatprep.mubr.bf16.mxu0 0
        %4583 = vmatmul.mubr.bf16.gmra.mrb[0].mxu0 %v4422
        %v4584 = vpop.f32.mrb[0].mxu0
        %v4585 = vadd.f32 %v4444, %v4584
        %v4586 = vpop.f32.mrb[0].mxu0
        %v4587 = vpop.f32.mrb[0].mxu0
        %v4588 = vadd.f32 %v4444, %v4587
        %v4589 = vpop.f32.mrb[0].mxu0
        %4590 = vdwg.mxu0
        %v4591 = vadd.f32 %v953, %v4529
        %v4592 = vadd.f32 %v954, %v4532
        %v4593 = vadd.f32 %v955, %v4537
        %v4594 = vadd.f32 %v956, %v4540
        %v4595 = vadd.f32 %v957, %v4545
        %v4596 = vadd.f32 %v958, %v4548
        %v4597 = vadd.f32 %v959, %v4553
        %v4598 = vadd.f32 %v960, %v4556
        %v4599 = vadd.f32 %v961, %v4561
        %v4600 = vadd.f32 %v962, %v4564
        %v4601 = vadd.f32 %v963, %v4569
        %v4602 = vadd.f32 %v964, %v4572
        %v4603 = vadd.f32 %v965, %v4577
        %v4604 = vadd.f32 %v966, %v4580
        %v4605 = vadd.f32 %v967, %v4585
        %v4606 = vadd.f32 %v968, %v4588
        %v4607 = vld [vmem:[%s746] sm:$0x1]
        %v4608 = vld [vmem:[%s754] sm:$0x1]
        %4609 = vadd.xlane.f32.xlu0 %v4591
        %v4610 = vpop.xlane.xlu0 %4609
        %4611 = vadd.xlane.f32.xlu0 %v4592
        %v4612 = vpop.xlane.xlu0 %4611
        %4613 = vadd.xlane.f32.xlu0 %v4593
        %v4614 = vpop.xlane.xlu0 %4613
        %4615 = vadd.xlane.f32.xlu0 %v4594
        %v4616 = vpop.xlane.xlu0 %4615
        %4617 = vadd.xlane.f32.xlu0 %v4595
        %v4618 = vpop.xlane.xlu0 %4617
        %4619 = vadd.xlane.f32.xlu0 %v4596
        %v4620 = vpop.xlane.xlu0 %4619
        %4621 = vadd.xlane.f32.xlu0 %v4597
        %v4622 = vpop.xlane.xlu0 %4621
        %4623 = vadd.xlane.f32.xlu0 %v4598
        %v4624 = vpop.xlane.xlu0 %4623
        %4625 = vadd.xlane.f32.xlu0 %v4599
        %v4626 = vpop.xlane.xlu0 %4625
        %4627 = vadd.xlane.f32.xlu0 %v4600
        %v4628 = vpop.xlane.xlu0 %4627
        %4629 = vadd.xlane.f32.xlu0 %v4601
        %v4630 = vpop.xlane.xlu0 %4629
        %4631 = vadd.xlane.f32.xlu0 %v4602
        %v4632 = vpop.xlane.xlu0 %4631
        %4633 = vadd.xlane.f32.xlu0 %v4603
        %v4634 = vpop.xlane.xlu0 %4633
        %4635 = vadd.xlane.f32.xlu0 %v4604
        %v4636 = vpop.xlane.xlu0 %4635
        %4637 = vadd.xlane.f32.xlu0 %v4605
        %v4638 = vpop.xlane.xlu0 %4637
        %4639 = vadd.xlane.f32.xlu0 %v4606
        %v4640 = vpop.xlane.xlu0 %4639
        %v4641 = vrcp.pop 128.0
        %v4642 = vmul.f32 %v4610, %v4641
        %v4643 = vmul.f32 %v4612, %v4641
        %v4644 = vmul.f32 %v4614, %v4641
        %v4645 = vmul.f32 %v4616, %v4641
        %v4646 = vmul.f32 %v4618, %v4641
        %v4647 = vmul.f32 %v4620, %v4641
        %v4648 = vmul.f32 %v4622, %v4641
        %v4649 = vmul.f32 %v4624, %v4641
        %v4650 = vmul.f32 %v4626, %v4641
        %v4651 = vmul.f32 %v4628, %v4641
        %v4652 = vmul.f32 %v4630, %v4641
        %v4653 = vmul.f32 %v4632, %v4641
        %v4654 = vmul.f32 %v4634, %v4641
        %v4655 = vmul.f32 %v4636, %v4641
        %v4656 = vmul.f32 %v4638, %v4641
        %v4657 = vmul.f32 %v4640, %v4641
        %v4658 = vsub.f32 %v4591, %v4642
        %v4659 = vsub.f32 %v4592, %v4643
        %v4660 = vsub.f32 %v4593, %v4644
        %v4661 = vsub.f32 %v4594, %v4645
        %v4662 = vsub.f32 %v4595, %v4646
        %v4663 = vsub.f32 %v4596, %v4647
        %v4664 = vsub.f32 %v4597, %v4648
        %v4665 = vsub.f32 %v4598, %v4649
        %v4666 = vsub.f32 %v4599, %v4650
        %v4667 = vsub.f32 %v4600, %v4651
        %v4668 = vsub.f32 %v4601, %v4652
        %v4669 = vsub.f32 %v4602, %v4653
        %v4670 = vsub.f32 %v4603, %v4654
        %v4671 = vsub.f32 %v4604, %v4655
        %v4672 = vsub.f32 %v4605, %v4656
        %v4673 = vsub.f32 %v4606, %v4657
        %v4674 = vmul.f32 %v4658, %v4658
        %v4675 = vmul.f32 %v4659, %v4659
        %v4676 = vmul.f32 %v4660, %v4660
        %v4677 = vmul.f32 %v4661, %v4661
        %v4678 = vmul.f32 %v4662, %v4662
        %v4679 = vmul.f32 %v4663, %v4663
        %v4680 = vmul.f32 %v4664, %v4664
        %v4681 = vmul.f32 %v4665, %v4665
        %v4682 = vmul.f32 %v4666, %v4666
        %v4683 = vmul.f32 %v4667, %v4667
        %v4684 = vmul.f32 %v4668, %v4668
        %v4685 = vmul.f32 %v4669, %v4669
        %v4686 = vmul.f32 %v4670, %v4670
        %v4687 = vmul.f32 %v4671, %v4671
        %v4688 = vmul.f32 %v4672, %v4672
        %v4689 = vmul.f32 %v4673, %v4673
        %4690 = vadd.xlane.f32.xlu0 %v4674
        %v4691 = vpop.xlane.xlu0 %4690
        %4692 = vadd.xlane.f32.xlu0 %v4675
        %v4693 = vpop.xlane.xlu0 %4692
        %4694 = vadd.xlane.f32.xlu0 %v4676
        %v4695 = vpop.xlane.xlu0 %4694
        %4696 = vadd.xlane.f32.xlu0 %v4677
        %v4697 = vpop.xlane.xlu0 %4696
        %4698 = vadd.xlane.f32.xlu0 %v4678
        %v4699 = vpop.xlane.xlu0 %4698
        %4700 = vadd.xlane.f32.xlu0 %v4679
        %v4701 = vpop.xlane.xlu0 %4700
        %4702 = vadd.xlane.f32.xlu0 %v4680
        %v4703 = vpop.xlane.xlu0 %4702
        %4704 = vadd.xlane.f32.xlu0 %v4681
        %v4705 = vpop.xlane.xlu0 %4704
        %4706 = vadd.xlane.f32.xlu0 %v4682
        %v4707 = vpop.xlane.xlu0 %4706
        %4708 = vadd.xlane.f32.xlu0 %v4683
        %v4709 = vpop.xlane.xlu0 %4708
        %4710 = vadd.xlane.f32.xlu0 %v4684
        %v4711 = vpop.xlane.xlu0 %4710
        %4712 = vadd.xlane.f32.xlu0 %v4685
        %v4713 = vpop.xlane.xlu0 %4712
        %4714 = vadd.xlane.f32.xlu0 %v4686
        %v4715 = vpop.xlane.xlu0 %4714
        %4716 = vadd.xlane.f32.xlu0 %v4687
        %v4717 = vpop.xlane.xlu0 %4716
        %4718 = vadd.xlane.f32.xlu0 %v4688
        %v4719 = vpop.xlane.xlu0 %4718
        %4720 = vadd.xlane.f32.xlu0 %v4689
        %v4721 = vpop.xlane.xlu0 %4720
        %v4722 = vmul.f32 %v4691, %v4641
        %v4723 = vmul.f32 %v4693, %v4641
        %v4724 = vmul.f32 %v4695, %v4641
        %v4725 = vmul.f32 %v4697, %v4641
        %v4726 = vmul.f32 %v4699, %v4641
        %v4727 = vmul.f32 %v4701, %v4641
        %v4728 = vmul.f32 %v4703, %v4641
        %v4729 = vmul.f32 %v4705, %v4641
        %v4730 = vmul.f32 %v4707, %v4641
        %v4731 = vmul.f32 %v4709, %v4641
        %v4732 = vmul.f32 %v4711, %v4641
        %v4733 = vmul.f32 %v4713, %v4641
        %v4734 = vmul.f32 %v4715, %v4641
        %v4735 = vmul.f32 %v4717, %v4641
        %v4736 = vmul.f32 %v4719, %v4641
        %v4737 = vmul.f32 %v4721, %v4641
        %v4738 = vadd.f32 %v4722, 1e-05
        %v4739 = vadd.f32 %v4723, 1e-05
        %v4740 = vadd.f32 %v4724, 1e-05
        %v4741 = vadd.f32 %v4725, 1e-05
        %v4742 = vadd.f32 %v4726, 1e-05
        %v4743 = vadd.f32 %v4727, 1e-05
        %v4744 = vadd.f32 %v4728, 1e-05
        %v4745 = vadd.f32 %v4729, 1e-05
        %v4746 = vadd.f32 %v4730, 1e-05
        %v4747 = vadd.f32 %v4731, 1e-05
        %v4748 = vadd.f32 %v4732, 1e-05
        %v4749 = vadd.f32 %v4733, 1e-05
        %v4750 = vadd.f32 %v4734, 1e-05
        %v4751 = vadd.f32 %v4735, 1e-05
        %v4752 = vadd.f32 %v4736, 1e-05
        %v4753 = vadd.f32 %v4737, 1e-05
        %v4754 = vrsqrt.pop %v4738
        %v4755 = vrsqrt.pop %v4739
        %v4756 = vrsqrt.pop %v4740
        %v4757 = vrsqrt.pop %v4741
        %v4758 = vrsqrt.pop %v4742
        %v4759 = vrsqrt.pop %v4743
        %v4760 = vrsqrt.pop %v4744
        %v4761 = vrsqrt.pop %v4745
        %v4762 = vrsqrt.pop %v4746
        %v4763 = vrsqrt.pop %v4747
        %v4764 = vrsqrt.pop %v4748
        %v4765 = vrsqrt.pop %v4749
        %v4766 = vrsqrt.pop %v4750
        %v4767 = vrsqrt.pop %v4751
        %v4768 = vrsqrt.pop %v4752
        %v4769 = vrsqrt.pop %v4753
        %v4770 = vmul.f32 %v4658, %v4754
        %v4771 = vmul.f32 %v4659, %v4755
        %v4772 = vmul.f32 %v4660, %v4756
        %v4773 = vmul.f32 %v4661, %v4757
        %v4774 = vmul.f32 %v4662, %v4758
        %v4775 = vmul.f32 %v4663, %v4759
        %v4776 = vmul.f32 %v4664, %v4760
        %v4777 = vmul.f32 %v4665, %v4761
        %v4778 = vmul.f32 %v4666, %v4762
        %v4779 = vmul.f32 %v4667, %v4763
        %v4780 = vmul.f32 %v4668, %v4764
        %v4781 = vmul.f32 %v4669, %v4765
        %v4782 = vmul.f32 %v4670, %v4766
        %v4783 = vmul.f32 %v4671, %v4767
        %v4784 = vmul.f32 %v4672, %v4768
        %v4785 = vmul.f32 %v4673, %v4769
        %v4787 = vlaneseq
        %v4788 = vshrl.u32 %v4787, 7
        %v4789 = vsub.s32 0, %v4788
        %v4790 = vrot.slane %v4607, %v4789
        %v4792 = vmul.f32 %v4770, %v4790
        %v4793 = vmul.f32 %v4771, %v4790
        %v4794 = vmul.f32 %v4772, %v4790
        %v4795 = vmul.f32 %v4773, %v4790
        %v4796 = vmul.f32 %v4774, %v4790
        %v4797 = vmul.f32 %v4775, %v4790
        %v4798 = vmul.f32 %v4776, %v4790
        %v4799 = vmul.f32 %v4777, %v4790
        %v4800 = vmul.f32 %v4778, %v4790
        %v4801 = vmul.f32 %v4779, %v4790
        %v4802 = vmul.f32 %v4780, %v4790
        %v4803 = vmul.f32 %v4781, %v4790
        %v4804 = vmul.f32 %v4782, %v4790
        %v4805 = vmul.f32 %v4783, %v4790
        %v4806 = vmul.f32 %v4784, %v4790
        %v4807 = vmul.f32 %v4785, %v4790
        %v4809 = vlaneseq
        %v4810 = vshrl.u32 %v4809, 7
        %v4811 = vsub.s32 0, %v4810
        %v4812 = vrot.slane %v4608, %v4811
        %v4814 = vadd.f32 %v4792, %v4812
        %v4815 = vadd.f32 %v4793, %v4812
        %v4816 = vadd.f32 %v4794, %v4812
        %v4817 = vadd.f32 %v4795, %v4812
        %v4818 = vadd.f32 %v4796, %v4812
        %v4819 = vadd.f32 %v4797, %v4812
        %v4820 = vadd.f32 %v4798, %v4812
        %v4821 = vadd.f32 %v4799, %v4812
        %v4822 = vadd.f32 %v4800, %v4812
        %v4823 = vadd.f32 %v4801, %v4812
        %v4824 = vadd.f32 %v4802, %v4812
        %v4825 = vadd.f32 %v4803, %v4812
        %v4826 = vadd.f32 %v4804, %v4812
        %v4827 = vadd.f32 %v4805, %v4812
        %v4828 = vadd.f32 %v4806, %v4812
        %v4829 = vadd.f32 %v4807, %v4812
        %v4830 = vpack.c.bf16 %v4815, %v4814
        %v4831 = vpack.c.bf16 %v4817, %v4816
        %v4832 = vpack.c.bf16 %v4819, %v4818
        %v4833 = vpack.c.bf16 %v4821, %v4820
        %v4834 = vpack.c.bf16 %v4823, %v4822
        %v4835 = vpack.c.bf16 %v4825, %v4824
        %v4836 = vpack.c.bf16 %v4827, %v4826
        %v4837 = vpack.c.bf16 %v4829, %v4828
        %v4838 = vld [vmem:[%s763] sm:$0xff]
        %v4839 = vld [vmem:[%s763 + $0x8] sm:$0xff]
        %v4840 = vld [vmem:[%s763 + $0x10] sm:$0xff]
        %v4841 = vld [vmem:[%s763 + $0x18] sm:$0xff]
        %v4842 = vld [vmem:[%s763 + $0x20] sm:$0xff]
        %v4843 = vld [vmem:[%s763 + $0x28] sm:$0xff]
        %v4844 = vld [vmem:[%s763 + $0x30] sm:$0xff]
        %v4845 = vld [vmem:[%s763 + $0x38] sm:$0xff]
        %v4846 = vld [vmem:[%s763 + $0x40] sm:$0xff]
        %v4847 = vld [vmem:[%s763 + $0x48] sm:$0xff]
        %v4848 = vld [vmem:[%s763 + $0x50] sm:$0xff]
        %v4849 = vld [vmem:[%s763 + $0x58] sm:$0xff]
        %v4850 = vld [vmem:[%s763 + $0x60] sm:$0xff]
        %v4851 = vld [vmem:[%s763 + $0x68] sm:$0xff]
        %v4852 = vld [vmem:[%s763 + $0x70] sm:$0xff]
        %v4853 = vld [vmem:[%s763 + $0x78] sm:$0xff]
        %v4854 = vld [vmem:[%s772] sm:$0x3]
        %v4856 = vlaneseq
        %v4857 = vshrl.u32 %v4856, 7
        %v4858 = vsub.s32 0, %v4857
        %v4859 = vrot.slane %v4854, %v4858
        %v4860 = vlaneseq
        %v4861 = vshrl.u32 %v4860, 7
        %v4862 = vsub.s32 1, %v4861
        %v4863 = vrot.slane %v4854, %v4862
        %v4882 = vunpack.c.l.b16 %v4838
        %v4883 = vunpack.c.h.b16 %v4838
        %v4884 = vunpack.c.l.b16 %v4839
        %v4885 = vunpack.c.h.b16 %v4839
        %v4886 = vunpack.c.l.b16 %v4840
        %v4887 = vunpack.c.h.b16 %v4840
        %v4888 = vunpack.c.l.b16 %v4841
        %v4889 = vunpack.c.h.b16 %v4841
        %v4890 = vunpack.c.l.b16 %v4842
        %v4891 = vunpack.c.h.b16 %v4842
        %v4892 = vunpack.c.l.b16 %v4843
        %v4893 = vunpack.c.h.b16 %v4843
        %v4894 = vunpack.c.l.b16 %v4844
        %v4895 = vunpack.c.h.b16 %v4844
        %v4896 = vunpack.c.l.b16 %v4845
        %v4897 = vunpack.c.h.b16 %v4845
        %v4898 = vunpack.c.l.b16 %v4846
        %v4899 = vunpack.c.h.b16 %v4846
        %v4900 = vunpack.c.l.b16 %v4847
        %v4901 = vunpack.c.h.b16 %v4847
        %v4902 = vunpack.c.l.b16 %v4848
        %v4903 = vunpack.c.h.b16 %v4848
        %v4904 = vunpack.c.l.b16 %v4849
        %v4905 = vunpack.c.h.b16 %v4849
        %v4906 = vunpack.c.l.b16 %v4850
        %v4907 = vunpack.c.h.b16 %v4850
        %v4908 = vunpack.c.l.b16 %v4851
        %v4909 = vunpack.c.h.b16 %v4851
        %v4910 = vunpack.c.l.b16 %v4852
        %v4911 = vunpack.c.h.b16 %v4852
        %v4912 = vunpack.c.l.b16 %v4853
        %v4913 = vunpack.c.h.b16 %v4853
        %v4914 = vpack.c.b16 %v4884, %v4882
        %v4915 = vpack.c.b16 %v4885, %v4883
        %v4916 = vpack.c.b16 %v4888, %v4886
        %v4917 = vpack.c.b16 %v4889, %v4887
        %v4918 = vpack.c.b16 %v4892, %v4890
        %v4919 = vpack.c.b16 %v4893, %v4891
        %v4920 = vpack.c.b16 %v4896, %v4894
        %v4921 = vpack.c.b16 %v4897, %v4895
        %v4922 = vpack.c.b16 %v4900, %v4898
        %v4923 = vpack.c.b16 %v4901, %v4899
        %v4924 = vpack.c.b16 %v4904, %v4902
        %v4925 = vpack.c.b16 %v4905, %v4903
        %v4926 = vpack.c.b16 %v4908, %v4906
        %v4927 = vpack.c.b16 %v4909, %v4907
        %v4928 = vpack.c.b16 %v4912, %v4910
        %v4929 = vpack.c.b16 %v4913, %v4911
        %4946 = vmatprep.subr.bf16.mxu0 %v4915
        %4947 = vmatpush1.bf16.msra.mxu0 %v4914
        %4948 = vmatprep.subr.bf16.mxu0 %v4917
        %4949 = vmatpush1.bf16.msra.mxu0 %v4916
        %4950 = vmatprep.subr.bf16.mxu0 %v4919
        %4951 = vmatpush1.bf16.msra.mxu0 %v4918
        %4952 = vmatprep.subr.bf16.mxu0 %v4921
        %4953 = vmatpush1.bf16.msra.mxu0 %v4920
        %4954 = vmatprep.subr.bf16.mxu0 %v4923
        %4955 = vmatpush1.bf16.msra.mxu0 %v4922
        %4956 = vmatprep.subr.bf16.mxu0 %v4925
        %4957 = vmatpush1.bf16.msra.mxu0 %v4924
        %4958 = vmatprep.subr.bf16.mxu0 %v4927
        %4959 = vmatpush1.bf16.msra.mxu0 %v4926
        %4960 = vmatprep.subr.bf16.mxu0 %v4929
        %4961 = vmatpush1.bf16.msra.mxu0 %v4928
        %4962 = vmatprep.subr.bf16.mxu0 0
        %4963 = vmatpush1.bf16.msra.mxu0 0
        %4964 = vmatprep.subr.bf16.mxu0 0
        %4965 = vmatpush1.bf16.msra.mxu0 0
        %4966 = vmatprep.subr.bf16.mxu0 0
        %4967 = vmatpush1.bf16.msra.mxu0 0
        %4968 = vmatprep.subr.bf16.mxu0 0
        %4969 = vmatpush1.bf16.msra.mxu0 0
        %4970 = vmatprep.subr.bf16.mxu0 0
        %4971 = vmatpush1.bf16.msra.mxu0 0
        %4972 = vmatprep.subr.bf16.mxu0 0
        %4973 = vmatpush1.bf16.msra.mxu0 0
        %4974 = vmatprep.subr.bf16.mxu0 0
        %4975 = vmatpush1.bf16.msra.mxu0 0
        %4976 = vmatprep.subr.bf16.mxu0 0
        %4977 = vmatpush1.bf16.msra.mxu0 0
        %4978 = vmatprep.mubr.bf16.mxu0 0
        %4979 = vmatmul.mubr.bf16.gmra.mrb[0].mxu0 %v4830
        %v4980 = vpop.f32.mrb[0].mxu0
        %v4981 = vadd.f32 %v4859, %v4980
        %v4982 = vpop.f32.mrb[0].mxu0
        %v4983 = vadd.f32 %v4863, %v4982
        %v4984 = vpop.f32.mrb[0].mxu0
        %v4985 = vadd.f32 %v4859, %v4984
        %v4986 = vpop.f32.mrb[0].mxu0
        %v4987 = vadd.f32 %v4863, %v4986
        %4988 = vmatprep.mubr.bf16.mxu0 0
        %4989 = vmatmul.mubr.bf16.gmra.mrb[0].mxu0 %v4831
        %v4990 = vpop.f32.mrb[0].mxu0
        %v4991 = vadd.f32 %v4859, %v4990
        %v4992 = vpop.f32.mrb[0].mxu0
        %v4993 = vadd.f32 %v4863, %v4992
        %v4994 = vpop.f32.mrb[0].mxu0
        %v4995 = vadd.f32 %v4859, %v4994
        %v4996 = vpop.f32.mrb[0].mxu0
        %v4997 = vadd.f32 %v4863, %v4996
        %4998 = vmatprep.mubr.bf16.mxu0 0
        %4999 = vmatmul.mubr.bf16.gmra.mrb[0].mxu0 %v4832
        %v5000 = vpop.f32.mrb[0].mxu0
        %v5001 = vadd.f32 %v4859, %v5000
        %v5002 = vpop.f32.mrb[0].mxu0
        %v5003 = vadd.f32 %v4863, %v5002
        %v5004 = vpop.f32.mrb[0].mxu0
        %v5005 = vadd.f32 %v4859, %v5004
        %v5006 = vpop.f32.mrb[0].mxu0
        %v5007 = vadd.f32 %v4863, %v5006
        %5008 = vmatprep.mubr.bf16.mxu0 0
        %5009 = vmatmul.mubr.bf16.gmra.mrb[0].mxu0 %v4833
        %v5010 = vpop.f32.mrb[0].mxu0
        %v5011 = vadd.f32 %v4859, %v5010
        %v5012 = vpop.f32.mrb[0].mxu0
        %v5013 = vadd.f32 %v4863, %v5012
        %v5014 = vpop.f32.mrb[0].mxu0
        %v5015 = vadd.f32 %v4859, %v5014
        %v5016 = vpop.f32.mrb[0].mxu0
        %v5017 = vadd.f32 %v4863, %v5016
        %5018 = vmatprep.mubr.bf16.mxu0 0
        %5019 = vmatmul.mubr.bf16.gmra.mrb[0].mxu0 %v4834
        %v5020 = vpop.f32.mrb[0].mxu0
        %v5021 = vadd.f32 %v4859, %v5020
        %v5022 = vpop.f32.mrb[0].mxu0
        %v5023 = vadd.f32 %v4863, %v5022
        %v5024 = vpop.f32.mrb[0].mxu0
        %v5025 = vadd.f32 %v4859, %v5024
        %v5026 = vpop.f32.mrb[0].mxu0
        %v5027 = vadd.f32 %v4863, %v5026
        %5028 = vmatprep.mubr.bf16.mxu0 0
        %5029 = vmatmul.mubr.bf16.gmra.mrb[0].mxu0 %v4835
        %v5030 = vpop.f32.mrb[0].mxu0
        %v5031 = vadd.f32 %v4859, %v5030
        %v5032 = vpop.f32.mrb[0].mxu0
        %v5033 = vadd.f32 %v4863, %v5032
        %v5034 = vpop.f32.mrb[0].mxu0
        %v5035 = vadd.f32 %v4859, %v5034
        %v5036 = vpop.f32.mrb[0].mxu0
        %v5037 = vadd.f32 %v4863, %v5036
        %5038 = vmatprep.mubr.bf16.mxu0 0
        %5039 = vmatmul.mubr.bf16.gmra.mrb[0].mxu0 %v4836
        %v5040 = vpop.f32.mrb[0].mxu0
        %v5041 = vadd.f32 %v4859, %v5040
        %v5042 = vpop.f32.mrb[0].mxu0
        %v5043 = vadd.f32 %v4863, %v5042
        %v5044 = vpop.f32.mrb[0].mxu0
        %v5045 = vadd.f32 %v4859, %v5044
        %v5046 = vpop.f32.mrb[0].mxu0
        %v5047 = vadd.f32 %v4863, %v5046
        %5048 = vmatprep.mubr.bf16.mxu0 0
        %5049 = vmatmul.mubr.bf16.gmra.mrb[0].mxu0 %v4837
        %v5050 = vpop.f32.mrb[0].mxu0
        %v5051 = vadd.f32 %v4859, %v5050
        %v5052 = vpop.f32.mrb[0].mxu0
        %v5053 = vadd.f32 %v4863, %v5052
        %v5054 = vpop.f32.mrb[0].mxu0
        %v5055 = vadd.f32 %v4859, %v5054
        %v5056 = vpop.f32.mrb[0].mxu0
        %v5057 = vadd.f32 %v4863, %v5056
        %5058 = vdwg.mxu0
        %v5059 = vmax.f32 %v4981, 0.0
        %v5060 = vmax.f32 %v4983, 0.0
        %v5061 = vmax.f32 %v4985, 0.0
        %v5062 = vmax.f32 %v4987, 0.0
        %v5063 = vmax.f32 %v4991, 0.0
        %v5064 = vmax.f32 %v4993, 0.0
        %v5065 = vmax.f32 %v4995, 0.0
        %v5066 = vmax.f32 %v4997, 0.0
        %v5067 = vmax.f32 %v5001, 0.0
        %v5068 = vmax.f32 %v5003, 0.0
        %v5069 = vmax.f32 %v5005, 0.0
        %v5070 = vmax.f32 %v5007, 0.0
        %v5071 = vmax.f32 %v5011, 0.0
        %v5072 = vmax.f32 %v5013, 0.0
        %v5073 = vmax.f32 %v5015, 0.0
        %v5074 = vmax.f32 %v5017, 0.0
        %v5075 = vmax.f32 %v5021, 0.0
        %v5076 = vmax.f32 %v5023, 0.0
        %v5077 = vmax.f32 %v5025, 0.0
        %v5078 = vmax.f32 %v5027, 0.0
        %v5079 = vmax.f32 %v5031, 0.0
        %v5080 = vmax.f32 %v5033, 0.0
        %v5081 = vmax.f32 %v5035, 0.0
        %v5082 = vmax.f32 %v5037, 0.0
        %v5083 = vmax.f32 %v5041, 0.0
        %v5084 = vmax.f32 %v5043, 0.0
        %v5085 = vmax.f32 %v5045, 0.0
        %v5086 = vmax.f32 %v5047, 0.0
        %v5087 = vmax.f32 %v5051, 0.0
        %v5088 = vmax.f32 %v5053, 0.0
        %v5089 = vmax.f32 %v5055, 0.0
        %v5090 = vmax.f32 %v5057, 0.0
        %v5091 = vpack.c.bf16 %v5061, %v5059
        %v5092 = vpack.c.bf16 %v5062, %v5060
        %v5093 = vpack.c.bf16 %v5065, %v5063
        %v5094 = vpack.c.bf16 %v5066, %v5064
        %v5095 = vpack.c.bf16 %v5069, %v5067
        %v5096 = vpack.c.bf16 %v5070, %v5068
        %v5097 = vpack.c.bf16 %v5073, %v5071
        %v5098 = vpack.c.bf16 %v5074, %v5072
        %v5099 = vpack.c.bf16 %v5077, %v5075
        %v5100 = vpack.c.bf16 %v5078, %v5076
        %v5101 = vpack.c.bf16 %v5081, %v5079
        %v5102 = vpack.c.bf16 %v5082, %v5080
        %v5103 = vpack.c.bf16 %v5085, %v5083
        %v5104 = vpack.c.bf16 %v5086, %v5084
        %v5105 = vpack.c.bf16 %v5089, %v5087
        %v5106 = vpack.c.bf16 %v5090, %v5088
        %v5107 = vld [vmem:[%s781] sm:$0xf]
        %v5108 = vld [vmem:[%s781 + $0x4] sm:$0xf]
        %v5109 = vld [vmem:[%s781 + $0x8] sm:$0xf]
        %v5110 = vld [vmem:[%s781 + $0xc] sm:$0xf]
        %v5111 = vld [vmem:[%s781 + $0x10] sm:$0xf]
        %v5112 = vld [vmem:[%s781 + $0x14] sm:$0xf]
        %v5113 = vld [vmem:[%s781 + $0x18] sm:$0xf]
        %v5114 = vld [vmem:[%s781 + $0x1c] sm:$0xf]
        %v5115 = vld [vmem:[%s781 + $0x20] sm:$0xf]
        %v5116 = vld [vmem:[%s781 + $0x24] sm:$0xf]
        %v5117 = vld [vmem:[%s781 + $0x28] sm:$0xf]
        %v5118 = vld [vmem:[%s781 + $0x2c] sm:$0xf]
        %v5119 = vld [vmem:[%s781 + $0x30] sm:$0xf]
        %v5120 = vld [vmem:[%s781 + $0x34] sm:$0xf]
        %v5121 = vld [vmem:[%s781 + $0x38] sm:$0xf]
        %v5122 = vld [vmem:[%s781 + $0x3c] sm:$0xf]
        %v5123 = vld [vmem:[%s781 + $0x40] sm:$0xf]
        %v5124 = vld [vmem:[%s781 + $0x44] sm:$0xf]
        %v5125 = vld [vmem:[%s781 + $0x48] sm:$0xf]
        %v5126 = vld [vmem:[%s781 + $0x4c] sm:$0xf]
        %v5127 = vld [vmem:[%s781 + $0x50] sm:$0xf]
        %v5128 = vld [vmem:[%s781 + $0x54] sm:$0xf]
        %v5129 = vld [vmem:[%s781 + $0x58] sm:$0xf]
        %v5130 = vld [vmem:[%s781 + $0x5c] sm:$0xf]
        %v5131 = vld [vmem:[%s781 + $0x60] sm:$0xf]
        %v5132 = vld [vmem:[%s781 + $0x64] sm:$0xf]
        %v5133 = vld [vmem:[%s781 + $0x68] sm:$0xf]
        %v5134 = vld [vmem:[%s781 + $0x6c] sm:$0xf]
        %v5135 = vld [vmem:[%s781 + $0x70] sm:$0xf]
        %v5136 = vld [vmem:[%s781 + $0x74] sm:$0xf]
        %v5137 = vld [vmem:[%s781 + $0x78] sm:$0xf]
        %v5138 = vld [vmem:[%s781 + $0x7c] sm:$0xf]
        %v5139 = vld [vmem:[%s789] sm:$0x1]
        %v5141 = vlaneseq
        %v5142 = vshrl.u32 %v5141, 7
        %v5143 = vsub.s32 0, %v5142
        %v5144 = vrot.slane %v5139, %v5143
        %v5178 = vunpack.c.l.b16 %v5107
        %v5179 = vunpack.c.l.b16 %v5108
        %v5180 = vunpack.c.l.b16 %v5109
        %v5181 = vunpack.c.l.b16 %v5110
        %v5182 = vunpack.c.l.b16 %v5111
        %v5183 = vunpack.c.l.b16 %v5112
        %v5184 = vunpack.c.l.b16 %v5113
        %v5185 = vunpack.c.l.b16 %v5114
        %v5186 = vunpack.c.l.b16 %v5115
        %v5187 = vunpack.c.l.b16 %v5116
        %v5188 = vunpack.c.l.b16 %v5117
        %v5189 = vunpack.c.l.b16 %v5118
        %v5190 = vunpack.c.l.b16 %v5119
        %v5191 = vunpack.c.l.b16 %v5120
        %v5192 = vunpack.c.l.b16 %v5121
        %v5193 = vunpack.c.l.b16 %v5122
        %v5194 = vunpack.c.l.b16 %v5123
        %v5195 = vunpack.c.l.b16 %v5124
        %v5196 = vunpack.c.l.b16 %v5125
        %v5197 = vunpack.c.l.b16 %v5126
        %v5198 = vunpack.c.l.b16 %v5127
        %v5199 = vunpack.c.l.b16 %v5128
        %v5200 = vunpack.c.l.b16 %v5129
        %v5201 = vunpack.c.l.b16 %v5130
        %v5202 = vunpack.c.l.b16 %v5131
        %v5203 = vunpack.c.l.b16 %v5132
        %v5204 = vunpack.c.l.b16 %v5133
        %v5205 = vunpack.c.l.b16 %v5134
        %v5206 = vunpack.c.l.b16 %v5135
        %v5207 = vunpack.c.l.b16 %v5136
        %v5208 = vunpack.c.l.b16 %v5137
        %v5209 = vunpack.c.l.b16 %v5138
        %v5210 = vpack.c.b16 %v5179, %v5178
        %v5211 = vpack.c.b16 %v5181, %v5180
        %v5212 = vpack.c.b16 %v5183, %v5182
        %v5213 = vpack.c.b16 %v5185, %v5184
        %v5214 = vpack.c.b16 %v5187, %v5186
        %v5215 = vpack.c.b16 %v5189, %v5188
        %v5216 = vpack.c.b16 %v5191, %v5190
        %v5217 = vpack.c.b16 %v5193, %v5192
        %v5218 = vpack.c.b16 %v5195, %v5194
        %v5219 = vpack.c.b16 %v5197, %v5196
        %v5220 = vpack.c.b16 %v5199, %v5198
        %v5221 = vpack.c.b16 %v5201, %v5200
        %v5222 = vpack.c.b16 %v5203, %v5202
        %v5223 = vpack.c.b16 %v5205, %v5204
        %v5224 = vpack.c.b16 %v5207, %v5206
        %v5225 = vpack.c.b16 %v5209, %v5208
        %5242 = vmatprep.subr.bf16.mxu0 0
        %5243 = vmatpush1.bf16.msra.mxu0 %v5210
        %5244 = vmatprep.subr.bf16.mxu0 0
        %5245 = vmatpush1.bf16.msra.mxu0 %v5211
        %5246 = vmatprep.subr.bf16.mxu0 0
        %5247 = vmatpush1.bf16.msra.mxu0 %v5212
        %5248 = vmatprep.subr.bf16.mxu0 0
        %5249 = vmatpush1.bf16.msra.mxu0 %v5213
        %5250 = vmatprep.subr.bf16.mxu0 0
        %5251 = vmatpush1.bf16.msra.mxu0 %v5214
        %5252 = vmatprep.subr.bf16.mxu0 0
        %5253 = vmatpush1.bf16.msra.mxu0 %v5215
        %5254 = vmatprep.subr.bf16.mxu0 0
        %5255 = vmatpush1.bf16.msra.mxu0 %v5216
        %5256 = vmatprep.subr.bf16.mxu0 0
        %5257 = vmatpush1.bf16.msra.mxu0 %v5217
        %5258 = vmatprep.subr.bf16.mxu0 0
        %5259 = vmatpush1.bf16.msra.mxu0 %v5218
        %5260 = vmatprep.subr.bf16.mxu0 0
        %5261 = vmatpush1.bf16.msra.mxu0 %v5219
        %5262 = vmatprep.subr.bf16.mxu0 0
        %5263 = vmatpush1.bf16.msra.mxu0 %v5220
        %5264 = vmatprep.subr.bf16.mxu0 0
        %5265 = vmatpush1.bf16.msra.mxu0 %v5221
        %5266 = vmatprep.subr.bf16.mxu0 0
        %5267 = vmatpush1.bf16.msra.mxu0 %v5222
        %5268 = vmatprep.subr.bf16.mxu0 0
        %5269 = vmatpush1.bf16.msra.mxu0 %v5223
        %5270 = vmatprep.subr.bf16.mxu0 0
        %5271 = vmatpush1.bf16.msra.mxu0 %v5224
        %5272 = vmatprep.subr.bf16.mxu0 0
        %5273 = vmatpush1.bf16.msra.mxu0 %v5225
        %5274 = vmatprep.mubr.bf16.mxu0 %v5092
        %5275 = vmatmul.mubr.bf16.gmra.mrb[0].mxu0 %v5091
        %v5276 = vpop.f32.mrb[0].mxu0
        %v5277 = vadd.f32 %v5144, %v5276
        %v5278 = vpop.f32.mrb[0].mxu0
        %v5279 = vpop.f32.mrb[0].mxu0
        %v5280 = vadd.f32 %v5144, %v5279
        %v5281 = vpop.f32.mrb[0].mxu0
        %5282 = vmatprep.mubr.bf16.mxu0 %v5094
        %5283 = vmatmul.mubr.bf16.gmra.mrb[0].mxu0 %v5093
        %v5284 = vpop.f32.mrb[0].mxu0
        %v5285 = vadd.f32 %v5144, %v5284
        %v5286 = vpop.f32.mrb[0].mxu0
        %v5287 = vpop.f32.mrb[0].mxu0
        %v5288 = vadd.f32 %v5144, %v5287
        %v5289 = vpop.f32.mrb[0].mxu0
        %5290 = vmatprep.mubr.bf16.mxu0 %v5096
        %5291 = vmatmul.mubr.bf16.gmra.mrb[0].mxu0 %v5095
        %v5292 = vpop.f32.mrb[0].mxu0
        %v5293 = vadd.f32 %v5144, %v5292
        %v5294 = vpop.f32.mrb[0].mxu0
        %v5295 = vpop.f32.mrb[0].mxu0
        %v5296 = vadd.f32 %v5144, %v5295
        %v5297 = vpop.f32.mrb[0].mxu0
        %5298 = vmatprep.mubr.bf16.mxu0 %v5098
        %5299 = vmatmul.mubr.bf16.gmra.mrb[0].mxu0 %v5097
        %v5300 = vpop.f32.mrb[0].mxu0
        %v5301 = vadd.f32 %v5144, %v5300
        %v5302 = vpop.f32.mrb[0].mxu0
        %v5303 = vpop.f32.mrb[0].mxu0
        %v5304 = vadd.f32 %v5144, %v5303
        %v5305 = vpop.f32.mrb[0].mxu0
        %5306 = vmatprep.mubr.bf16.mxu0 %v5100
        %5307 = vmatmul.mubr.bf16.gmra.mrb[0].mxu0 %v5099
        %v5308 = vpop.f32.mrb[0].mxu0
        %v5309 = vadd.f32 %v5144, %v5308
        %v5310 = vpop.f32.mrb[0].mxu0
        %v5311 = vpop.f32.mrb[0].mxu0
        %v5312 = vadd.f32 %v5144, %v5311
        %v5313 = vpop.f32.mrb[0].mxu0
        %5314 = vmatprep.mubr.bf16.mxu0 %v5102
        %5315 = vmatmul.mubr.bf16.gmra.mrb[0].mxu0 %v5101
        %v5316 = vpop.f32.mrb[0].mxu0
        %v5317 = vadd.f32 %v5144, %v5316
        %v5318 = vpop.f32.mrb[0].mxu0
        %v5319 = vpop.f32.mrb[0].mxu0
        %v5320 = vadd.f32 %v5144, %v5319
        %v5321 = vpop.f32.mrb[0].mxu0
        %5322 = vmatprep.mubr.bf16.mxu0 %v5104
        %5323 = vmatmul.mubr.bf16.gmra.mrb[0].mxu0 %v5103
        %v5324 = vpop.f32.mrb[0].mxu0
        %v5325 = vadd.f32 %v5144, %v5324
        %v5326 = vpop.f32.mrb[0].mxu0
        %v5327 = vpop.f32.mrb[0].mxu0
        %v5328 = vadd.f32 %v5144, %v5327
        %v5329 = vpop.f32.mrb[0].mxu0
        %5330 = vmatprep.mubr.bf16.mxu0 %v5106
        %5331 = vmatmul.mubr.bf16.gmra.mrb[0].mxu0 %v5105
        %v5332 = vpop.f32.mrb[0].mxu0
        %v5333 = vadd.f32 %v5144, %v5332
        %v5334 = vpop.f32.mrb[0].mxu0
        %v5335 = vpop.f32.mrb[0].mxu0
        %v5336 = vadd.f32 %v5144, %v5335
        %v5337 = vpop.f32.mrb[0].mxu0
        %5338 = vdwg.mxu0
        %v5339 = vadd.f32 %v4814, %v5277
        %v5340 = vadd.f32 %v4815, %v5280
        %v5341 = vadd.f32 %v4816, %v5285
        %v5342 = vadd.f32 %v4817, %v5288
        %v5343 = vadd.f32 %v4818, %v5293
        %v5344 = vadd.f32 %v4819, %v5296
        %v5345 = vadd.f32 %v4820, %v5301
        %v5346 = vadd.f32 %v4821, %v5304
        %v5347 = vadd.f32 %v4822, %v5309
        %v5348 = vadd.f32 %v4823, %v5312
        %v5349 = vadd.f32 %v4824, %v5317
        %v5350 = vadd.f32 %v4825, %v5320
        %v5351 = vadd.f32 %v4826, %v5325
        %v5352 = vadd.f32 %v4827, %v5328
        %v5353 = vadd.f32 %v4828, %v5333
        %v5354 = vadd.f32 %v4829, %v5336
        %v5355 = vld [vmem:[%s797] sm:$0x1]
        %v5356 = vld [vmem:[%s805] sm:$0x1]
        %5357 = vadd.xlane.f32.xlu0 %v5339
        %v5358 = vpop.xlane.xlu0 %5357
        %5359 = vadd.xlane.f32.xlu0 %v5340
        %v5360 = vpop.xlane.xlu0 %5359
        %5361 = vadd.xlane.f32.xlu0 %v5341
        %v5362 = vpop.xlane.xlu0 %5361
        %5363 = vadd.xlane.f32.xlu0 %v5342
        %v5364 = vpop.xlane.xlu0 %5363
        %5365 = vadd.xlane.f32.xlu0 %v5343
        %v5366 = vpop.xlane.xlu0 %5365
        %5367 = vadd.xlane.f32.xlu0 %v5344
        %v5368 = vpop.xlane.xlu0 %5367
        %5369 = vadd.xlane.f32.xlu0 %v5345
        %v5370 = vpop.xlane.xlu0 %5369
        %5371 = vadd.xlane.f32.xlu0 %v5346
        %v5372 = vpop.xlane.xlu0 %5371
        %5373 = vadd.xlane.f32.xlu0 %v5347
        %v5374 = vpop.xlane.xlu0 %5373
        %5375 = vadd.xlane.f32.xlu0 %v5348
        %v5376 = vpop.xlane.xlu0 %5375
        %5377 = vadd.xlane.f32.xlu0 %v5349
        %v5378 = vpop.xlane.xlu0 %5377
        %5379 = vadd.xlane.f32.xlu0 %v5350
        %v5380 = vpop.xlane.xlu0 %5379
        %5381 = vadd.xlane.f32.xlu0 %v5351
        %v5382 = vpop.xlane.xlu0 %5381
        %5383 = vadd.xlane.f32.xlu0 %v5352
        %v5384 = vpop.xlane.xlu0 %5383
        %5385 = vadd.xlane.f32.xlu0 %v5353
        %v5386 = vpop.xlane.xlu0 %5385
        %5387 = vadd.xlane.f32.xlu0 %v5354
        %v5388 = vpop.xlane.xlu0 %5387
        %v5389 = vmul.f32 %v5358, %v4641
        %v5390 = vmul.f32 %v5360, %v4641
        %v5391 = vmul.f32 %v5362, %v4641
        %v5392 = vmul.f32 %v5364, %v4641
        %v5393 = vmul.f32 %v5366, %v4641
        %v5394 = vmul.f32 %v5368, %v4641
        %v5395 = vmul.f32 %v5370, %v4641
        %v5396 = vmul.f32 %v5372, %v4641
        %v5397 = vmul.f32 %v5374, %v4641
        %v5398 = vmul.f32 %v5376, %v4641
        %v5399 = vmul.f32 %v5378, %v4641
        %v5400 = vmul.f32 %v5380, %v4641
        %v5401 = vmul.f32 %v5382, %v4641
        %v5402 = vmul.f32 %v5384, %v4641
        %v5403 = vmul.f32 %v5386, %v4641
        %v5404 = vmul.f32 %v5388, %v4641
        %v5405 = vsub.f32 %v5339, %v5389
        %v5406 = vsub.f32 %v5340, %v5390
        %v5407 = vsub.f32 %v5341, %v5391
        %v5408 = vsub.f32 %v5342, %v5392
        %v5409 = vsub.f32 %v5343, %v5393
        %v5410 = vsub.f32 %v5344, %v5394
        %v5411 = vsub.f32 %v5345, %v5395
        %v5412 = vsub.f32 %v5346, %v5396
        %v5413 = vsub.f32 %v5347, %v5397
        %v5414 = vsub.f32 %v5348, %v5398
        %v5415 = vsub.f32 %v5349, %v5399
        %v5416 = vsub.f32 %v5350, %v5400
        %v5417 = vsub.f32 %v5351, %v5401
        %v5418 = vsub.f32 %v5352, %v5402
        %v5419 = vsub.f32 %v5353, %v5403
        %v5420 = vsub.f32 %v5354, %v5404
        %v5421 = vmul.f32 %v5405, %v5405
        %v5422 = vmul.f32 %v5406, %v5406
        %v5423 = vmul.f32 %v5407, %v5407
        %v5424 = vmul.f32 %v5408, %v5408
        %v5425 = vmul.f32 %v5409, %v5409
        %v5426 = vmul.f32 %v5410, %v5410
        %v5427 = vmul.f32 %v5411, %v5411
        %v5428 = vmul.f32 %v5412, %v5412
        %v5429 = vmul.f32 %v5413, %v5413
        %v5430 = vmul.f32 %v5414, %v5414
        %v5431 = vmul.f32 %v5415, %v5415
        %v5432 = vmul.f32 %v5416, %v5416
        %v5433 = vmul.f32 %v5417, %v5417
        %v5434 = vmul.f32 %v5418, %v5418
        %v5435 = vmul.f32 %v5419, %v5419
        %v5436 = vmul.f32 %v5420, %v5420
        %5437 = vadd.xlane.f32.xlu0 %v5421
        %v5438 = vpop.xlane.xlu0 %5437
        %5439 = vadd.xlane.f32.xlu0 %v5422
        %v5440 = vpop.xlane.xlu0 %5439
        %5441 = vadd.xlane.f32.xlu0 %v5423
        %v5442 = vpop.xlane.xlu0 %5441
        %5443 = vadd.xlane.f32.xlu0 %v5424
        %v5444 = vpop.xlane.xlu0 %5443
        %5445 = vadd.xlane.f32.xlu0 %v5425
        %v5446 = vpop.xlane.xlu0 %5445
        %5447 = vadd.xlane.f32.xlu0 %v5426
        %v5448 = vpop.xlane.xlu0 %5447
        %5449 = vadd.xlane.f32.xlu0 %v5427
        %v5450 = vpop.xlane.xlu0 %5449
        %5451 = vadd.xlane.f32.xlu0 %v5428
        %v5452 = vpop.xlane.xlu0 %5451
        %5453 = vadd.xlane.f32.xlu0 %v5429
        %v5454 = vpop.xlane.xlu0 %5453
        %5455 = vadd.xlane.f32.xlu0 %v5430
        %v5456 = vpop.xlane.xlu0 %5455
        %5457 = vadd.xlane.f32.xlu0 %v5431
        %v5458 = vpop.xlane.xlu0 %5457
        %5459 = vadd.xlane.f32.xlu0 %v5432
        %v5460 = vpop.xlane.xlu0 %5459
        %5461 = vadd.xlane.f32.xlu0 %v5433
        %v5462 = vpop.xlane.xlu0 %5461
        %5463 = vadd.xlane.f32.xlu0 %v5434
        %v5464 = vpop.xlane.xlu0 %5463
        %5465 = vadd.xlane.f32.xlu0 %v5435
        %v5466 = vpop.xlane.xlu0 %5465
        %5467 = vadd.xlane.f32.xlu0 %v5436
        %v5468 = vpop.xlane.xlu0 %5467
        %v5469 = vmul.f32 %v5438, %v4641
        %v5470 = vmul.f32 %v5440, %v4641
        %v5471 = vmul.f32 %v5442, %v4641
        %v5472 = vmul.f32 %v5444, %v4641
        %v5473 = vmul.f32 %v5446, %v4641
        %v5474 = vmul.f32 %v5448, %v4641
        %v5475 = vmul.f32 %v5450, %v4641
        %v5476 = vmul.f32 %v5452, %v4641
        %v5477 = vmul.f32 %v5454, %v4641
        %v5478 = vmul.f32 %v5456, %v4641
        %v5479 = vmul.f32 %v5458, %v4641
        %v5480 = vmul.f32 %v5460, %v4641
        %v5481 = vmul.f32 %v5462, %v4641
        %v5482 = vmul.f32 %v5464, %v4641
        %v5483 = vmul.f32 %v5466, %v4641
        %v5484 = vmul.f32 %v5468, %v4641
        %v5485 = vadd.f32 %v5469, 1e-05
        %v5486 = vadd.f32 %v5470, 1e-05
        %v5487 = vadd.f32 %v5471, 1e-05
        %v5488 = vadd.f32 %v5472, 1e-05
        %v5489 = vadd.f32 %v5473, 1e-05
        %v5490 = vadd.f32 %v5474, 1e-05
        %v5491 = vadd.f32 %v5475, 1e-05
        %v5492 = vadd.f32 %v5476, 1e-05
        %v5493 = vadd.f32 %v5477, 1e-05
        %v5494 = vadd.f32 %v5478, 1e-05
        %v5495 = vadd.f32 %v5479, 1e-05
        %v5496 = vadd.f32 %v5480, 1e-05
        %v5497 = vadd.f32 %v5481, 1e-05
        %v5498 = vadd.f32 %v5482, 1e-05
        %v5499 = vadd.f32 %v5483, 1e-05
        %v5500 = vadd.f32 %v5484, 1e-05
        %v5501 = vrsqrt.pop %v5485
        %v5502 = vrsqrt.pop %v5486
        %v5503 = vrsqrt.pop %v5487
        %v5504 = vrsqrt.pop %v5488
        %v5505 = vrsqrt.pop %v5489
        %v5506 = vrsqrt.pop %v5490
        %v5507 = vrsqrt.pop %v5491
        %v5508 = vrsqrt.pop %v5492
        %v5509 = vrsqrt.pop %v5493
        %v5510 = vrsqrt.pop %v5494
        %v5511 = vrsqrt.pop %v5495
        %v5512 = vrsqrt.pop %v5496
        %v5513 = vrsqrt.pop %v5497
        %v5514 = vrsqrt.pop %v5498
        %v5515 = vrsqrt.pop %v5499
        %v5516 = vrsqrt.pop %v5500
        %v5517 = vmul.f32 %v5405, %v5501
        %v5518 = vmul.f32 %v5406, %v5502
        %v5519 = vmul.f32 %v5407, %v5503
        %v5520 = vmul.f32 %v5408, %v5504
        %v5521 = vmul.f32 %v5409, %v5505
        %v5522 = vmul.f32 %v5410, %v5506
        %v5523 = vmul.f32 %v5411, %v5507
        %v5524 = vmul.f32 %v5412, %v5508
        %v5525 = vmul.f32 %v5413, %v5509
        %v5526 = vmul.f32 %v5414, %v5510
        %v5527 = vmul.f32 %v5415, %v5511
        %v5528 = vmul.f32 %v5416, %v5512
        %v5529 = vmul.f32 %v5417, %v5513
        %v5530 = vmul.f32 %v5418, %v5514
        %v5531 = vmul.f32 %v5419, %v5515
        %v5532 = vmul.f32 %v5420, %v5516
        %v5534 = vlaneseq
        %v5535 = vshrl.u32 %v5534, 7
        %v5536 = vsub.s32 0, %v5535
        %v5537 = vrot.slane %v5355, %v5536
        %v5539 = vmul.f32 %v5517, %v5537
        %v5540 = vmul.f32 %v5518, %v5537
        %v5541 = vmul.f32 %v5519, %v5537
        %v5542 = vmul.f32 %v5520, %v5537
        %v5543 = vmul.f32 %v5521, %v5537
        %v5544 = vmul.f32 %v5522, %v5537
        %v5545 = vmul.f32 %v5523, %v5537
        %v5546 = vmul.f32 %v5524, %v5537
        %v5547 = vmul.f32 %v5525, %v5537
        %v5548 = vmul.f32 %v5526, %v5537
        %v5549 = vmul.f32 %v5527, %v5537
        %v5550 = vmul.f32 %v5528, %v5537
        %v5551 = vmul.f32 %v5529, %v5537
        %v5552 = vmul.f32 %v5530, %v5537
        %v5553 = vmul.f32 %v5531, %v5537
        %v5554 = vmul.f32 %v5532, %v5537
        %v5556 = vlaneseq
        %v5557 = vshrl.u32 %v5556, 7
        %v5558 = vsub.s32 0, %v5557
        %v5559 = vrot.slane %v5356, %v5558
        %v5561 = vadd.f32 %v5539, %v5559
        %v5562 = vadd.f32 %v5540, %v5559
        %v5563 = vadd.f32 %v5541, %v5559
        %v5564 = vadd.f32 %v5542, %v5559
        %v5565 = vadd.f32 %v5543, %v5559
        %v5566 = vadd.f32 %v5544, %v5559
        %v5567 = vadd.f32 %v5545, %v5559
        %v5568 = vadd.f32 %v5546, %v5559
        %v5569 = vadd.f32 %v5547, %v5559
        %v5570 = vadd.f32 %v5548, %v5559
        %v5571 = vadd.f32 %v5549, %v5559
        %v5572 = vadd.f32 %v5550, %v5559
        %v5573 = vadd.f32 %v5551, %v5559
        %v5574 = vadd.f32 %v5552, %v5559
        %v5575 = vadd.f32 %v5553, %v5559
        %v5576 = vadd.f32 %v5554, %v5559
        %5577 = vst [vmem:[#allocation2] sm:$0xff] %v5561
        %5578 = vst [vmem:[#allocation2 + $0x8] sm:$0xff] %v5562
        %5579 = vst [vmem:[#allocation2 + $0x10] sm:$0xff] %v5563
        %5580 = vst [vmem:[#allocation2 + $0x18] sm:$0xff] %v5564
        %5581 = vst [vmem:[#allocation2 + $0x20] sm:$0xff] %v5565
        %5582 = vst [vmem:[#allocation2 + $0x28] sm:$0xff] %v5566
        %5583 = vst [vmem:[#allocation2 + $0x30] sm:$0xff] %v5567
        %5584 = vst [vmem:[#allocation2 + $0x38] sm:$0xff] %v5568
        %5585 = vst [vmem:[#allocation2 + $0x40] sm:$0xff] %v5569
        %5586 = vst [vmem:[#allocation2 + $0x48] sm:$0xff] %v5570
        %5587 = vst [vmem:[#allocation2 + $0x50] sm:$0xff] %v5571
        %5588 = vst [vmem:[#allocation2 + $0x58] sm:$0xff] %v5572
        %5589 = vst [vmem:[#allocation2 + $0x60] sm:$0xff] %v5573
        %5590 = vst [vmem:[#allocation2 + $0x68] sm:$0xff] %v5574
        %5591 = vst [vmem:[#allocation2 + $0x70] sm:$0xff] %v5575
        %5592 = vst [vmem:[#allocation2 + $0x78] sm:$0xff] %v5576
        %p5593 = scmp.eq.s32.totalorder %s33, 1
        // Predicated region
        $region137: #{tpu_custom_call.1} parent=75 // pred_check
          %p5594 = pneg %p5593
        $region138: #{tpu_custom_call.1} parent=75 // pred_check_branch
          %5596 = sbr.rel (%p5594) target = $region140
        $region139: #{tpu_custom_call.1} parent=75 // pred_region
          %5597 = vst [vmem:[#allocation20] sm:$0xff] %v5561
          %5598 = vst [vmem:[#allocation20 + $0x8] sm:$0xff] %v5562
          %5599 = vst [vmem:[#allocation20 + $0x10] sm:$0xff] %v5563
          %5600 = vst [vmem:[#allocation20 + $0x18] sm:$0xff] %v5564
          %5601 = vst [vmem:[#allocation20 + $0x20] sm:$0xff] %v5565
          %5602 = vst [vmem:[#allocation20 + $0x28] sm:$0xff] %v5566
          %5603 = vst [vmem:[#allocation20 + $0x30] sm:$0xff] %v5567
          %5604 = vst [vmem:[#allocation20 + $0x38] sm:$0xff] %v5568
          %5605 = vst [vmem:[#allocation20 + $0x40] sm:$0xff] %v5569
          %5606 = vst [vmem:[#allocation20 + $0x48] sm:$0xff] %v5570
          %5607 = vst [vmem:[#allocation20 + $0x50] sm:$0xff] %v5571
          %5608 = vst [vmem:[#allocation20 + $0x58] sm:$0xff] %v5572
          %5609 = vst [vmem:[#allocation20 + $0x60] sm:$0xff] %v5573
          %5610 = vst [vmem:[#allocation20 + $0x68] sm:$0xff] %v5574
          %5611 = vst [vmem:[#allocation20 + $0x70] sm:$0xff] %v5575
          %5612 = vst [vmem:[#allocation20 + $0x78] sm:$0xff] %v5576
        $region140: #{tpu_custom_call.1} parent=75 // pred_fallthru
          _
        // Predicated region
        $region141: #{tpu_custom_call.1} parent=75 // pred_check
          %p5613 = pneg %p417
        $region142: #{tpu_custom_call.1} parent=75 // pred_check_branch
          %5615 = sbr.rel (%p5613) target = $region144
        $region143: #{tpu_custom_call.1} parent=75 // pred_region
          %s5616 = smul.u32 4, %s32
          %s5618 = ssub.s32 2048, 2048
          %5619 = vsyncadd [#allocation5], %s5618
          %s5620 = smul.addr %s5616, 4
          %s5621 = smul.addr %s5620, 128
          %s5622 = scalar_lea.hbm %s14, %s5621
          %s5623 = sshll.u32 [#allocation20], 4
          %s5624 = int_to_ptr.vmem [resolvable:$true] %s5623
          %5629 = dma.vmem_to_hbm [thread:$0]  %s5624, 2048, %s5622, [#allocation5], 128, 128, 8
        $region144: #{tpu_custom_call.1} parent=75 // pred_fallthru
          _
        // Predicated region
        $region145: #{tpu_custom_call.1} parent=75 // pred_check
          %p5630 = pneg %p417
        $region146: #{tpu_custom_call.1} parent=75 // pred_check_branch
          %5632 = sbr.rel (%p5630) target = $region148
        $region147: #{tpu_custom_call.1} parent=75 // pred_region
          %5633 = dma.done [#allocation5], 2048
        $region148: #{tpu_custom_call.1} parent=75 // pred_fallthru
          _
      $region76: #{tpu_custom_call.1} parent=5 // pred_fallthru
        _
      %p5634 = scmp.le.s32.totalorder 2, %s23
      // Predicated region
      $region149: #{tpu_custom_call.1} parent=5 // pred_check
        %p5635 = pneg %p5634
      $region150: #{tpu_custom_call.1} parent=5 // pred_check_branch
        %5637 = sbr.rel (%p5635) target = $region152
      $region151: #{tpu_custom_call.1} parent=5 // pred_region
        %s5638 = ssub.s32 %s23, 2
      $region152: #{tpu_custom_call.1} parent=5 // pred_fallthru
        _
    $region6: #{tpu_custom_call.1} parent=1 // loop_footer
      %s27 = sadd.s32 1, %s23
    $region7: #{tpu_custom_call.1} parent=1 // loop_footer_branch
      %22 = sbr.rel target = $region3
    $region8: #{tpu_custom_call.1} parent=1 // loop_exit
      _
    %5639 = vsyncpa [#allocation4], 1
    %s5640 = scalar_lea.sflag [#allocation4], 1
    %5641 = vsyncpa %s5640, 1
    %5642 = vsyncpa [#allocation7], 1
    %5643 = vsyncpa [#allocation5], 1
    %s5644 = scalar_lea.sflag [#allocation5], 1
    %5645 = vsyncpa %s5644, 1

</llo_original>
